<compile_context>
chip_gen: v6e
topology: v6e:2x2x1
jax: 0.10.0
libtpu: 0.0.40
codegen_flags: <defaults>
</compile_context>

<pallas_src>
import functools

import jax
import jax.numpy as jnp
from jax import lax
from jax.experimental import pallas as pl
from jax.experimental.pallas import tpu as pltpu


def _pick_tile(total, candidates=(512, 256, 128, 64, 32, 16, 8)):
    """Largest candidate that evenly divides `total`; else the full extent
    (a block equal to the full dim always satisfies the (8,128) rule)."""
    for c in candidates:
        if c <= total and total % c == 0:
            return c
    return total


# ---------------------------------------------------------------------------
# Fused kernel: local matching aggregation + linear1 + ReLU + BiLSTM +
# max/mean pooling.  One query per grid step, all N classes / K shots at once.
# ---------------------------------------------------------------------------
def _fused_local_lstm_kernel(sup_ref, qry_ref, w1_ref, b1_ref,
                             wih_ref, b8_ref, whhf_ref, whhb_ref,
                             out_ref, gx_ref, *, N, K):
    L = qry_ref.shape[1]
    D = qry_ref.shape[2]
    H = w1_ref.shape[2]
    KL = K * L
    NB = N * (K + 1)          # N query sequences + N*K support sequences

    sup = sup_ref[...]        # (N*K*L, D)  all support tokens, rows ordered (n,k,l)
    qry = qry_ref[0]          # (L, D)      query tokens

    # ---- cross attention (support <-> query) --------------------------------
    scores = lax.dot_general(sup, qry, (((1,), (1,)), ((), ())),
                             preferred_element_type=jnp.float32)        # (NKL, L)

    # softmax over query tokens (torch dim=3), row-wise
    ss = scores - jnp.max(scores, axis=-1, keepdims=True)
    es = jnp.exp(ss)
    attn_s = es / jnp.sum(es, axis=-1, keepdims=True)                   # (NKL, L)

    # softmax over the K*L support tokens of the SAME class (torch dim=2)
    sc3 = scores.reshape(N, KL, L)
    sq = sc3 - jnp.max(sc3, axis=1, keepdims=True)
    eq = jnp.exp(sq)
    attn_q = eq / jnp.sum(eq, axis=1, keepdims=True)                    # (N, KL, L)

    sup3 = sup.reshape(N, KL, D)
    # query_agg[n] = attn_q[n]^T @ sup3[n]
    query_agg = jnp.einsum('nkl,nkd->nld', attn_q, sup3,
                           preferred_element_type=jnp.float32)          # (N, L, D)
    support_agg = jnp.dot(attn_s, qry,
                          preferred_element_type=jnp.float32)           # (NKL, D)

    # ---- linear1 + ReLU on [x, agg, |x-agg|, x*agg] --------------------------
    # (4 partial matmuls over the D-blocks of w1: no 4D-wide concat in VMEM)
    w1a = w1_ref[0]
    w1b = w1_ref[1]
    w1c = w1_ref[2]
    w1d = w1_ref[3]
    b1 = b1_ref[...]

    qry_b = jnp.broadcast_to(qry[None], (N, L, D)).reshape(N * L, D)
    qagg = query_agg.reshape(N * L, D)
    q_base = jnp.dot(qry, w1a, preferred_element_type=jnp.float32) + b1   # (L, H)
    q_loc = jnp.maximum(
        jnp.broadcast_to(q_base[None], (N, L, H)).reshape(N * L, H)
        + jnp.dot(qagg, w1b, preferred_element_type=jnp.float32)
        + jnp.dot(jnp.abs(qry_b - qagg), w1c, preferred_element_type=jnp.float32)
        + jnp.dot(qry_b * qagg, w1d, preferred_element_type=jnp.float32),
        0.0)                                                              # (N*L, H)

    s_loc = jnp.maximum(
        jnp.dot(sup, w1a, preferred_element_type=jnp.float32)
        + jnp.dot(support_agg, w1b, preferred_element_type=jnp.float32)
        + jnp.dot(jnp.abs(sup - support_agg), w1c, preferred_element_type=jnp.float32)
        + jnp.dot(sup * support_agg, w1d, preferred_element_type=jnp.float32)
        + b1, 0.0)                                                        # (N*K*L, H)
    # TODO(synk): Dropout(0.2) on q_loc / s_loc omitted (eval-mode identity).

    # ---- BiLSTM over each sequence, fused max/mean pooling -------------------
    # Combined batch (queries first, then supports), batch-first then relayout
    # to time-major in VMEM (replaces the old host-side HBM transpose).
    x_bf = jnp.concatenate([q_loc.reshape(N, L, H),
                            s_loc.reshape(N * K, L, H)], axis=0)          # (NB, L, H)
    x_tm = jnp.transpose(x_bf, (1, 0, 2))                                 # (L, NB, H)

    # Hoisted input projection for BOTH directions: one big matmul, stored
    # time-major so the recurrent loop only does h @ Whh per direction.
    wih = wih_ref[...]                      # (H, 8H) = [Wih_fwd | Wih_bwd]
    b8 = b8_ref[...]                        # (1, 8H)
    gx = jnp.dot(x_tm.reshape(L * NB, H), wih,
                 preferred_element_type=jnp.float32) + b8                 # (L*NB, 8H)
    gx_ref[...] = gx.reshape(L, NB, 8 * H)

    whhf = whhf_ref[...]                    # (H, 4H)
    whhb = whhb_ref[...]                    # (H, 4H)

    def gates(pre):                         # PyTorch gate order: i, f, g, o
        i = jax.nn.sigmoid(pre[:, 0 * H:1 * H])
        f = jax.nn.sigmoid(pre[:, 1 * H:2 * H])
        g = jnp.tanh(pre[:, 2 * H:3 * H])
        o = jax.nn.sigmoid(pre[:, 3 * H:4 * H])
        return i, f, g, o

    zeros = jnp.zeros((NB, H), jnp.float32)
    neg = jnp.full((NB, H), -jnp.inf, jnp.float32)

    def step(t, carry):
        hf, cf, hb, cb, mxf, mxb, smf, smb = carry
        gx_t = gx_ref[t]                    # (NB, 8H)
        gx_r = gx_ref[L - 1 - t]
        pre_f = gx_t[:, :4 * H] + jnp.dot(hf, whhf, preferred_element_type=jnp.float32)
        pre_b = gx_r[:, 4 * H:] + jnp.dot(hb, whhb, preferred_element_type=jnp.float32)
        i_f, f_f, g_f, o_f = gates(pre_f)
        i_b, f_b, g_b, o_b = gates(pre_b)
        cf = f_f * cf + i_f * g_f
        hf = o_f * jnp.tanh(cf)
        cb = f_b * cb + i_b * g_b
        hb = o_b * jnp.tanh(cb)
        return (hf, cf, hb, cb,
                jnp.maximum(mxf, hf), jnp.maximum(mxb, hb), smf + hf, smb + hb)

    (_, _, _, _, mxf, mxb, smf, smb) = lax.fori_loop(
        0, L, step, (zeros, zeros, zeros, zeros, neg, neg, zeros, zeros))

    inv_L = 1.0 / L
    # torch: cat([out.max(dim=seq), out.mean(dim=seq)], -1), out = [h_fwd || h_bwd]
    out_ref[0] = jnp.concatenate([mxf, mxb, smf * inv_L, smb * inv_L], axis=-1)


def fused_local_match_bilstm(support_flat, query, w1_4, b1,
                             wih8, b8, whh_f, whh_b, N, K):
    NKL, D = support_flat.shape
    Q, L, _ = query.shape
    H = b1.shape[-1]
    NB = N * (K + 1)
    kernel = functools.partial(_fused_local_lstm_kernel, N=N, K=K)
    return pl.pallas_call(
        kernel,
        out_shape=jax.ShapeDtypeStruct((Q, NB, 4 * H), jnp.float32),
        grid_spec=pltpu.PrefetchScalarGridSpec(
            num_scalar_prefetch=0,
            grid=(Q,),
            in_specs=[
                pl.BlockSpec((NKL, D), lambda q: (0, 0)),           # support (shared)
                pl.BlockSpec((1, L, D), lambda q: (q, 0, 0)),       # query q
                pl.BlockSpec((4, D, H), lambda q: (0, 0, 0)),       # linear1 (4 blocks)
                pl.BlockSpec((1, H), lambda q: (0, 0)),
                pl.BlockSpec((H, 8 * H), lambda q: (0, 0)),         # [Wih_f | Wih_b]
                pl.BlockSpec((1, 8 * H), lambda q: (0, 0)),
                pl.BlockSpec((H, 4 * H), lambda q: (0, 0)),         # Whh_f
                pl.BlockSpec((H, 4 * H), lambda q: (0, 0)),         # Whh_b
            ],
            out_specs=pl.BlockSpec((1, NB, 4 * H), lambda q: (q, 0, 0)),
            scratch_shapes=[pltpu.VMEM((L, NB, 8 * H), jnp.float32)]),
        compiler_params=pltpu.CompilerParams(
            dimension_semantics=("parallel",),
            vmem_limit_bytes=48 * 1024 * 1024),
    )(support_flat, query, w1_4, b1, wih8, b8, whh_f, whh_b)


# ---------------------------------------------------------------------------
# Kernel 3: instance matching aggregation + class matching score
# (vectorized over N and K, TQ queries per grid step)
# ---------------------------------------------------------------------------
def _match_score_kernel(sup_ref, qry_ref, w2_ref, b2_ref, v_ref, vb_ref, out_ref):
    TQ, N, K, F4 = sup_ref.shape
    H = w2_ref.shape[-1]

    sup4 = sup_ref[...]                                   # (TQ, N, K, 4H)
    qry = qry_ref[...]                                    # (TQ, N, 4H)
    w2a = w2_ref[0]                                       # (4H, H)  support/proto half
    w2b = w2_ref[1]                                       # (4H, H)  query half
    b2 = b2_ref[...]                                      # (1, H)
    v = v_ref[...]                                        # (1, H)
    vb = vb_ref[...]                                      # (1, 1)

    sup_flat = sup4.reshape(TQ * N * K, F4)
    qry_flat = qry.reshape(TQ * N, F4)

    # linear2(cat([support, query])) == support @ w2a + query @ w2b + b2
    msup = jnp.dot(sup_flat, w2a, preferred_element_type=jnp.float32)   # (TQ*N*K, H)
    mqry = jnp.dot(qry_flat, w2b, preferred_element_type=jnp.float32)   # (TQ*N, H)
    m = msup.reshape(TQ * N, K, H) + mqry[:, None, :] + b2              # (TQ*N, K, H)

    beta = jnp.sum(m * v, axis=-1) + vb                                 # (TQ*N, K)
    beta = beta - jnp.max(beta, axis=-1, keepdims=True)
    beta = jnp.exp(beta)
    beta = beta / jnp.sum(beta, axis=-1, keepdims=True)                 # softmax over K

    proto = jnp.sum(sup4.reshape(TQ * N, K, F4) * beta[:, :, None], axis=1)  # (TQ*N, 4H)

    # class matching: v_attn(linear2(cat([proto, query])))
    m2 = jnp.dot(proto, w2a, preferred_element_type=jnp.float32) + mqry + b2  # (TQ*N, H)
    score = jnp.sum(m2 * v, axis=-1, keepdims=True) + vb                      # (TQ*N, 1)
    out_ref[...] = score.reshape(TQ, N)


def matching_scores(s_pooled, q_pooled, w2_2, b2, v_w, v_b):
    Q, N, K, F4 = s_pooled.shape
    H = w2_2.shape[-1]
    TQ = _pick_tile(Q)
    return pl.pallas_call(
        _match_score_kernel,
        out_shape=jax.ShapeDtypeStruct((Q, N), jnp.float32),
        grid_spec=pltpu.PrefetchScalarGridSpec(
            num_scalar_prefetch=0,
            grid=(Q // TQ,),
            in_specs=[
                pl.BlockSpec((TQ, N, K, F4), lambda q: (q, 0, 0, 0)),
                pl.BlockSpec((TQ, N, F4), lambda q: (q, 0, 0)),
                pl.BlockSpec((2, F4, H), lambda q: (0, 0, 0)),
                pl.BlockSpec((1, H), lambda q: (0, 0)),
                pl.BlockSpec((1, H), lambda q: (0, 0)),
                pl.BlockSpec((1, 1), lambda q: (0, 0)),
            ],
            out_specs=pl.BlockSpec((TQ, N), lambda q: (q, 0))),
        compiler_params=pltpu.CompilerParams(dimension_semantics=("parallel",)),
    )(s_pooled, q_pooled, w2_2, b2, v_w, v_b)


# ---------------------------------------------------------------------------
# Forward pass (post-encoder MLMAN): loss = NLL(LogSoftmax(scores), labels)
# ---------------------------------------------------------------------------
def mlman_forward(support_reps, query_reps, labels, params):
    N, K, Ls, D = support_reps.shape
    Q, Lq, _ = query_reps.shape
    assert Lq == Ls, "equal (padded) sequence lengths assumed, as in the module"
    H = params["b1"].shape[-1]

    # concatenate the K shots of each class along the token axis (equal lengths)
    support_flat = support_reps.reshape(N * K * Ls, D)

    w1_4 = params["w1"].reshape(4, D, H)                     # feature-block split
    wih8 = jnp.concatenate([params["wih_f"], params["wih_b"]], axis=1)   # (H, 8H)
    b8 = jnp.concatenate([params["b_f"], params["b_b"]], axis=1)         # (1, 8H)
    w2_2 = params["w2"].reshape(2, 4 * H, H)                 # [proto/support | query]

    pooled = fused_local_match_bilstm(support_flat, query_reps, w1_4, params["b1"],
                                      wih8, b8, params["whh_f"], params["whh_b"],
                                      N, K)                  # (Q, N + N*K, 4H)

    q_pooled = pooled[:, :N, :]                              # (Q, N, 4H)
    s_pooled = pooled[:, N:, :].reshape(Q, N, K, 4 * H)      # (Q, N, K, 4H)

    scores = matching_scores(s_pooled, q_pooled, w2_2, params["b2"],
                             params["v_w"], params["v_b"])   # (Q, N)

    # tiny (Q, N) glue: NLLLoss(LogSoftmax(scores), labels); incon_loss=0, alpha=0
    log_probs = jax.nn.log_softmax(scores, axis=-1)
    loss = -jnp.mean(jnp.take_along_axis(log_probs, labels[:, None], axis=1))
    return loss, scores


# ---------------------------------------------------------------------------
# Deterministic parameter init (shapes from MLMAN.__init__, D=emb_dim, H=hidden_dim)
# ---------------------------------------------------------------------------
def init_params(key, D, H):
    ks = jax.random.split(key, 12)

    def w(k, shape, scale=0.1):
        return (scale * jax.random.normal(k, shape)).astype(jnp.float32)

    return dict(
        w1=w(ks[0], (4 * D, H)),        # linear1: Linear(4*D, H) (stored transposed)
        b1=w(ks[1], (1, H)),
        wih_f=w(ks[2], (H, 4 * H)),     # lstm weight_ih_l0^T, gate order i,f,g,o
        whh_f=w(ks[3], (H, 4 * H)),     # lstm weight_hh_l0^T
        b_f=w(ks[4], (1, 4 * H)),       # b_ih_l0 + b_hh_l0 (pre-summed)
        wih_b=w(ks[5], (H, 4 * H)),     # reverse direction
        whh_b=w(ks[6], (H, 4 * H)),
        b_b=w(ks[7], (1, 4 * H)),
        w2=w(ks[8], (8 * H, H)),        # linear2: Linear(8*H, H) (stored transposed)
        b2=w(ks[9], (1, H)),
        v_w=w(ks[10], (1, H)),          # v_attn: Linear(H, 1)
        v_b=w(ks[11], (1, 1)),
    )


if __name__ == "__main__":
    key = jax.random.PRNGKey(0)
    k_sup, k_qry, k_lab, k_par = jax.random.split(key, 4)

    # small shapes: 2-way 2-shot, 2 queries, 8 tokens, emb dim 32, hidden 32
    N, K, Q, Ls, Lq, D, H = 2, 2, 2, 8, 8, 32, 32

    support_reps = jax.random.normal(k_sup, (N, K, Ls, D), jnp.float32)
    query_reps = jax.random.normal(k_qry, (Q, Lq, D), jnp.float32)
    labels = jax.random.randint(k_lab, (Q,), 0, N)
    params = init_params(k_par, D, H)

    loss, scores = jax.jit(mlman_forward)(support_reps, query_reps, labels, params)
    jax.block_until_ready((loss, scores))
    print("KERNEL_OK")
</pallas_src>

<mosaic_0001>
module attributes {stable_mosaic.version = 11 : i64} {
  func.func @_fused_local_lstm_kernel(%arg0: i32, %arg1: memref<32x32xf32, #tpu.memory_space<vmem>>, %arg2: memref<1x8x32xf32, #tpu.memory_space<vmem>>, %arg3: memref<4x32x32xf32, #tpu.memory_space<vmem>>, %arg4: memref<1x32xf32, #tpu.memory_space<vmem>>, %arg5: memref<32x256xf32, #tpu.memory_space<vmem>>, %arg6: memref<1x256xf32, #tpu.memory_space<vmem>>, %arg7: memref<32x128xf32, #tpu.memory_space<vmem>>, %arg8: memref<32x128xf32, #tpu.memory_space<vmem>>, %arg9: memref<1x6x128xf32, #tpu.memory_space<vmem>>, %arg10: memref<8x6x256xf32, #tpu.memory_space<vmem>>) attributes {dimension_semantics = [#tpu.dimension_semantics<parallel>], iteration_bounds = array<i64: 2>, scalar_prefetch = 0 : i64, scratch_operands = 1 : i64, tpu.core_type = #tpu.core_type<tc>, window_params = [{pipeline_mode = #tpu.pipeline_mode<synchronous>, transform_indices = @transform_0, window_bounds = array<i64: 32, 32>}, {transform_indices = @transform_1, window_bounds = array<i64: 1, 8, 32>}, {pipeline_mode = #tpu.pipeline_mode<synchronous>, transform_indices = @transform_2, window_bounds = array<i64: 4, 32, 32>}, {pipeline_mode = #tpu.pipeline_mode<synchronous>, transform_indices = @transform_3, window_bounds = array<i64: 1, 32>}, {pipeline_mode = #tpu.pipeline_mode<synchronous>, transform_indices = @transform_4, window_bounds = array<i64: 32, 256>}, {pipeline_mode = #tpu.pipeline_mode<synchronous>, transform_indices = @transform_5, window_bounds = array<i64: 1, 256>}, {pipeline_mode = #tpu.pipeline_mode<synchronous>, transform_indices = @transform_6, window_bounds = array<i64: 32, 128>}, {pipeline_mode = #tpu.pipeline_mode<synchronous>, transform_indices = @transform_7, window_bounds = array<i64: 32, 128>}, {transform_indices = @transform_8, window_bounds = array<i64: 1, 6, 128>}]} {
    %c0 = arith.constant 0 : index
    %c0_0 = arith.constant 0 : index
    %0 = vector.load %arg1[%c0, %c0_0] : memref<32x32xf32, #tpu.memory_space<vmem>>, vector<32x32xf32>
    %c0_1 = arith.constant 0 : index
    %c0_2 = arith.constant 0 : index
    %c0_3 = arith.constant 0 : index
    %1 = vector.load %arg2[%c0_1, %c0_2, %c0_3] : memref<1x8x32xf32, #tpu.memory_space<vmem>>, vector<1x8x32xf32>
    %2 = vector.shape_cast %1 : vector<1x8x32xf32> to vector<8x32xf32>
    %cst = arith.constant dense<0.000000e+00> : vector<32x8xf32>
    %3 = tpu.matmul %0, %2, %cst {dimension_numbers = #tpu.dot_dimension_numbers<[1], [1], [0], [0], [0, 0, 1, 0], [], []>} : vector<32x32xf32>, vector<8x32xf32>, vector<32x8xf32> -> vector<32x8xf32>
    %cst_4 = arith.constant dense<0xFF800000> : vector<32xf32>
    %4 = vector.multi_reduction <maximumf>, %3, %cst_4 [1] : vector<32x8xf32> to vector<32xf32>
    %5 = vector.shape_cast %4 : vector<32xf32> to vector<32x1xf32>
    %6 = vector.broadcast %5 : vector<32x1xf32> to vector<32x8xf32>
    %7 = arith.subf %3, %6 : vector<32x8xf32>
    %8 = math.exp %7 : vector<32x8xf32>
    %cst_5 = arith.constant dense<0.000000e+00> : vector<32xf32>
    %9 = vector.multi_reduction <add>, %8, %cst_5 [1] : vector<32x8xf32> to vector<32xf32>
    %10 = vector.shape_cast %9 : vector<32xf32> to vector<32x1xf32>
    %11 = vector.broadcast %10 : vector<32x1xf32> to vector<32x8xf32>
    %12 = arith.divf %8, %11 : vector<32x8xf32>
    %13 = vector.shape_cast %3 : vector<32x8xf32> to vector<2x16x8xf32>
    %cst_6 = arith.constant dense<0xFF800000> : vector<2x8xf32>
    %14 = vector.multi_reduction <maximumf>, %13, %cst_6 [1] : vector<2x16x8xf32> to vector<2x8xf32>
    %15 = vector.shape_cast %14 : vector<2x8xf32> to vector<2x1x8xf32>
    %16 = vector.broadcast %15 : vector<2x1x8xf32> to vector<2x16x8xf32>
    %17 = arith.subf %13, %16 : vector<2x16x8xf32>
    %18 = math.exp %17 : vector<2x16x8xf32>
    %cst_7 = arith.constant dense<0.000000e+00> : vector<2x8xf32>
    %19 = vector.multi_reduction <add>, %18, %cst_7 [1] : vector<2x16x8xf32> to vector<2x8xf32>
    %20 = vector.shape_cast %19 : vector<2x8xf32> to vector<2x1x8xf32>
    %21 = vector.broadcast %20 : vector<2x1x8xf32> to vector<2x16x8xf32>
    %22 = arith.divf %18, %21 : vector<2x16x8xf32>
    %23 = vector.shape_cast %0 : vector<32x32xf32> to vector<2x16x32xf32>
    "tpu.trace_start"() <{level = 10 : i32, message = "nkl,nkd->nld"}> : () -> ()
    %cst_8 = arith.constant dense<0.000000e+00> : vector<2x8x32xf32>
    %24 = tpu.matmul %22, %23, %cst_8 {dimension_numbers = #tpu.dot_dimension_numbers<[1], [1], [2], [2], [0, 0, 0, 2, 1, 2], [0], [0]>} : vector<2x16x8xf32>, vector<2x16x32xf32>, vector<2x8x32xf32> -> vector<2x8x32xf32>
    "tpu.trace_stop"() : () -> ()
    %cst_9 = arith.constant dense<0.000000e+00> : vector<32x32xf32>
    %25 = tpu.matmul %12, %2, %cst_9 {dimension_numbers = #tpu.dot_dimension_numbers<[1], [0], [0], [1], [0, 0, 1, 1], [], []>} : vector<32x8xf32>, vector<8x32xf32>, vector<32x32xf32> -> vector<32x32xf32>
    %c0_10 = arith.constant 0 : index
    %c0_11 = arith.constant 0 : index
    %c0_12 = arith.constant 0 : index
    %26 = vector.load %arg3[%c0_10, %c0_11, %c0_12] : memref<4x32x32xf32, #tpu.memory_space<vmem>>, vector<1x32x32xf32>
    %27 = vector.shape_cast %26 : vector<1x32x32xf32> to vector<32x32xf32>
    %c1 = arith.constant 1 : index
    %c0_13 = arith.constant 0 : index
    %c0_14 = arith.constant 0 : index
    %28 = vector.load %arg3[%c1, %c0_13, %c0_14] : memref<4x32x32xf32, #tpu.memory_space<vmem>>, vector<1x32x32xf32>
    %29 = vector.shape_cast %28 : vector<1x32x32xf32> to vector<32x32xf32>
    %c2 = arith.constant 2 : index
    %c0_15 = arith.constant 0 : index
    %c0_16 = arith.constant 0 : index
    %30 = vector.load %arg3[%c2, %c0_15, %c0_16] : memref<4x32x32xf32, #tpu.memory_space<vmem>>, vector<1x32x32xf32>
    %31 = vector.shape_cast %30 : vector<1x32x32xf32> to vector<32x32xf32>
    %c3 = arith.constant 3 : index
    %c0_17 = arith.constant 0 : index
    %c0_18 = arith.constant 0 : index
    %32 = vector.load %arg3[%c3, %c0_17, %c0_18] : memref<4x32x32xf32, #tpu.memory_space<vmem>>, vector<1x32x32xf32>
    %33 = vector.shape_cast %32 : vector<1x32x32xf32> to vector<32x32xf32>
    %c0_19 = arith.constant 0 : index
    %c0_20 = arith.constant 0 : index
    %34 = vector.load %arg4[%c0_19, %c0_20] : memref<1x32xf32, #tpu.memory_space<vmem>>, vector<1x32xf32>
    %35 = vector.shape_cast %2 : vector<8x32xf32> to vector<1x8x32xf32>
    %36 = vector.shape_cast %35 : vector<1x8x32xf32> to vector<1x8x32xf32>
    %37 = vector.broadcast %36 : vector<1x8x32xf32> to vector<2x8x32xf32>
    %38 = vector.shape_cast %37 : vector<2x8x32xf32> to vector<16x32xf32>
    %39 = vector.shape_cast %24 : vector<2x8x32xf32> to vector<16x32xf32>
    %cst_21 = arith.constant dense<0.000000e+00> : vector<8x32xf32>
    %40 = tpu.matmul %2, %27, %cst_21 {dimension_numbers = #tpu.dot_dimension_numbers<[1], [0], [0], [1], [0, 0, 1, 1], [], []>} : vector<8x32xf32>, vector<32x32xf32>, vector<8x32xf32> -> vector<8x32xf32>
    %41 = vector.broadcast %34 : vector<1x32xf32> to vector<8x32xf32>
    %42 = arith.addf %40, %41 : vector<8x32xf32>
    %43 = vector.shape_cast %42 : vector<8x32xf32> to vector<1x8x32xf32>
    %44 = vector.shape_cast %43 : vector<1x8x32xf32> to vector<1x8x32xf32>
    %45 = vector.broadcast %44 : vector<1x8x32xf32> to vector<2x8x32xf32>
    %46 = vector.shape_cast %45 : vector<2x8x32xf32> to vector<16x32xf32>
    %cst_22 = arith.constant dense<0.000000e+00> : vector<16x32xf32>
    %47 = tpu.matmul %39, %29, %cst_22 {dimension_numbers = #tpu.dot_dimension_numbers<[1], [0], [0], [1], [0, 0, 1, 1], [], []>} : vector<16x32xf32>, vector<32x32xf32>, vector<16x32xf32> -> vector<16x32xf32>
    %48 = arith.addf %46, %47 : vector<16x32xf32>
    %49 = arith.subf %38, %39 : vector<16x32xf32>
    %50 = math.absf %49 : vector<16x32xf32>
    %cst_23 = arith.constant dense<0.000000e+00> : vector<16x32xf32>
    %51 = tpu.matmul %50, %31, %cst_23 {dimension_numbers = #tpu.dot_dimension_numbers<[1], [0], [0], [1], [0, 0, 1, 1], [], []>} : vector<16x32xf32>, vector<32x32xf32>, vector<16x32xf32> -> vector<16x32xf32>
    %52 = arith.addf %48, %51 : vector<16x32xf32>
    %53 = arith.mulf %38, %39 : vector<16x32xf32>
    %cst_24 = arith.constant dense<0.000000e+00> : vector<16x32xf32>
    %54 = tpu.matmul %53, %33, %cst_24 {dimension_numbers = #tpu.dot_dimension_numbers<[1], [0], [0], [1], [0, 0, 1, 1], [], []>} : vector<16x32xf32>, vector<32x32xf32>, vector<16x32xf32> -> vector<16x32xf32>
    %55 = arith.addf %52, %54 : vector<16x32xf32>
    %cst_25 = arith.constant 0.000000e+00 : f32
    %56 = vector.broadcast %cst_25 : f32 to vector<16x32xf32>
    %57 = arith.maximumf %55, %56 : vector<16x32xf32>
    %cst_26 = arith.constant dense<0.000000e+00> : vector<32x32xf32>
    %58 = tpu.matmul %0, %27, %cst_26 {dimension_numbers = #tpu.dot_dimension_numbers<[1], [0], [0], [1], [0, 0, 1, 1], [], []>} : vector<32x32xf32>, vector<32x32xf32>, vector<32x32xf32> -> vector<32x32xf32>
    %cst_27 = arith.constant dense<0.000000e+00> : vector<32x32xf32>
    %59 = tpu.matmul %25, %29, %cst_27 {dimension_numbers = #tpu.dot_dimension_numbers<[1], [0], [0], [1], [0, 0, 1, 1], [], []>} : vector<32x32xf32>, vector<32x32xf32>, vector<32x32xf32> -> vector<32x32xf32>
    %60 = arith.addf %58, %59 : vector<32x32xf32>
    %61 = arith.subf %0, %25 : vector<32x32xf32>
    %62 = math.absf %61 : vector<32x32xf32>
    %cst_28 = arith.constant dense<0.000000e+00> : vector<32x32xf32>
    %63 = tpu.matmul %62, %31, %cst_28 {dimension_numbers = #tpu.dot_dimension_numbers<[1], [0], [0], [1], [0, 0, 1, 1], [], []>} : vector<32x32xf32>, vector<32x32xf32>, vector<32x32xf32> -> vector<32x32xf32>
    %64 = arith.addf %60, %63 : vector<32x32xf32>
    %65 = arith.mulf %0, %25 : vector<32x32xf32>
    %cst_29 = arith.constant dense<0.000000e+00> : vector<32x32xf32>
    %66 = tpu.matmul %65, %33, %cst_29 {dimension_numbers = #tpu.dot_dimension_numbers<[1], [0], [0], [1], [0, 0, 1, 1], [], []>} : vector<32x32xf32>, vector<32x32xf32>, vector<32x32xf32> -> vector<32x32xf32>
    %67 = arith.addf %64, %66 : vector<32x32xf32>
    %68 = vector.broadcast %34 : vector<1x32xf32> to vector<32x32xf32>
    %69 = arith.addf %67, %68 : vector<32x32xf32>
    %cst_30 = arith.constant 0.000000e+00 : f32
    %70 = vector.broadcast %cst_30 : f32 to vector<32x32xf32>
    %71 = arith.maximumf %69, %70 : vector<32x32xf32>
    %72 = vector.shape_cast %57 : vector<16x32xf32> to vector<2x8x32xf32>
    %73 = vector.shape_cast %71 : vector<32x32xf32> to vector<4x8x32xf32>
    %74 = tpu.concatenate %72, %73 in 0 : vector<2x8x32xf32>, vector<4x8x32xf32> -> vector<6x8x32xf32>
    %75 = tpu.transpose %74, [1, 0, 2] : vector<6x8x32xf32> -> vector<8x6x32xf32>
    %c0_31 = arith.constant 0 : index
    %c0_32 = arith.constant 0 : index
    %76 = vector.load %arg5[%c0_31, %c0_32] : memref<32x256xf32, #tpu.memory_space<vmem>>, vector<32x256xf32>
    %c0_33 = arith.constant 0 : index
    %c0_34 = arith.constant 0 : index
    %77 = vector.load %arg6[%c0_33, %c0_34] : memref<1x256xf32, #tpu.memory_space<vmem>>, vector<1x256xf32>
    %78 = vector.shape_cast %75 : vector<8x6x32xf32> to vector<48x32xf32>
    %cst_35 = arith.constant dense<0.000000e+00> : vector<48x256xf32>
    %79 = tpu.matmul %78, %76, %cst_35 {dimension_numbers = #tpu.dot_dimension_numbers<[1], [0], [0], [1], [0, 0, 1, 1], [], []>} : vector<48x32xf32>, vector<32x256xf32>, vector<48x256xf32> -> vector<48x256xf32>
    %80 = vector.broadcast %77 : vector<1x256xf32> to vector<48x256xf32>
    %81 = arith.addf %79, %80 : vector<48x256xf32>
    %82 = vector.shape_cast %81 : vector<48x256xf32> to vector<8x6x256xf32>
    %c0_36 = arith.constant 0 : index
    %c0_37 = arith.constant 0 : index
    %c0_38 = arith.constant 0 : index
    %83 = vector.load %arg10[%c0_36, %c0_37, %c0_38] : memref<8x6x256xf32, #tpu.memory_space<vmem>>, vector<8x6x256xf32>
    tpu.vector_store %arg10[%c0_36, %c0_37, %c0_38], %82 {strides = array<i32>} : memref<8x6x256xf32, #tpu.memory_space<vmem>>, vector<8x6x256xf32>,
    %c0_39 = arith.constant 0 : index
    %c0_40 = arith.constant 0 : index
    %84 = vector.load %arg7[%c0_39, %c0_40] : memref<32x128xf32, #tpu.memory_space<vmem>>, vector<32x128xf32>
    %c0_41 = arith.constant 0 : index
    %c0_42 = arith.constant 0 : index
    %85 = vector.load %arg8[%c0_41, %c0_42] : memref<32x128xf32, #tpu.memory_space<vmem>>, vector<32x128xf32>
    %cst_43 = arith.constant 0.000000e+00 : f32
    %86 = vector.broadcast %cst_43 : f32 to vector<6x32xf32>
    %cst_44 = arith.constant 0xFF800000 : f32
    %87 = vector.broadcast %cst_44 : f32 to vector<6x32xf32>
    %c0_i32 = arith.constant 0 : i32
    %c8_i32 = arith.constant 8 : i32
    %88 = arith.addi %c0_i32, %c8_i32 : i32
    %c1_i32 = arith.constant 1 : i32
    %89:8 = scf.for %arg11 = %c0_i32 to %88 step %c1_i32 iter_args(%arg12 = %86, %arg13 = %86, %arg14 = %86, %arg15 = %86, %arg16 = %87, %arg17 = %87, %arg18 = %86, %arg19 = %86) -> (vector<6x32xf32>, vector<6x32xf32>, vector<6x32xf32>, vector<6x32xf32>, vector<6x32xf32>, vector<6x32xf32>, vector<6x32xf32>, vector<6x32xf32>)  : i32 {
      %98 = arith.index_cast %arg11 : i32 to index
      %c0_51 = arith.constant 0 : index
      %c0_52 = arith.constant 0 : index
      %99 = vector.load %arg10[%98, %c0_51, %c0_52] : memref<8x6x256xf32, #tpu.memory_space<vmem>>, vector<1x6x256xf32>
      %100 = vector.shape_cast %99 : vector<1x6x256xf32> to vector<6x256xf32>
      %c7_i32 = arith.constant 7 : i32
      %101 = arith.subi %c7_i32, %arg11 : i32
      %102 = arith.index_cast %101 : i32 to index
      %c0_53 = arith.constant 0 : index
      %c0_54 = arith.constant 0 : index
      %103 = vector.load %arg10[%102, %c0_53, %c0_54] : memref<8x6x256xf32, #tpu.memory_space<vmem>>, vector<1x6x256xf32>
      %104 = vector.shape_cast %103 : vector<1x6x256xf32> to vector<6x256xf32>
      %105 = vector.extract_strided_slice %100 {offsets = [0, 0], sizes = [6, 128], strides = [1, 1]} : vector<6x256xf32> to vector<6x128xf32>
      %cst_55 = arith.constant dense<0.000000e+00> : vector<6x128xf32>
      %106 = tpu.matmul %arg12, %84, %cst_55 {dimension_numbers = #tpu.dot_dimension_numbers<[1], [0], [0], [1], [0, 0, 1, 1], [], []>} : vector<6x32xf32>, vector<32x128xf32>, vector<6x128xf32> -> vector<6x128xf32>
      %107 = arith.addf %105, %106 : vector<6x128xf32>
      %108 = vector.extract_strided_slice %104 {offsets = [0, 128], sizes = [6, 128], strides = [1, 1]} : vector<6x256xf32> to vector<6x128xf32>
      %cst_56 = arith.constant dense<0.000000e+00> : vector<6x128xf32>
      %109 = tpu.matmul %arg14, %85, %cst_56 {dimension_numbers = #tpu.dot_dimension_numbers<[1], [0], [0], [1], [0, 0, 1, 1], [], []>} : vector<6x32xf32>, vector<32x128xf32>, vector<6x128xf32> -> vector<6x128xf32>
      %110 = arith.addf %108, %109 : vector<6x128xf32>
      %111 = vector.extract_strided_slice %107 {offsets = [0, 0], sizes = [6, 32], strides = [1, 1]} : vector<6x128xf32> to vector<6x32xf32>
      %112 = arith.negf %111 : vector<6x32xf32>
      %113 = math.exp %112 : vector<6x32xf32>
      %cst_57 = arith.constant 1.000000e+00 : f32
      %114 = vector.broadcast %cst_57 : f32 to vector<6x32xf32>
      %115 = arith.addf %114, %113 : vector<6x32xf32>
      %116 = arith.divf %114, %115 : vector<6x32xf32>
      %117 = vector.extract_strided_slice %107 {offsets = [0, 32], sizes = [6, 32], strides = [1, 1]} : vector<6x128xf32> to vector<6x32xf32>
      %118 = arith.negf %117 : vector<6x32xf32>
      %119 = math.exp %118 : vector<6x32xf32>
      %cst_58 = arith.constant 1.000000e+00 : f32
      %120 = vector.broadcast %cst_58 : f32 to vector<6x32xf32>
      %121 = arith.addf %120, %119 : vector<6x32xf32>
      %122 = arith.divf %120, %121 : vector<6x32xf32>
      %123 = vector.extract_strided_slice %107 {offsets = [0, 64], sizes = [6, 32], strides = [1, 1]} : vector<6x128xf32> to vector<6x32xf32>
      %124 = math.tanh %123 : vector<6x32xf32>
      %125 = vector.extract_strided_slice %107 {offsets = [0, 96], sizes = [6, 32], strides = [1, 1]} : vector<6x128xf32> to vector<6x32xf32>
      %126 = arith.negf %125 : vector<6x32xf32>
      %127 = math.exp %126 : vector<6x32xf32>
      %cst_59 = arith.constant 1.000000e+00 : f32
      %128 = vector.broadcast %cst_59 : f32 to vector<6x32xf32>
      %129 = arith.addf %128, %127 : vector<6x32xf32>
      %130 = arith.divf %128, %129 : vector<6x32xf32>
      %131 = vector.extract_strided_slice %110 {offsets = [0, 0], sizes = [6, 32], strides = [1, 1]} : vector<6x128xf32> to vector<6x32xf32>
      %132 = arith.negf %131 : vector<6x32xf32>
      %133 = math.exp %132 : vector<6x32xf32>
      %cst_60 = arith.constant 1.000000e+00 : f32
      %134 = vector.broadcast %cst_60 : f32 to vector<6x32xf32>
      %135 = arith.addf %134, %133 : vector<6x32xf32>
      %136 = arith.divf %134, %135 : vector<6x32xf32>
      %137 = vector.extract_strided_slice %110 {offsets = [0, 32], sizes = [6, 32], strides = [1, 1]} : vector<6x128xf32> to vector<6x32xf32>
      %138 = arith.negf %137 : vector<6x32xf32>
      %139 = math.exp %138 : vector<6x32xf32>
      %cst_61 = arith.constant 1.000000e+00 : f32
      %140 = vector.broadcast %cst_61 : f32 to vector<6x32xf32>
      %141 = arith.addf %140, %139 : vector<6x32xf32>
      %142 = arith.divf %140, %141 : vector<6x32xf32>
      %143 = vector.extract_strided_slice %110 {offsets = [0, 64], sizes = [6, 32], strides = [1, 1]} : vector<6x128xf32> to vector<6x32xf32>
      %144 = math.tanh %143 : vector<6x32xf32>
      %145 = vector.extract_strided_slice %110 {offsets = [0, 96], sizes = [6, 32], strides = [1, 1]} : vector<6x128xf32> to vector<6x32xf32>
      %146 = arith.negf %145 : vector<6x32xf32>
      %147 = math.exp %146 : vector<6x32xf32>
      %cst_62 = arith.constant 1.000000e+00 : f32
      %148 = vector.broadcast %cst_62 : f32 to vector<6x32xf32>
      %149 = arith.addf %148, %147 : vector<6x32xf32>
      %150 = arith.divf %148, %149 : vector<6x32xf32>
      %151 = arith.mulf %122, %arg13 : vector<6x32xf32>
      %152 = arith.mulf %116, %124 : vector<6x32xf32>
      %153 = arith.addf %151, %152 : vector<6x32xf32>
      %154 = math.tanh %153 : vector<6x32xf32>
      %155 = arith.mulf %130, %154 : vector<6x32xf32>
      %156 = arith.mulf %142, %arg15 : vector<6x32xf32>
      %157 = arith.mulf %136, %144 : vector<6x32xf32>
      %158 = arith.addf %156, %157 : vector<6x32xf32>
      %159 = math.tanh %158 : vector<6x32xf32>
      %160 = arith.mulf %150, %159 : vector<6x32xf32>
      %161 = arith.maximumf %arg16, %155 : vector<6x32xf32>
      %162 = arith.maximumf %arg17, %160 : vector<6x32xf32>
      %163 = arith.addf %arg18, %155 : vector<6x32xf32>
      %164 = arith.addf %arg19, %160 : vector<6x32xf32>
      scf.yield %155, %153, %160, %158, %161, %162, %163, %164 : vector<6x32xf32>, vector<6x32xf32>, vector<6x32xf32>, vector<6x32xf32>, vector<6x32xf32>, vector<6x32xf32>, vector<6x32xf32>, vector<6x32xf32>
    }
    %c8_i32_45 = arith.constant 8 : i32
    %cst_46 = arith.constant 1.250000e-01 : f32
    %90 = vector.broadcast %cst_46 : f32 to vector<6x32xf32>
    %91 = arith.mulf %89#6, %90 : vector<6x32xf32>
    %cst_47 = arith.constant 1.250000e-01 : f32
    %92 = vector.broadcast %cst_47 : f32 to vector<6x32xf32>
    %93 = arith.mulf %89#7, %92 : vector<6x32xf32>
    %94 = tpu.concatenate %89#4, %89#5, %91, %93 in 1 : vector<6x32xf32>, vector<6x32xf32>, vector<6x32xf32>, vector<6x32xf32> -> vector<6x128xf32>
    %c0_48 = arith.constant 0 : index
    %c0_49 = arith.constant 0 : index
    %c0_50 = arith.constant 0 : index
    %95 = vector.load %arg9[%c0_48, %c0_49, %c0_50] : memref<1x6x128xf32, #tpu.memory_space<vmem>>, vector<1x6x128xf32>
    %96 = vector.shape_cast %95 : vector<1x6x128xf32> to vector<6x128xf32>
    %97 = vector.shape_cast %94 : vector<6x128xf32> to vector<1x6x128xf32>
    tpu.vector_store %arg9[%c0_48, %c0_49, %c0_50], %97 {strides = array<i32>} : memref<1x6x128xf32, #tpu.memory_space<vmem>>, vector<1x6x128xf32>,
    return
  }
  func.func @transform_0(%arg0: i32) -> (i32, i32) {
    %c0_i32 = arith.constant 0 : i32
    %c0_i32_0 = arith.constant 0 : i32
    %c0_i32_1 = arith.constant 0 : i32
    return %c0_i32, %c0_i32_0 : i32, i32
  }
  func.func @transform_1(%arg0: i32) -> (i32, i32, i32) {
    %c0_i32 = arith.constant 0 : i32
    %c0_i32_0 = arith.constant 0 : i32
    %c0_i32_1 = arith.constant 0 : i32
    return %arg0, %c0_i32, %c0_i32_0 : i32, i32, i32
  }
  func.func @transform_2(%arg0: i32) -> (i32, i32, i32) {
    %c0_i32 = arith.constant 0 : i32
    %c0_i32_0 = arith.constant 0 : i32
    %c0_i32_1 = arith.constant 0 : i32
    %c0_i32_2 = arith.constant 0 : i32
    return %c0_i32, %c0_i32_0, %c0_i32_1 : i32, i32, i32
  }
  func.func @transform_3(%arg0: i32) -> (i32, i32) {
    %c0_i32 = arith.constant 0 : i32
    %c0_i32_0 = arith.constant 0 : i32
    %c0_i32_1 = arith.constant 0 : i32
    return %c0_i32, %c0_i32_0 : i32, i32
  }
  func.func @transform_4(%arg0: i32) -> (i32, i32) {
    %c0_i32 = arith.constant 0 : i32
    %c0_i32_0 = arith.constant 0 : i32
    %c0_i32_1 = arith.constant 0 : i32
    return %c0_i32, %c0_i32_0 : i32, i32
  }
  func.func @transform_5(%arg0: i32) -> (i32, i32) {
    %c0_i32 = arith.constant 0 : i32
    %c0_i32_0 = arith.constant 0 : i32
    %c0_i32_1 = arith.constant 0 : i32
    return %c0_i32, %c0_i32_0 : i32, i32
  }
  func.func @transform_6(%arg0: i32) -> (i32, i32) {
    %c0_i32 = arith.constant 0 : i32
    %c0_i32_0 = arith.constant 0 : i32
    %c0_i32_1 = arith.constant 0 : i32
    return %c0_i32, %c0_i32_0 : i32, i32
  }
  func.func @transform_7(%arg0: i32) -> (i32, i32) {
    %c0_i32 = arith.constant 0 : i32
    %c0_i32_0 = arith.constant 0 : i32
    %c0_i32_1 = arith.constant 0 : i32
    return %c0_i32, %c0_i32_0 : i32, i32
  }
  func.func @transform_8(%arg0: i32) -> (i32, i32, i32) {
    %c0_i32 = arith.constant 0 : i32
    %c0_i32_0 = arith.constant 0 : i32
    %c0_i32_1 = arith.constant 0 : i32
    return %arg0, %c0_i32, %c0_i32_0 : i32, i32, i32
  }
}

module attributes {stable_mosaic.version = 11 : i64} {
  func.func @_match_score_kernel(%arg0: i32, %arg1: memref<2x2x2x128xf32, #tpu.memory_space<vmem>>, %arg2: memref<2x2x128xf32, #tpu.memory_space<vmem>>, %arg3: memref<2x128x32xf32, #tpu.memory_space<vmem>>, %arg4: memref<1x32xf32, #tpu.memory_space<vmem>>, %arg5: memref<1x32xf32, #tpu.memory_space<vmem>>, %arg6: memref<1x1xf32, #tpu.memory_space<vmem>>, %arg7: memref<2x2xf32, #tpu.memory_space<vmem>>) attributes {dimension_semantics = [#tpu.dimension_semantics<parallel>], iteration_bounds = array<i64: 1>, scalar_prefetch = 0 : i64, scratch_operands = 0 : i64, tpu.core_type = #tpu.core_type<tc>, window_params = [{transform_indices = @transform_0, window_bounds = array<i64: 2, 2, 2, 128>}, {transform_indices = @transform_1, window_bounds = array<i64: 2, 2, 128>}, {pipeline_mode = #tpu.pipeline_mode<synchronous>, transform_indices = @transform_2, window_bounds = array<i64: 2, 128, 32>}, {pipeline_mode = #tpu.pipeline_mode<synchronous>, transform_indices = @transform_3, window_bounds = array<i64: 1, 32>}, {pipeline_mode = #tpu.pipeline_mode<synchronous>, transform_indices = @transform_4, window_bounds = array<i64: 1, 32>}, {pipeline_mode = #tpu.pipeline_mode<synchronous>, transform_indices = @transform_5, window_bounds = array<i64: 1, 1>}, {transform_indices = @transform_6, window_bounds = array<i64: 2, 2>}]} {
    %c0 = arith.constant 0 : index
    %c0_0 = arith.constant 0 : index
    %c0_1 = arith.constant 0 : index
    %c0_2 = arith.constant 0 : index
    %0 = vector.load %arg1[%c0, %c0_0, %c0_1, %c0_2] : memref<2x2x2x128xf32, #tpu.memory_space<vmem>>, vector<2x2x2x128xf32>
    %c0_3 = arith.constant 0 : index
    %c0_4 = arith.constant 0 : index
    %c0_5 = arith.constant 0 : index
    %1 = vector.load %arg2[%c0_3, %c0_4, %c0_5] : memref<2x2x128xf32, #tpu.memory_space<vmem>>, vector<2x2x128xf32>
    %c0_6 = arith.constant 0 : index
    %c0_7 = arith.constant 0 : index
    %c0_8 = arith.constant 0 : index
    %2 = vector.load %arg3[%c0_6, %c0_7, %c0_8] : memref<2x128x32xf32, #tpu.memory_space<vmem>>, vector<1x128x32xf32>
    %3 = vector.shape_cast %2 : vector<1x128x32xf32> to vector<128x32xf32>
    %c1 = arith.constant 1 : index
    %c0_9 = arith.constant 0 : index
    %c0_10 = arith.constant 0 : index
    %4 = vector.load %arg3[%c1, %c0_9, %c0_10] : memref<2x128x32xf32, #tpu.memory_space<vmem>>, vector<1x128x32xf32>
    %5 = vector.shape_cast %4 : vector<1x128x32xf32> to vector<128x32xf32>
    %c0_11 = arith.constant 0 : index
    %c0_12 = arith.constant 0 : index
    %6 = vector.load %arg4[%c0_11, %c0_12] : memref<1x32xf32, #tpu.memory_space<vmem>>, vector<1x32xf32>
    %c0_13 = arith.constant 0 : index
    %c0_14 = arith.constant 0 : index
    %7 = vector.load %arg5[%c0_13, %c0_14] : memref<1x32xf32, #tpu.memory_space<vmem>>, vector<1x32xf32>
    %c0_15 = arith.constant 0 : index
    %c0_16 = arith.constant 0 : index
    %8 = vector.load %arg6[%c0_15, %c0_16] : memref<1x1xf32, #tpu.memory_space<vmem>>, vector<1x1xf32>
    %9 = vector.shape_cast %0 : vector<2x2x2x128xf32> to vector<8x128xf32>
    %10 = vector.shape_cast %1 : vector<2x2x128xf32> to vector<4x128xf32>
    %cst = arith.constant dense<0.000000e+00> : vector<8x32xf32>
    %11 = tpu.matmul %9, %3, %cst {dimension_numbers = #tpu.dot_dimension_numbers<[1], [0], [0], [1], [0, 0, 1, 1], [], []>} : vector<8x128xf32>, vector<128x32xf32>, vector<8x32xf32> -> vector<8x32xf32>
    %cst_17 = arith.constant dense<0.000000e+00> : vector<4x32xf32>
    %12 = tpu.matmul %10, %5, %cst_17 {dimension_numbers = #tpu.dot_dimension_numbers<[1], [0], [0], [1], [0, 0, 1, 1], [], []>} : vector<4x128xf32>, vector<128x32xf32>, vector<4x32xf32> -> vector<4x32xf32>
    %13 = vector.shape_cast %11 : vector<8x32xf32> to vector<4x2x32xf32>
    %14 = vector.shape_cast %12 : vector<4x32xf32> to vector<4x1x32xf32>
    %15 = vector.broadcast %14 : vector<4x1x32xf32> to vector<4x2x32xf32>
    %16 = arith.addf %13, %15 : vector<4x2x32xf32>
    %17 = vector.shape_cast %6 : vector<1x32xf32> to vector<1x1x32xf32>
    %18 = vector.broadcast %17 : vector<1x1x32xf32> to vector<4x2x32xf32>
    %19 = arith.addf %16, %18 : vector<4x2x32xf32>
    %20 = vector.shape_cast %7 : vector<1x32xf32> to vector<1x1x32xf32>
    %21 = vector.broadcast %20 : vector<1x1x32xf32> to vector<4x2x32xf32>
    %22 = arith.mulf %19, %21 : vector<4x2x32xf32>
    %cst_18 = arith.constant dense<0.000000e+00> : vector<4x2xf32>
    %23 = vector.multi_reduction <add>, %22, %cst_18 [2] : vector<4x2x32xf32> to vector<4x2xf32>
    %24 = vector.broadcast %8 : vector<1x1xf32> to vector<4x2xf32>
    %25 = arith.addf %23, %24 : vector<4x2xf32>
    %cst_19 = arith.constant dense<0xFF800000> : vector<4xf32>
    %26 = vector.multi_reduction <maximumf>, %25, %cst_19 [1] : vector<4x2xf32> to vector<4xf32>
    %27 = vector.shape_cast %26 : vector<4xf32> to vector<4x1xf32>
    %28 = vector.broadcast %27 : vector<4x1xf32> to vector<4x2xf32>
    %29 = arith.subf %25, %28 : vector<4x2xf32>
    %30 = math.exp %29 : vector<4x2xf32>
    %cst_20 = arith.constant dense<0.000000e+00> : vector<4xf32>
    %31 = vector.multi_reduction <add>, %30, %cst_20 [1] : vector<4x2xf32> to vector<4xf32>
    %32 = vector.shape_cast %31 : vector<4xf32> to vector<4x1xf32>
    %33 = vector.broadcast %32 : vector<4x1xf32> to vector<4x2xf32>
    %34 = arith.divf %30, %33 : vector<4x2xf32>
    %35 = vector.shape_cast %0 : vector<2x2x2x128xf32> to vector<4x2x128xf32>
    %36 = vector.shape_cast %34 : vector<4x2xf32> to vector<4x2x1xf32>
    %37 = vector.broadcast %36 : vector<4x2x1xf32> to vector<4x2x128xf32>
    %38 = arith.mulf %35, %37 : vector<4x2x128xf32>
    %cst_21 = arith.constant dense<0.000000e+00> : vector<4x128xf32>
    %39 = vector.multi_reduction <add>, %38, %cst_21 [1] : vector<4x2x128xf32> to vector<4x128xf32>
    %cst_22 = arith.constant dense<0.000000e+00> : vector<4x32xf32>
    %40 = tpu.matmul %39, %3, %cst_22 {dimension_numbers = #tpu.dot_dimension_numbers<[1], [0], [0], [1], [0, 0, 1, 1], [], []>} : vector<4x128xf32>, vector<128x32xf32>, vector<4x32xf32> -> vector<4x32xf32>
    %41 = arith.addf %40, %12 : vector<4x32xf32>
    %42 = vector.broadcast %6 : vector<1x32xf32> to vector<4x32xf32>
    %43 = arith.addf %41, %42 : vector<4x32xf32>
    %44 = vector.broadcast %7 : vector<1x32xf32> to vector<4x32xf32>
    %45 = arith.mulf %43, %44 : vector<4x32xf32>
    %cst_23 = arith.constant dense<0.000000e+00> : vector<4xf32>
    %46 = vector.multi_reduction <add>, %45, %cst_23 [1] : vector<4x32xf32> to vector<4xf32>
    %47 = vector.shape_cast %46 : vector<4xf32> to vector<4x1xf32>
    %48 = vector.broadcast %8 : vector<1x1xf32> to vector<4x1xf32>
    %49 = arith.addf %47, %48 : vector<4x1xf32>
    %50 = vector.shape_cast %49 : vector<4x1xf32> to vector<2x2xf32>
    %c0_24 = arith.constant 0 : index
    %c0_25 = arith.constant 0 : index
    %51 = vector.load %arg7[%c0_24, %c0_25] : memref<2x2xf32, #tpu.memory_space<vmem>>, vector<2x2xf32>
    tpu.vector_store %arg7[%c0_24, %c0_25], %50 {strides = array<i32>} : memref<2x2xf32, #tpu.memory_space<vmem>>, vector<2x2xf32>,
    return
  }
  func.func @transform_0(%arg0: i32) -> (i32, i32, i32, i32) {
    %c0_i32 = arith.constant 0 : i32
    %c0_i32_0 = arith.constant 0 : i32
    %c0_i32_1 = arith.constant 0 : i32
    %c0_i32_2 = arith.constant 0 : i32
    return %arg0, %c0_i32, %c0_i32_0, %c0_i32_1 : i32, i32, i32, i32
  }
  func.func @transform_1(%arg0: i32) -> (i32, i32, i32) {
    %c0_i32 = arith.constant 0 : i32
    %c0_i32_0 = arith.constant 0 : i32
    %c0_i32_1 = arith.constant 0 : i32
    return %arg0, %c0_i32, %c0_i32_0 : i32, i32, i32
  }
  func.func @transform_2(%arg0: i32) -> (i32, i32, i32) {
    %c0_i32 = arith.constant 0 : i32
    %c0_i32_0 = arith.constant 0 : i32
    %c0_i32_1 = arith.constant 0 : i32
    %c0_i32_2 = arith.constant 0 : i32
    return %c0_i32, %c0_i32_0, %c0_i32_1 : i32, i32, i32
  }
  func.func @transform_3(%arg0: i32) -> (i32, i32) {
    %c0_i32 = arith.constant 0 : i32
    %c0_i32_0 = arith.constant 0 : i32
    %c0_i32_1 = arith.constant 0 : i32
    return %c0_i32, %c0_i32_0 : i32, i32
  }
  func.func @transform_4(%arg0: i32) -> (i32, i32) {
    %c0_i32 = arith.constant 0 : i32
    %c0_i32_0 = arith.constant 0 : i32
    %c0_i32_1 = arith.constant 0 : i32
    return %c0_i32, %c0_i32_0 : i32, i32
  }
  func.func @transform_5(%arg0: i32) -> (i32, i32) {
    %c0_i32 = arith.constant 0 : i32
    %c0_i32_0 = arith.constant 0 : i32
    %c0_i32_1 = arith.constant 0 : i32
    return %c0_i32, %c0_i32_0 : i32, i32
  }
  func.func @transform_6(%arg0: i32) -> (i32, i32) {
    %c0_i32 = arith.constant 0 : i32
    %c0_i32_0 = arith.constant 0 : i32
    return %arg0, %c0_i32 : i32, i32
  }
}

</mosaic_0001>

<llo_original>
// kernel: mlman_forward.3
$region0: #{mlman_forward.3}
  #allocation0 [shape = 'u32[]', space=smem, size = 0x4, offset = 0x4, fixed_abs, tag = 'smem constant byte address 0x4 - core index']
  #allocation1 [shape = 'u32[144,128]{1,0:T(1,128)}', space=vmem, size = 0x12000, scoped, tag = 'internal scratch']
  #allocation2 [shape = 'f32[1,1]{1,0:T(1,128)S(1)}', space=vmem, size = 0x200, scoped, tag = 'scoped memory for mlman_forward.3']
  %s0 = inlined_call_operand.vmem [shape: f32[2,2,2,128], index: 0, kind: input, shape index: {}]
  %s1 = inlined_call_operand.vmem [shape: f32[2,2,128], index: 1, kind: input, shape index: {}]
  %s2 = inlined_call_operand.vmem [shape: f32[2,128,32], index: 2, kind: input, shape index: {}]
  %s3 = inlined_call_operand.vmem [shape: f32[1,32], index: 3, kind: input, shape index: {}]
  %s4 = inlined_call_operand.vmem [shape: f32[1,32], index: 4, kind: input, shape index: {}]
  %s5 = inlined_call_operand.<no memory space> [shape: f32[1,1], index: 5, kind: input, shape index: {}]
  %s6 = inlined_call_operand.vmem [shape: f32[2,2], index: 6, kind: output, shape index: {}]
  %s7 = sld [smem:[#allocation0]]
  $region34: #{mlman_forward.3} parent=0
    _
  %s9 = ssub.s32 1, %s7
  %s10 = scalar_select 0, %s9, %s7
  %v11 = vstv %s5
  %12 = vst [vmem:[#allocation2] sm:$0x1] %v11
  // Predicated region
  $region2: #{mlman_forward.3} parent=0 // pred_check
    _
  $region3: #{mlman_forward.3} parent=0 // pred_check_branch
    %14 = sbr.rel (0) target = $region5
  $region4: #{mlman_forward.3} parent=0 // pred_region
    _
  $region5: #{mlman_forward.3} parent=0 // pred_fallthru
    _
  // Predicated region
  $region6: #{mlman_forward.3} parent=0 // pred_check
    _
  $region7: #{mlman_forward.3} parent=0 // pred_check_branch
    %16 = sbr.rel (0) target = $region9
  $region8: #{mlman_forward.3} parent=0 // pred_region
    _
  $region9: #{mlman_forward.3} parent=0 // pred_fallthru
    _
  // Predicated region
  $region10: #{mlman_forward.3} parent=0 // pred_check
    _
  $region11: #{mlman_forward.3} parent=0 // pred_check_branch
    %18 = sbr.rel (0) target = $region13
  $region12: #{mlman_forward.3} parent=0 // pred_region
    _
  $region13: #{mlman_forward.3} parent=0 // pred_fallthru
    _
  // Predicated region
  $region14: #{mlman_forward.3} parent=0 // pred_check
    _
  $region15: #{mlman_forward.3} parent=0 // pred_check_branch
    %20 = sbr.rel (0) target = $region17
  $region16: #{mlman_forward.3} parent=0 // pred_region
    _
  $region17: #{mlman_forward.3} parent=0 // pred_fallthru
    _
  // Predicated region
  $region18: #{mlman_forward.3} parent=0 // pred_check
    _
  $region19: #{mlman_forward.3} parent=0 // pred_check_branch
    %22 = sbr.rel (0) target = $region21
  $region20: #{mlman_forward.3} parent=0 // pred_region
    _
  $region21: #{mlman_forward.3} parent=0 // pred_fallthru
    _
  // Predicated region
  $region22: #{mlman_forward.3} parent=0 // pred_check
    _
  $region23: #{mlman_forward.3} parent=0 // pred_check_branch
    %24 = sbr.rel (0) target = $region25
  $region24: #{mlman_forward.3} parent=0 // pred_region
    _
  $region25: #{mlman_forward.3} parent=0 // pred_fallthru
    _
  %v25 = vld [vmem:[%s0] sm:$0x3]
  %v26 = vld [vmem:[%s0 + $0x2] sm:$0x3]
  %v27 = vld [vmem:[%s0 + $0x4] sm:$0x3]
  %v28 = vld [vmem:[%s0 + $0x6] sm:$0x3]
  %v29 = vld [vmem:[%s1] sm:$0x3]
  %v30 = vld [vmem:[%s1 + $0x2] sm:$0x3]
  %v31 = vld [vmem:[%s2] sm:$0xff]
  %v32 = vld [vmem:[%s2 + $0x8] sm:$0xff]
  %v33 = vld [vmem:[%s2 + $0x10] sm:$0xff]
  %v34 = vld [vmem:[%s2 + $0x18] sm:$0xff]
  %v35 = vld [vmem:[%s2 + $0x20] sm:$0xff]
  %v36 = vld [vmem:[%s2 + $0x28] sm:$0xff]
  %v37 = vld [vmem:[%s2 + $0x30] sm:$0xff]
  %v38 = vld [vmem:[%s2 + $0x38] sm:$0xff]
  %v39 = vld [vmem:[%s2 + $0x40] sm:$0xff]
  %v40 = vld [vmem:[%s2 + $0x48] sm:$0xff]
  %v41 = vld [vmem:[%s2 + $0x50] sm:$0xff]
  %v42 = vld [vmem:[%s2 + $0x58] sm:$0xff]
  %v43 = vld [vmem:[%s2 + $0x60] sm:$0xff]
  %v44 = vld [vmem:[%s2 + $0x68] sm:$0xff]
  %v45 = vld [vmem:[%s2 + $0x70] sm:$0xff]
  %v46 = vld [vmem:[%s2 + $0x78] sm:$0xff]
  %s47 = scalar_lea.vmem %s2, 128
  %v48 = vld [vmem:[%s47] sm:$0xff]
  %v49 = vld [vmem:[%s47 + $0x8] sm:$0xff]
  %v50 = vld [vmem:[%s47 + $0x10] sm:$0xff]
  %v51 = vld [vmem:[%s47 + $0x18] sm:$0xff]
  %v52 = vld [vmem:[%s47 + $0x20] sm:$0xff]
  %v53 = vld [vmem:[%s47 + $0x28] sm:$0xff]
  %v54 = vld [vmem:[%s47 + $0x30] sm:$0xff]
  %v55 = vld [vmem:[%s47 + $0x38] sm:$0xff]
  %v56 = vld [vmem:[%s47 + $0x40] sm:$0xff]
  %v57 = vld [vmem:[%s47 + $0x48] sm:$0xff]
  %v58 = vld [vmem:[%s47 + $0x50] sm:$0xff]
  %v59 = vld [vmem:[%s47 + $0x58] sm:$0xff]
  %v60 = vld [vmem:[%s47 + $0x60] sm:$0xff]
  %v61 = vld [vmem:[%s47 + $0x68] sm:$0xff]
  %v62 = vld [vmem:[%s47 + $0x70] sm:$0xff]
  %v63 = vld [vmem:[%s47 + $0x78] sm:$0xff]
  %v64 = vld [vmem:[%s3] sm:$0x1]
  %v65 = vld [vmem:[%s4] sm:$0x1]
  %v66 = vld [vmem:[#allocation2] sm:$0x1]
  %v71 = vcombine.low %v25, %v26
  %v72 = vcombine.low %v27, %v28
  %v74 = vunpack.c.l.s4 1983009808
  %v75 = vunpack.c.0.s8 %v74
  %v76 = vlaneseq
  %v77 = vshrl.u32 %v76, 7
  %v78 = vsub.s32 %v75, %v77
  %v79 = vrot.slane %v71, %v78
  %v81 = vunpack.c.l.s4 1983009808
  %v82 = vunpack.c.0.s8 %v81
  %v83 = vlaneseq
  %v84 = vshrl.u32 %v83, 7
  %v85 = vsub.s32 %v82, %v84
  %v86 = vrot.slane %v72, %v85
  %v87 = vcombine.low %v79, %v86
  %89 = vmatprep.subr.mxu0 0.0
  %90 = vmatpush1.msra.mxu0 %v46
  %91 = vmatprep.subr.mxu0 0.0
  %92 = vmatpush1.msra.mxu0 %v45
  %93 = vmatprep.subr.mxu0 0.0
  %94 = vmatpush1.msra.mxu0 %v44
  %95 = vmatprep.subr.mxu0 0.0
  %96 = vmatpush1.msra.mxu0 %v43
  %97 = vmatprep.subr.mxu0 0.0
  %98 = vmatpush1.msra.mxu0 %v42
  %99 = vmatprep.subr.mxu0 0.0
  %100 = vmatpush1.msra.mxu0 %v41
  %101 = vmatprep.subr.mxu0 0.0
  %102 = vmatpush1.msra.mxu0 %v40
  %103 = vmatprep.subr.mxu0 0.0
  %104 = vmatpush1.msra.mxu0 %v39
  %105 = vmatprep.subr.mxu0 0.0
  %106 = vmatpush1.msra.mxu0 %v38
  %107 = vmatprep.subr.mxu0 0.0
  %108 = vmatpush1.msra.mxu0 %v37
  %109 = vmatprep.subr.mxu0 0.0
  %110 = vmatpush1.msra.mxu0 %v36
  %111 = vmatprep.subr.mxu0 0.0
  %112 = vmatpush1.msra.mxu0 %v35
  %113 = vmatprep.subr.mxu0 0.0
  %114 = vmatpush1.msra.mxu0 %v34
  %115 = vmatprep.subr.mxu0 0.0
  %116 = vmatpush1.msra.mxu0 %v33
  %117 = vmatprep.subr.mxu0 0.0
  %118 = vmatpush1.msra.mxu0 %v32
  %119 = vmatprep.subr.mxu0 0.0
  %120 = vmatpush1.msra.mxu0 %v31
  %121 = vmatprep.subr.mxu0 0.0
  %122 = vmatpush2.msra.mxu0 0.0
  %123 = vmatprep.subr.mxu0 0.0
  %124 = vmatpush2.msra.mxu0 0.0
  %125 = vmatprep.subr.mxu0 0.0
  %126 = vmatpush2.msra.mxu0 0.0
  %127 = vmatprep.subr.mxu0 0.0
  %128 = vmatpush2.msra.mxu0 0.0
  %129 = vmatprep.subr.mxu0 0.0
  %130 = vmatpush2.msra.mxu0 0.0
  %131 = vmatprep.subr.mxu0 0.0
  %132 = vmatpush2.msra.mxu0 0.0
  %133 = vmatprep.subr.mxu0 0.0
  %134 = vmatpush2.msra.mxu0 0.0
  %135 = vmatprep.subr.mxu0 0.0
  %136 = vmatpush2.msra.mxu0 0.0
  %137 = vmatprep.subr.mxu0 0.0
  %138 = vmatpush2.msra.mxu0 0.0
  %139 = vmatprep.subr.mxu0 0.0
  %140 = vmatpush2.msra.mxu0 0.0
  %141 = vmatprep.subr.mxu0 0.0
  %142 = vmatpush2.msra.mxu0 0.0
  %143 = vmatprep.subr.mxu0 0.0
  %144 = vmatpush2.msra.mxu0 0.0
  %145 = vmatprep.subr.mxu0 0.0
  %146 = vmatpush2.msra.mxu0 0.0
  %147 = vmatprep.subr.mxu0 0.0
  %148 = vmatpush2.msra.mxu0 0.0
  %149 = vmatprep.subr.mxu0 0.0
  %150 = vmatpush2.msra.mxu0 0.0
  %151 = vmatprep.subr.mxu0 0.0
  %152 = vmatpush2.msra.mxu0 0.0
  %153 = vmatprep.mubr.f32.mxu0 0.0
  %154 = vmatmul.mubr.f32.gmra.mxu0 %v87
  %v155 = vpop.f32.mrf.mxu0
  %v156 = vadd.f32 0.0, %v155
  %v157 = vpop.f32.mrf.mxu0
  %158 = vdwg.mxu0
  %v161 = vcombine.low %v29, %v30
  %v163 = vunpack.c.l.s4 1983009808
  %v164 = vunpack.c.0.s8 %v163
  %v165 = vlaneseq
  %v166 = vshrl.u32 %v165, 7
  %v167 = vsub.s32 %v164, %v166
  %v168 = vrot.slane %v161, %v167
  %170 = vmatprep.subr.mxu0 0.0
  %171 = vmatpush1.msra.mxu0 %v63
  %172 = vmatprep.subr.mxu0 0.0
  %173 = vmatpush1.msra.mxu0 %v62
  %174 = vmatprep.subr.mxu0 0.0
  %175 = vmatpush1.msra.mxu0 %v61
  %176 = vmatprep.subr.mxu0 0.0
  %177 = vmatpush1.msra.mxu0 %v60
  %178 = vmatprep.subr.mxu0 0.0
  %179 = vmatpush1.msra.mxu0 %v59
  %180 = vmatprep.subr.mxu0 0.0
  %181 = vmatpush1.msra.mxu0 %v58
  %182 = vmatprep.subr.mxu0 0.0
  %183 = vmatpush1.msra.mxu0 %v57
  %184 = vmatprep.subr.mxu0 0.0
  %185 = vmatpush1.msra.mxu0 %v56
  %186 = vmatprep.subr.mxu0 0.0
  %187 = vmatpush1.msra.mxu0 %v55
  %188 = vmatprep.subr.mxu0 0.0
  %189 = vmatpush1.msra.mxu0 %v54
  %190 = vmatprep.subr.mxu0 0.0
  %191 = vmatpush1.msra.mxu0 %v53
  %192 = vmatprep.subr.mxu0 0.0
  %193 = vmatpush1.msra.mxu0 %v52
  %194 = vmatprep.subr.mxu0 0.0
  %195 = vmatpush1.msra.mxu0 %v51
  %196 = vmatprep.subr.mxu0 0.0
  %197 = vmatpush1.msra.mxu0 %v50
  %198 = vmatprep.subr.mxu0 0.0
  %199 = vmatpush1.msra.mxu0 %v49
  %200 = vmatprep.subr.mxu0 0.0
  %201 = vmatpush1.msra.mxu0 %v48
  %202 = vmatprep.subr.mxu0 0.0
  %203 = vmatpush2.msra.mxu0 0.0
  %204 = vmatprep.subr.mxu0 0.0
  %205 = vmatpush2.msra.mxu0 0.0
  %206 = vmatprep.subr.mxu0 0.0
  %207 = vmatpush2.msra.mxu0 0.0
  %208 = vmatprep.subr.mxu0 0.0
  %209 = vmatpush2.msra.mxu0 0.0
  %210 = vmatprep.subr.mxu0 0.0
  %211 = vmatpush2.msra.mxu0 0.0
  %212 = vmatprep.subr.mxu0 0.0
  %213 = vmatpush2.msra.mxu0 0.0
  %214 = vmatprep.subr.mxu0 0.0
  %215 = vmatpush2.msra.mxu0 0.0
  %216 = vmatprep.subr.mxu0 0.0
  %217 = vmatpush2.msra.mxu0 0.0
  %218 = vmatprep.subr.mxu0 0.0
  %219 = vmatpush2.msra.mxu0 0.0
  %220 = vmatprep.subr.mxu0 0.0
  %221 = vmatpush2.msra.mxu0 0.0
  %222 = vmatprep.subr.mxu0 0.0
  %223 = vmatpush2.msra.mxu0 0.0
  %224 = vmatprep.subr.mxu0 0.0
  %225 = vmatpush2.msra.mxu0 0.0
  %226 = vmatprep.subr.mxu0 0.0
  %227 = vmatpush2.msra.mxu0 0.0
  %228 = vmatprep.subr.mxu0 0.0
  %229 = vmatpush2.msra.mxu0 0.0
  %230 = vmatprep.subr.mxu0 0.0
  %231 = vmatpush2.msra.mxu0 0.0
  %232 = vmatprep.subr.mxu0 0.0
  %233 = vmatpush2.msra.mxu0 0.0
  %234 = vmatprep.mubr.f32.mxu0 0.0
  %235 = vmatmul.mubr.f32.gmra.mxu0 %v168
  %v236 = vpop.f32.mrf.mxu0
  %v237 = vadd.f32 0.0, %v236
  %v238 = vpop.f32.mrf.mxu0
  %239 = vdwg.mxu0
  %v241 = vcombine.high %v156, %v156
  %v243 = vunpack.c.l.s4 1983009808
  %v244 = vunpack.c.0.s8 %v243
  %v245 = vlaneseq
  %v246 = vshrl.u32 %v245, 7
  %v247 = vsub.s32 %v244, %v246
  %v248 = vrot.slane %v156, %v247
  %v250 = vunpack.c.l.s4 1983009808
  %v251 = vunpack.c.0.s8 %v250
  %v252 = vlaneseq
  %v253 = vshrl.u32 %v252, 7
  %v254 = vsub.s32 %v251, %v253
  %v255 = vrot.slane %v241, %v254
  %v256 = vcombine.high %v248, %v248
  %v257 = vcombine.high %v255, %v255
  %v264 = vunpack.c.l.s4 1966171168
  %v265 = vunpack.c.0.s8 %v264
  %v266 = vlaneseq
  %v267 = vshrl.u32 %v266, 7
  %v268 = vsub.s32 %v265, %v267
  %v269 = vrot.slane %v237, %v268
  %v270 = vcombine.high %v269, %v269
  %v272 = vunpack.c.l.s4 1966171168
  %v273 = vunpack.c.0.s8 %v272
  %v274 = vlaneseq
  %v275 = vshrl.u32 %v274, 7
  %v276 = vsub.s32 %v273, %v275
  %v277 = vrot.slane %v269, %v276
  %v279 = vunpack.c.l.s4 1966171168
  %v280 = vunpack.c.0.s8 %v279
  %v281 = vlaneseq
  %v282 = vshrl.u32 %v281, 7
  %v283 = vsub.s32 %v280, %v282
  %v284 = vrot.slane %v270, %v283
  %v285 = vcombine.high %v277, %v277
  %v286 = vcombine.high %v284, %v284
  %v287 = vlaneseq
  %v288 = vshrl.u32 %v287, 7
  %v289 = vsub.s32 0, %v288
  %v290 = vrot.slane %v277, %v289
  %v291 = vlaneseq
  %v292 = vshrl.u32 %v291, 7
  %v293 = vsub.s32 0, %v292
  %v294 = vrot.slane %v284, %v293
  %v295 = vlaneseq
  %v296 = vshrl.u32 %v295, 7
  %v297 = vsub.s32 0, %v296
  %v298 = vrot.slane %v285, %v297
  %v299 = vlaneseq
  %v300 = vshrl.u32 %v299, 7
  %v301 = vsub.s32 0, %v300
  %v302 = vrot.slane %v286, %v301
  %v307 = vadd.f32 %v248, %v290
  %v308 = vadd.f32 %v256, %v294
  %v309 = vadd.f32 %v255, %v298
  %v310 = vadd.f32 %v257, %v302
  %v312 = vlaneseq
  %v313 = vshrl.u32 %v312, 7
  %v314 = vsub.s32 0, %v313
  %v315 = vrot.slane %v64, %v314
  %v317 = vadd.f32 %v307, %v315
  %v318 = vadd.f32 %v308, %v315
  %v319 = vadd.f32 %v309, %v315
  %v320 = vadd.f32 %v310, %v315
  %v322 = vlaneseq
  %v323 = vshrl.u32 %v322, 7
  %v324 = vsub.s32 0, %v323
  %v325 = vrot.slane %v65, %v324
  %v327 = vmul.f32 %v317, %v325
  %v328 = vmul.f32 %v318, %v325
  %v329 = vmul.f32 %v319, %v325
  %v330 = vmul.f32 %v320, %v325
  %vm331 = vcmask 254976
  %v332 = vsel %vm331, %v327, 0.0
  %333 = vadd.xlane.f32.xlu0 %v332
  %v334 = vpop.xlane.xlu0 %333
  %v335 = vsel %vm331, %v328, 0.0
  %336 = vadd.xlane.f32.xlu0 %v335
  %v337 = vpop.xlane.xlu0 %336
  %v338 = vsel %vm331, %v329, 0.0
  %339 = vadd.xlane.f32.xlu0 %v338
  %v340 = vpop.xlane.xlu0 %339
  %v341 = vsel %vm331, %v330, 0.0
  %342 = vadd.xlane.f32.xlu0 %v341
  %v343 = vpop.xlane.xlu0 %342
  %v345 = vlaneseq
  %v346 = vshrl.u32 %v345, 7
  %v347 = vsub.s32 0, %v346
  %v348 = vrot.slane %v66, %v347
  %349 = vset.pattern.permute.xlu0 0
  %350 = vperm.xlu0 %349, %v348
  %v351 = vpop.permute.xlu0 %350
  %v353 = vadd.f32 %v334, %v351
  %v354 = vadd.f32 %v337, %v351
  %v355 = vadd.f32 %v340, %v351
  %v356 = vadd.f32 %v343, %v351
  %v361 = vlaneseq
  %v362 = vand.u32 %v361, 127
  %v363 = vlaneseq
  %v364 = vshrl.u32 %v363, 7
  %v365 = vsub.s32 %v362, %v364
  %v366 = vrot.slane %v353, %v365
  %v367 = vlaneseq
  %v368 = vshrl.u32 %v367, 7
  %v369 = vsub.s32 %v362, %v368
  %v370 = vrot.slane %v354, %v369
  %v371 = vlaneseq
  %v372 = vshrl.u32 %v371, 7
  %v373 = vsub.s32 %v362, %v372
  %v374 = vrot.slane %v355, %v373
  %v375 = vlaneseq
  %v376 = vshrl.u32 %v375, 7
  %v377 = vsub.s32 %v362, %v376
  %v378 = vrot.slane %v356, %v377
  %vm379 = vcmask 1041409
  %v380 = vsel %vm379, %v370, %v366
  %vm381 = vcmask 1042434
  %v382 = vsel %vm381, %v374, %v380
  %vm383 = vcmask 1043459
  %v384 = vsel %vm383, %v378, %v382
  %vm386 = vcmask 11264
  %v387 = vsel %vm386, %v384, -inf
  %388 = vmax.xlane.f32.xlu0 %v387
  %v389 = vpop.xlane.xlu0 %388
  %v391 = vlaneseq
  %v392 = vshrl.u32 %v391, 7
  %v393 = vsub.s32 0, %v392
  %v394 = vrot.slane %v389, %v393
  %v395 = vlaneseq
  %v396 = vshrl.u32 %v395, 7
  %v397 = vsub.s32 1, %v396
  %v398 = vrot.slane %v389, %v397
  %v399 = vlaneseq
  %v400 = vshrl.u32 %v399, 7
  %v401 = vsub.s32 2, %v400
  %v402 = vrot.slane %v389, %v401
  %v403 = vlaneseq
  %v404 = vshrl.u32 %v403, 7
  %v405 = vsub.s32 3, %v404
  %v406 = vrot.slane %v389, %v405
  %v411 = vsub.f32 %v353, %v394
  %v412 = vsub.f32 %v354, %v398
  %v413 = vsub.f32 %v355, %v402
  %v414 = vsub.f32 %v356, %v406
  %v415 = vmul.f32 %v411, 1.442695
  %v416 = vpow.pop %v415
  %v417 = vmul.f32 %v412, 1.442695
  %v418 = vpow.pop %v417
  %v419 = vmul.f32 %v413, 1.442695
  %v420 = vpow.pop %v419
  %v421 = vmul.f32 %v414, 1.442695
  %v422 = vpow.pop %v421
  %427 = vset.pattern.permute.xlu0 0
  %428 = vperm.xlu0 %427, %v416
  %v429 = vpop.permute.xlu0 %428
  %430 = vset.pattern.permute.xlu0 0
  %431 = vperm.xlu0 %430, %v418
  %v432 = vpop.permute.xlu0 %431
  %433 = vset.pattern.permute.xlu0 0
  %434 = vperm.xlu0 %433, %v420
  %v435 = vpop.permute.xlu0 %434
  %436 = vset.pattern.permute.xlu0 0
  %437 = vperm.xlu0 %436, %v422
  %v438 = vpop.permute.xlu0 %437
  %v439 = vlaneseq
  %v440 = vshrl.u32 %v439, 7
  %v441 = vsub.s32 %v362, %v440
  %v442 = vrot.slane %v429, %v441
  %v443 = vlaneseq
  %v444 = vshrl.u32 %v443, 7
  %v445 = vsub.s32 %v362, %v444
  %v446 = vrot.slane %v432, %v445
  %v447 = vlaneseq
  %v448 = vshrl.u32 %v447, 7
  %v449 = vsub.s32 %v362, %v448
  %v450 = vrot.slane %v435, %v449
  %v451 = vlaneseq
  %v452 = vshrl.u32 %v451, 7
  %v453 = vsub.s32 %v362, %v452
  %v454 = vrot.slane %v438, %v453
  %v455 = vsel %vm379, %v446, %v442
  %v456 = vsel %vm381, %v450, %v455
  %v457 = vsel %vm383, %v454, %v456
  %v459 = vsel %vm386, %v457, 0.0
  %460 = vadd.xlane.f32.xlu0 %v459
  %v461 = vpop.xlane.xlu0 %460
  %v463 = vlaneseq
  %v464 = vshrl.u32 %v463, 7
  %v465 = vsub.s32 0, %v464
  %v466 = vrot.slane %v461, %v465
  %v467 = vlaneseq
  %v468 = vshrl.u32 %v467, 7
  %v469 = vsub.s32 1, %v468
  %v470 = vrot.slane %v461, %v469
  %v471 = vlaneseq
  %v472 = vshrl.u32 %v471, 7
  %v473 = vsub.s32 2, %v472
  %v474 = vrot.slane %v461, %v473
  %v475 = vlaneseq
  %v476 = vshrl.u32 %v475, 7
  %v477 = vsub.s32 3, %v476
  %v478 = vrot.slane %v461, %v477
  %v483 = vrcp.pop %v466
  %v484 = vmul.f32 %v416, %v483
  %v485 = vrcp.pop %v470
  %v486 = vmul.f32 %v418, %v485
  %v487 = vrcp.pop %v474
  %v488 = vmul.f32 %v420, %v487
  %v489 = vrcp.pop %v478
  %v490 = vmul.f32 %v422, %v489
  %492 = vset.pattern.permute.xlu0 0
  %493 = vperm.xlu0 %492, %v484
  %v494 = vpop.permute.xlu0 %493
  %497 = vset.pattern.permute.xlu0 0
  %498 = vperm.xlu0 %497, %v486
  %v499 = vpop.permute.xlu0 %498
  %502 = vset.pattern.permute.xlu0 0
  %503 = vperm.xlu0 %502, %v488
  %v504 = vpop.permute.xlu0 %503
  %507 = vset.pattern.permute.xlu0 0
  %508 = vperm.xlu0 %507, %v490
  %v509 = vpop.permute.xlu0 %508
  %v511 = vmul.f32 %v25, %v494
  %v512 = vmul.f32 %v26, %v499
  %v513 = vmul.f32 %v27, %v504
  %v514 = vmul.f32 %v28, %v509
  %vm515 = vcmask 1041408
  %v516 = vsel %vm515, %v511, 0.0
  %v517 = vrot.slane %v516, 4
  %v518 = vadd.f32 %v516, %v517
  %v519 = vrot.slane %v518, 2
  %v520 = vadd.f32 %v518, %v519
  %v521 = vrot.slane %v520, 1
  %v522 = vadd.f32 %v520, %v521
  %v523 = vsel %vm515, %v512, 0.0
  %v524 = vrot.slane %v523, 4
  %v525 = vadd.f32 %v523, %v524
  %v526 = vrot.slane %v525, 2
  %v527 = vadd.f32 %v525, %v526
  %v528 = vrot.slane %v527, 1
  %v529 = vadd.f32 %v527, %v528
  %v530 = vsel %vm515, %v513, 0.0
  %v531 = vrot.slane %v530, 4
  %v532 = vadd.f32 %v530, %v531
  %v533 = vrot.slane %v532, 2
  %v534 = vadd.f32 %v532, %v533
  %v535 = vrot.slane %v534, 1
  %v536 = vadd.f32 %v534, %v535
  %v537 = vsel %vm515, %v514, 0.0
  %v538 = vrot.slane %v537, 4
  %v539 = vadd.f32 %v537, %v538
  %v540 = vrot.slane %v539, 2
  %v541 = vadd.f32 %v539, %v540
  %v542 = vrot.slane %v541, 1
  %v543 = vadd.f32 %v541, %v542
  %v548 = vsel %vm379, %v529, %v522
  %v549 = vsel %vm381, %v536, %v548
  %v550 = vsel %vm383, %v543, %v549
  %552 = vmatprep.subr.mxu0 0.0
  %553 = vmatpush1.msra.mxu0 %v46
  %554 = vmatprep.subr.mxu0 0.0
  %555 = vmatpush1.msra.mxu0 %v45
  %556 = vmatprep.subr.mxu0 0.0
  %557 = vmatpush1.msra.mxu0 %v44
  %558 = vmatprep.subr.mxu0 0.0
  %559 = vmatpush1.msra.mxu0 %v43
  %560 = vmatprep.subr.mxu0 0.0
  %561 = vmatpush1.msra.mxu0 %v42
  %562 = vmatprep.subr.mxu0 0.0
  %563 = vmatpush1.msra.mxu0 %v41
  %564 = vmatprep.subr.mxu0 0.0
  %565 = vmatpush1.msra.mxu0 %v40
  %566 = vmatprep.subr.mxu0 0.0
  %567 = vmatpush1.msra.mxu0 %v39
  %568 = vmatprep.subr.mxu0 0.0
  %569 = vmatpush1.msra.mxu0 %v38
  %570 = vmatprep.subr.mxu0 0.0
  %571 = vmatpush1.msra.mxu0 %v37
  %572 = vmatprep.subr.mxu0 0.0
  %573 = vmatpush1.msra.mxu0 %v36
  %574 = vmatprep.subr.mxu0 0.0
  %575 = vmatpush1.msra.mxu0 %v35
  %576 = vmatprep.subr.mxu0 0.0
  %577 = vmatpush1.msra.mxu0 %v34
  %578 = vmatprep.subr.mxu0 0.0
  %579 = vmatpush1.msra.mxu0 %v33
  %580 = vmatprep.subr.mxu0 0.0
  %581 = vmatpush1.msra.mxu0 %v32
  %582 = vmatprep.subr.mxu0 0.0
  %583 = vmatpush1.msra.mxu0 %v31
  %584 = vmatprep.subr.mxu0 0.0
  %585 = vmatpush2.msra.mxu0 0.0
  %586 = vmatprep.subr.mxu0 0.0
  %587 = vmatpush2.msra.mxu0 0.0
  %588 = vmatprep.subr.mxu0 0.0
  %589 = vmatpush2.msra.mxu0 0.0
  %590 = vmatprep.subr.mxu0 0.0
  %591 = vmatpush2.msra.mxu0 0.0
  %592 = vmatprep.subr.mxu0 0.0
  %593 = vmatpush2.msra.mxu0 0.0
  %594 = vmatprep.subr.mxu0 0.0
  %595 = vmatpush2.msra.mxu0 0.0
  %596 = vmatprep.subr.mxu0 0.0
  %597 = vmatpush2.msra.mxu0 0.0
  %598 = vmatprep.subr.mxu0 0.0
  %599 = vmatpush2.msra.mxu0 0.0
  %600 = vmatprep.subr.mxu0 0.0
  %601 = vmatpush2.msra.mxu0 0.0
  %602 = vmatprep.subr.mxu0 0.0
  %603 = vmatpush2.msra.mxu0 0.0
  %604 = vmatprep.subr.mxu0 0.0
  %605 = vmatpush2.msra.mxu0 0.0
  %606 = vmatprep.subr.mxu0 0.0
  %607 = vmatpush2.msra.mxu0 0.0
  %608 = vmatprep.subr.mxu0 0.0
  %609 = vmatpush2.msra.mxu0 0.0
  %610 = vmatprep.subr.mxu0 0.0
  %611 = vmatpush2.msra.mxu0 0.0
  %612 = vmatprep.subr.mxu0 0.0
  %613 = vmatpush2.msra.mxu0 0.0
  %614 = vmatprep.subr.mxu0 0.0
  %615 = vmatpush2.msra.mxu0 0.0
  %616 = vmatprep.mubr.f32.mxu0 0.0
  %617 = vmatmul.mubr.f32.gmra.mxu0 %v550
  %v618 = vpop.f32.mrf.mxu0
  %v619 = vadd.f32 %v237, %v618
  %v620 = vpop.f32.mrf.mxu0
  %621 = vdwg.mxu0
  %v622 = vadd.f32 %v619, %v315
  %v623 = vmul.f32 %v622, %v325
  %vm624 = vcmask 257024
  %v625 = vsel %vm624, %v623, 0.0
  %626 = vadd.xlane.f32.xlu0 %v625
  %v627 = vpop.xlane.xlu0 %626
  %v629 = vadd.f32 %v627, %v348
  %v632 = vunpack.c.l.s4 1983009808
  %v633 = vunpack.c.0.s8 %v632
  %v634 = vlaneseq
  %v635 = vshrl.u32 %v634, 7
  %v636 = vsub.s32 %v633, %v635
  %v637 = vrot.slane %v629, %v636
  %v638 = vcombine.high %v637, %v637
  %v640 = vunpack.c.l.s4 1983009808
  %v641 = vunpack.c.0.s8 %v640
  %v642 = vlaneseq
  %v643 = vshrl.u32 %v642, 7
  %v644 = vsub.s32 %v641, %v643
  %v645 = vrot.slane %v637, %v644
  %v647 = vunpack.c.l.s4 1983009808
  %v648 = vunpack.c.0.s8 %v647
  %v649 = vlaneseq
  %v650 = vshrl.u32 %v649, 7
  %v651 = vsub.s32 %v648, %v650
  %v652 = vrot.slane %v638, %v651
  %653 = vset.pattern.permute.xlu0 0
  %654 = vperm.xlu0 %653, %v645
  %v655 = vpop.permute.xlu0 %654
  %656 = vset.pattern.permute.xlu0 0
  %657 = vperm.xlu0 %656, %v652
  %v658 = vpop.permute.xlu0 %657
  %v659 = vlaneseq
  %v660 = vshrl.u32 %v659, 7
  %v661 = vsub.s32 %v362, %v660
  %v662 = vrot.slane %v655, %v661
  %v663 = vlaneseq
  %v664 = vshrl.u32 %v663, 7
  %v665 = vsub.s32 %v362, %v664
  %v666 = vrot.slane %v658, %v665
  %v667 = vsel %vm379, %v666, %v662
  %vm669 = vcmask 9216
  %670 = vst.msk [vmem:[%s6] sm:$0x3] %vm669, %v667
  // Predicated region
  $region26: #{mlman_forward.3} parent=0 // pred_check
    _
  $region27: #{mlman_forward.3} parent=0 // pred_check_branch
    %672 = sbr.rel (0) target = $region29
  $region28: #{mlman_forward.3} parent=0 // pred_region
    _
  $region29: #{mlman_forward.3} parent=0 // pred_fallthru
    _
  // Predicated region
  $region30: #{mlman_forward.3} parent=0 // pred_check
    _
  $region31: #{mlman_forward.3} parent=0 // pred_check_branch
    %674 = sbr.rel (0) target = $region33
  $region32: #{mlman_forward.3} parent=0 // pred_region
    _
  $region33: #{mlman_forward.3} parent=0 // pred_fallthru
    _

// kernel: mlman_forward.2
$region0: #{mlman_forward.2}
  #allocation0 [shape = 'u32[]', space=smem, size = 0x4, offset = 0x4, fixed_abs, tag = 'smem constant byte address 0x4 - core index']
  #allocation1 [shape = 'u32[144,128]{1,0:T(1,128)}', space=vmem, size = 0x12000, scoped, tag = 'internal scratch']
  #allocation2 [shape = 'f32[8,6,256]{2,1,0:T(8,128)}', space=vmem, size = 0x10000, scoped, tag = 'scratch operand']
  %s0 = inlined_call_operand.vmem [shape: f32[32,32], index: 0, kind: input, shape index: {}]
  %s1 = inlined_call_operand.vmem [shape: f32[2,8,32], index: 1, kind: input, shape index: {}]
  %s2 = inlined_call_operand.vmem [shape: f32[4,32,32], index: 2, kind: input, shape index: {}]
  %s3 = inlined_call_operand.vmem [shape: f32[1,32], index: 3, kind: input, shape index: {}]
  %s4 = inlined_call_operand.vmem [shape: f32[32,256], index: 4, kind: input, shape index: {}]
  %s5 = inlined_call_operand.vmem [shape: f32[1,256], index: 5, kind: input, shape index: {}]
  %s6 = inlined_call_operand.vmem [shape: f32[32,128], index: 6, kind: input, shape index: {}]
  %s7 = inlined_call_operand.vmem [shape: f32[32,128], index: 7, kind: input, shape index: {}]
  %s8 = inlined_call_operand.vmem [shape: f32[2,6,128], index: 8, kind: output, shape index: {}]
  %s9 = sld [smem:[#allocation0]]
  $region72: #{mlman_forward.2} parent=0
    _
  %s11 = ssub.s32 1, %s9
  %s12 = scalar_select 0, %s11, %s9
  loop: start=0, step=1, limit=4
  $region2: #{mlman_forward.2} parent=0 // loop_pre_header
    _
  $region3: #{mlman_forward.2} parent=0 // loop_header
    %s14 = sphi 0, %s18
    %p15 = scmp.ge.s32.totalorder %s14, 4
    %s22 = sphi 0, %s22
    %s24 = sphi 0, %s22
    %s25 = sphi 0, %s24
    %s39 = sphi 0, %s25
    %s45 = sphi 0, %s47
    %s48 = sphi 0, %s45
    %s49 = sphi 0, %s48
    %s65 = sphi 0, %s49
    %s69 = sphi 0, %s69
    %s71 = sphi 0, %s69
    %s72 = sphi 0, %s71
    %s86 = sphi 0, %s72
    %s90 = sphi 0, %s90
    %s92 = sphi 0, %s90
    %s93 = sphi 0, %s92
    %s107 = sphi 0, %s93
    %s111 = sphi 0, %s111
    %s113 = sphi 0, %s111
    %s114 = sphi 0, %s113
    %s128 = sphi 0, %s114
    %s132 = sphi 0, %s132
    %s134 = sphi 0, %s132
    %s135 = sphi 0, %s134
    %s149 = sphi 0, %s135
    %s153 = sphi 0, %s153
    %s155 = sphi 0, %s153
    %s156 = sphi 0, %s155
    %s170 = sphi 0, %s156
    %s174 = sphi 0, %s174
    %s176 = sphi 0, %s174
    %s177 = sphi 0, %s176
    %s191 = sphi 0, %s177
    %s197 = sphi 0, %s199
    %s200 = sphi 0, %s197
    %s201 = sphi 0, %s200
    %s217 = sphi 0, %s201
  $region4: #{mlman_forward.2} parent=0 // loop_header_branch
    %17 = sbr.rel (%p15) target = $region8
  $region5: #{mlman_forward.2} parent=0 // loop_body
    %s19 = ssub.s32 %s14, 1
    %s20 = ssub.s32 %s14, 2
    %s21 = sadd.s32 %s14, 1
    %s23 = sadd.s32 %s22, 1
    %p26 = scmp.eq.s32.totalorder %s14, 1
    %p27 = scmp.ne.s32.totalorder %s22, %s24
    %p28 = scmp.eq.s32.totalorder %s14, 0
    %p29 = por %p27, %p28
    %p30 = scmp.ne.s32.totalorder %s22, %s24
    %p31 = scmp.eq.s32.totalorder %s19, 1
    %p32 = por %p30, %p31
    %p33 = scmp.ne.s32.totalorder %s24, %s25
    %p34 = scmp.eq.s32.totalorder %s19, 0
    %p35 = por %p33, %p34
    %p36 = scmp.ne.s32.totalorder %s24, %s25
    %p37 = scmp.eq.s32.totalorder %s20, 1
    %p38 = por %p36, %p37
    %p40 = scmp.ne.s32.totalorder %s25, %s39
    %p41 = scmp.eq.s32.totalorder %s20, 0
    %p42 = por %p40, %p41
    %s43 = ssub.s32 %s14, %s21
    %p44 = scmp.eq.s32.totalorder %s43, 0
    %s46 = sadd.s32 %s45, 1
    %s47 = scalar_select %p44, %s45, %s46
    %p50 = pneg %p44
    %p51 = scmp.eq.s32.totalorder %s14, 1
    %p52 = por %p50, %p51
    %p53 = scmp.ne.s32.totalorder %s45, %s48
    %p54 = scmp.eq.s32.totalorder %s14, 0
    %p55 = por %p53, %p54
    %p56 = scmp.ne.s32.totalorder %s45, %s48
    %p57 = scmp.eq.s32.totalorder %s19, 1
    %p58 = por %p56, %p57
    %p59 = scmp.ne.s32.totalorder %s48, %s49
    %p60 = scmp.eq.s32.totalorder %s19, 0
    %p61 = por %p59, %p60
    %p62 = scmp.ne.s32.totalorder %s48, %s49
    %p63 = scmp.eq.s32.totalorder %s20, 1
    %p64 = por %p62, %p63
    %p66 = scmp.ne.s32.totalorder %s49, %s65
    %p67 = scmp.eq.s32.totalorder %s20, 0
    %p68 = por %p66, %p67
    %s70 = sadd.s32 %s69, 1
    %p73 = scmp.eq.s32.totalorder %s14, 1
    %p74 = scmp.ne.s32.totalorder %s69, %s71
    %p75 = scmp.eq.s32.totalorder %s14, 0
    %p76 = por %p74, %p75
    %p77 = scmp.ne.s32.totalorder %s69, %s71
    %p78 = scmp.eq.s32.totalorder %s19, 1
    %p79 = por %p77, %p78
    %p80 = scmp.ne.s32.totalorder %s71, %s72
    %p81 = scmp.eq.s32.totalorder %s19, 0
    %p82 = por %p80, %p81
    %p83 = scmp.ne.s32.totalorder %s71, %s72
    %p84 = scmp.eq.s32.totalorder %s20, 1
    %p85 = por %p83, %p84
    %p87 = scmp.ne.s32.totalorder %s72, %s86
    %p88 = scmp.eq.s32.totalorder %s20, 0
    %p89 = por %p87, %p88
    %s91 = sadd.s32 %s90, 1
    %p94 = scmp.eq.s32.totalorder %s14, 1
    %p95 = scmp.ne.s32.totalorder %s90, %s92
    %p96 = scmp.eq.s32.totalorder %s14, 0
    %p97 = por %p95, %p96
    %p98 = scmp.ne.s32.totalorder %s90, %s92
    %p99 = scmp.eq.s32.totalorder %s19, 1
    %p100 = por %p98, %p99
    %p101 = scmp.ne.s32.totalorder %s92, %s93
    %p102 = scmp.eq.s32.totalorder %s19, 0
    %p103 = por %p101, %p102
    %p104 = scmp.ne.s32.totalorder %s92, %s93
    %p105 = scmp.eq.s32.totalorder %s20, 1
    %p106 = por %p104, %p105
    %p108 = scmp.ne.s32.totalorder %s93, %s107
    %p109 = scmp.eq.s32.totalorder %s20, 0
    %p110 = por %p108, %p109
    %s112 = sadd.s32 %s111, 1
    %p115 = scmp.eq.s32.totalorder %s14, 1
    %p116 = scmp.ne.s32.totalorder %s111, %s113
    %p117 = scmp.eq.s32.totalorder %s14, 0
    %p118 = por %p116, %p117
    %p119 = scmp.ne.s32.totalorder %s111, %s113
    %p120 = scmp.eq.s32.totalorder %s19, 1
    %p121 = por %p119, %p120
    %p122 = scmp.ne.s32.totalorder %s113, %s114
    %p123 = scmp.eq.s32.totalorder %s19, 0
    %p124 = por %p122, %p123
    %p125 = scmp.ne.s32.totalorder %s113, %s114
    %p126 = scmp.eq.s32.totalorder %s20, 1
    %p127 = por %p125, %p126
    %p129 = scmp.ne.s32.totalorder %s114, %s128
    %p130 = scmp.eq.s32.totalorder %s20, 0
    %p131 = por %p129, %p130
    %s133 = sadd.s32 %s132, 1
    %p136 = scmp.eq.s32.totalorder %s14, 1
    %p137 = scmp.ne.s32.totalorder %s132, %s134
    %p138 = scmp.eq.s32.totalorder %s14, 0
    %p139 = por %p137, %p138
    %p140 = scmp.ne.s32.totalorder %s132, %s134
    %p141 = scmp.eq.s32.totalorder %s19, 1
    %p142 = por %p140, %p141
    %p143 = scmp.ne.s32.totalorder %s134, %s135
    %p144 = scmp.eq.s32.totalorder %s19, 0
    %p145 = por %p143, %p144
    %p146 = scmp.ne.s32.totalorder %s134, %s135
    %p147 = scmp.eq.s32.totalorder %s20, 1
    %p148 = por %p146, %p147
    %p150 = scmp.ne.s32.totalorder %s135, %s149
    %p151 = scmp.eq.s32.totalorder %s20, 0
    %p152 = por %p150, %p151
    %s154 = sadd.s32 %s153, 1
    %p157 = scmp.eq.s32.totalorder %s14, 1
    %p158 = scmp.ne.s32.totalorder %s153, %s155
    %p159 = scmp.eq.s32.totalorder %s14, 0
    %p160 = por %p158, %p159
    %p161 = scmp.ne.s32.totalorder %s153, %s155
    %p162 = scmp.eq.s32.totalorder %s19, 1
    %p163 = por %p161, %p162
    %p164 = scmp.ne.s32.totalorder %s155, %s156
    %p165 = scmp.eq.s32.totalorder %s19, 0
    %p166 = por %p164, %p165
    %p167 = scmp.ne.s32.totalorder %s155, %s156
    %p168 = scmp.eq.s32.totalorder %s20, 1
    %p169 = por %p167, %p168
    %p171 = scmp.ne.s32.totalorder %s156, %s170
    %p172 = scmp.eq.s32.totalorder %s20, 0
    %p173 = por %p171, %p172
    %s175 = sadd.s32 %s174, 1
    %p178 = scmp.eq.s32.totalorder %s14, 1
    %p179 = scmp.ne.s32.totalorder %s174, %s176
    %p180 = scmp.eq.s32.totalorder %s14, 0
    %p181 = por %p179, %p180
    %p182 = scmp.ne.s32.totalorder %s174, %s176
    %p183 = scmp.eq.s32.totalorder %s19, 1
    %p184 = por %p182, %p183
    %p185 = scmp.ne.s32.totalorder %s176, %s177
    %p186 = scmp.eq.s32.totalorder %s19, 0
    %p187 = por %p185, %p186
    %p188 = scmp.ne.s32.totalorder %s176, %s177
    %p189 = scmp.eq.s32.totalorder %s20, 1
    %p190 = por %p188, %p189
    %p192 = scmp.ne.s32.totalorder %s177, %s191
    %p193 = scmp.eq.s32.totalorder %s20, 0
    %p194 = por %p192, %p193
    %s195 = ssub.s32 %s14, %s21
    %p196 = scmp.eq.s32.totalorder %s195, 0
    %s198 = sadd.s32 %s197, 1
    %s199 = scalar_select %p196, %s197, %s198
    %p202 = pneg %p196
    %p203 = scmp.eq.s32.totalorder %s14, 1
    %p204 = por %p202, %p203
    %p205 = scmp.ne.s32.totalorder %s197, %s200
    %p206 = scmp.eq.s32.totalorder %s14, 0
    %p207 = por %p205, %p206
    %p208 = scmp.ne.s32.totalorder %s197, %s200
    %p209 = scmp.eq.s32.totalorder %s19, 1
    %p210 = por %p208, %p209
    %p211 = scmp.ne.s32.totalorder %s200, %s201
    %p212 = scmp.eq.s32.totalorder %s19, 0
    %p213 = por %p211, %p212
    %p214 = scmp.ne.s32.totalorder %s200, %s201
    %p215 = scmp.eq.s32.totalorder %s20, 1
    %p216 = por %p214, %p215
    %p218 = scmp.ne.s32.totalorder %s201, %s217
    %p219 = scmp.eq.s32.totalorder %s20, 0
    %p220 = por %p218, %p219
    %p221 = scmp.le.s32.totalorder 1, %s14
    %p222 = scmp.lt.s32.totalorder %s14, 3
    %p223 = pnand %p221, %p222
    %p224 = pneg %p223
    // Predicated region
    $region9: #{mlman_forward.2} parent=5 // pred_check
      _
    $region10: #{mlman_forward.2} parent=5 // pred_check_branch
      %226 = sbr.rel (%p223) target = $region12
    $region11: #{mlman_forward.2} parent=5 // pred_region
      %s227 = ssub.s32 %s14, 1
      // Predicated region
      $region13: #{mlman_forward.2} parent=11 // pred_check
        %p228 = pneg %p35
      $region14: #{mlman_forward.2} parent=11 // pred_check_branch
        %230 = sbr.rel (%p228) target = $region16
      $region15: #{mlman_forward.2} parent=11 // pred_region
        _
      $region16: #{mlman_forward.2} parent=11 // pred_fallthru
        _
      // Predicated region
      $region17: #{mlman_forward.2} parent=11 // pred_check
        %p231 = pneg %p82
      $region18: #{mlman_forward.2} parent=11 // pred_check_branch
        %233 = sbr.rel (%p231) target = $region20
      $region19: #{mlman_forward.2} parent=11 // pred_region
        _
      $region20: #{mlman_forward.2} parent=11 // pred_fallthru
        _
      // Predicated region
      $region21: #{mlman_forward.2} parent=11 // pred_check
        %p234 = pneg %p103
      $region22: #{mlman_forward.2} parent=11 // pred_check_branch
        %236 = sbr.rel (%p234) target = $region24
      $region23: #{mlman_forward.2} parent=11 // pred_region
        _
      $region24: #{mlman_forward.2} parent=11 // pred_fallthru
        _
      // Predicated region
      $region25: #{mlman_forward.2} parent=11 // pred_check
        %p237 = pneg %p124
      $region26: #{mlman_forward.2} parent=11 // pred_check_branch
        %239 = sbr.rel (%p237) target = $region28
      $region27: #{mlman_forward.2} parent=11 // pred_region
        _
      $region28: #{mlman_forward.2} parent=11 // pred_fallthru
        _
      // Predicated region
      $region29: #{mlman_forward.2} parent=11 // pred_check
        %p240 = pneg %p145
      $region30: #{mlman_forward.2} parent=11 // pred_check_branch
        %242 = sbr.rel (%p240) target = $region32
      $region31: #{mlman_forward.2} parent=11 // pred_region
        _
      $region32: #{mlman_forward.2} parent=11 // pred_fallthru
        _
      // Predicated region
      $region33: #{mlman_forward.2} parent=11 // pred_check
        %p243 = pneg %p166
      $region34: #{mlman_forward.2} parent=11 // pred_check_branch
        %245 = sbr.rel (%p243) target = $region36
      $region35: #{mlman_forward.2} parent=11 // pred_region
        _
      $region36: #{mlman_forward.2} parent=11 // pred_fallthru
        _
      // Predicated region
      $region37: #{mlman_forward.2} parent=11 // pred_check
        %p246 = pneg %p187
      $region38: #{mlman_forward.2} parent=11 // pred_check_branch
        %248 = sbr.rel (%p246) target = $region40
      $region39: #{mlman_forward.2} parent=11 // pred_region
        _
      $region40: #{mlman_forward.2} parent=11 // pred_fallthru
        _
    $region12: #{mlman_forward.2} parent=5 // pred_fallthru
      _
    %p249 = scmp.lt.s32.totalorder %s14, 2
    // Predicated region
    $region41: #{mlman_forward.2} parent=5 // pred_check
      %p250 = pneg %p249
    $region42: #{mlman_forward.2} parent=5 // pred_check_branch
      %252 = sbr.rel (%p250) target = $region44
    $region43: #{mlman_forward.2} parent=5 // pred_region
      // Predicated region
      $region45: #{mlman_forward.2} parent=43 // pred_check
        %p253 = pneg %p55
      $region46: #{mlman_forward.2} parent=43 // pred_check_branch
        %255 = sbr.rel (%p253) target = $region48
      $region47: #{mlman_forward.2} parent=43 // pred_region
        %p256 = scmp.lt.s32.totalorder %s14, 1
        %s257 = scalar_select %p256, %s14, 1
        %s258 = smul.addr %s257, 8
        %s259 = scalar_lea.vmem %s1, %s258
      $region48: #{mlman_forward.2} parent=43 // pred_fallthru
        _
    $region44: #{mlman_forward.2} parent=5 // pred_fallthru
      _
    %p260 = scmp.le.s32.totalorder 1, %s14
    %p261 = scmp.lt.s32.totalorder %s14, 3
    %p262 = pnand %p260, %p261
    %p263 = pneg %p262
    // Predicated region
    $region49: #{mlman_forward.2} parent=5 // pred_check
      _
    $region50: #{mlman_forward.2} parent=5 // pred_check_branch
      %265 = sbr.rel (%p262) target = $region52
    $region51: #{mlman_forward.2} parent=5 // pred_region
      %s266 = ssub.s32 %s14, 1
      %p267 = pneg %p35
      %p268 = pneg %p32
      %p269 = scmp.lt.s32.totalorder %s19, 1
      %s270 = scalar_select %p269, %s19, 1
      %s271 = smul.addr %s270, 8
      %s272 = scalar_lea.vmem %s1, %s271
      %p273 = pneg %p61
      %p274 = pneg %p58
      %p275 = pneg %p82
      %p276 = pneg %p79
      %p277 = pneg %p103
      %p278 = pneg %p100
      %p279 = pneg %p124
      %p280 = pneg %p121
      %p281 = pneg %p145
      %p282 = pneg %p142
      %p283 = pneg %p166
      %p284 = pneg %p163
      %p285 = pneg %p187
      %p286 = pneg %p184
      %p287 = pneg %p213
      %p288 = pneg %p210
      %p289 = scmp.lt.s32.totalorder %s19, 1
      %s290 = scalar_select %p289, %s19, 1
      %s291 = smul.addr %s290, 8
      %s292 = scalar_lea.vmem %s8, %s291
      %p293 = scmp.lt.s32.totalorder %s19, 1
      %s294 = scalar_select %p293, %s19, 1
      %s295 = smul.addr %s294, 8
      %s296 = scalar_lea.vmem %s1, %s295
      %p297 = scmp.lt.s32.totalorder %s19, 1
      %s298 = scalar_select %p297, %s19, 1
      %s299 = smul.addr %s298, 8
      %s300 = scalar_lea.vmem %s8, %s299
      %v301 = vld [vmem:[%s0] sm:$0xff]
      %v302 = vld [vmem:[%s0 + $0x8] sm:$0xff]
      %v303 = vld [vmem:[%s0 + $0x10] sm:$0xff]
      %v304 = vld [vmem:[%s0 + $0x18] sm:$0xff]
      %v305 = vld [vmem:[%s296] sm:$0xff]
      %vm306 = vcmask 261120
      %v308 = vsel %vm306, %v301, 0
      %v311 = vsel %vm306, %v302, 0
      %v314 = vsel %vm306, %v303, 0
      %v317 = vsel %vm306, %v304, 0
      %v320 = vsel %vm306, %v305, 0
      %322 = vmatprep.subr.mxu0 0.0
      %323 = vmatpush1.xpose.msra.mxu0 0.0
      %324 = vmatprep.subr.mxu0 0.0
      %325 = vmatpush1.xpose.msra.mxu0 0.0
      %326 = vmatprep.subr.mxu0 0.0
      %327 = vmatpush1.xpose.msra.mxu0 0.0
      %328 = vmatprep.subr.mxu0 0.0
      %329 = vmatpush1.xpose.msra.mxu0 0.0
      %330 = vmatprep.subr.mxu0 0.0
      %331 = vmatpush1.xpose.msra.mxu0 0.0
      %332 = vmatprep.subr.mxu0 0.0
      %333 = vmatpush1.xpose.msra.mxu0 0.0
      %334 = vmatprep.subr.mxu0 0.0
      %335 = vmatpush1.xpose.msra.mxu0 0.0
      %336 = vmatprep.subr.mxu0 0.0
      %337 = vmatpush1.xpose.msra.mxu0 0.0
      %338 = vmatprep.subr.mxu0 0.0
      %339 = vmatpush1.xpose.msra.mxu0 0.0
      %340 = vmatprep.subr.mxu0 0.0
      %341 = vmatpush1.xpose.msra.mxu0 0.0
      %342 = vmatprep.subr.mxu0 0.0
      %343 = vmatpush1.xpose.msra.mxu0 0.0
      %344 = vmatprep.subr.mxu0 0.0
      %345 = vmatpush1.xpose.msra.mxu0 0.0
      %346 = vmatprep.subr.mxu0 0.0
      %347 = vmatpush1.xpose.msra.mxu0 0.0
      %348 = vmatprep.subr.mxu0 0.0
      %349 = vmatpush1.xpose.msra.mxu0 0.0
      %350 = vmatprep.subr.mxu0 0.0
      %351 = vmatpush1.xpose.msra.mxu0 0.0
      %352 = vmatprep.subr.mxu0 0.0
      %353 = vmatpush1.xpose.msra.mxu0 %v320
      %354 = vmatprep.subr.mxu0 0.0
      %355 = vmatpush2.xpose.msra.mxu0 0.0
      %356 = vmatprep.subr.mxu0 0.0
      %357 = vmatpush2.xpose.msra.mxu0 0.0
      %358 = vmatprep.subr.mxu0 0.0
      %359 = vmatpush2.xpose.msra.mxu0 0.0
      %360 = vmatprep.subr.mxu0 0.0
      %361 = vmatpush2.xpose.msra.mxu0 0.0
      %362 = vmatprep.subr.mxu0 0.0
      %363 = vmatpush2.xpose.msra.mxu0 0.0
      %364 = vmatprep.subr.mxu0 0.0
      %365 = vmatpush2.xpose.msra.mxu0 0.0
      %366 = vmatprep.subr.mxu0 0.0
      %367 = vmatpush2.xpose.msra.mxu0 0.0
      %368 = vmatprep.subr.mxu0 0.0
      %369 = vmatpush2.xpose.msra.mxu0 0.0
      %370 = vmatprep.subr.mxu0 0.0
      %371 = vmatpush2.xpose.msra.mxu0 0.0
      %372 = vmatprep.subr.mxu0 0.0
      %373 = vmatpush2.xpose.msra.mxu0 0.0
      %374 = vmatprep.subr.mxu0 0.0
      %375 = vmatpush2.xpose.msra.mxu0 0.0
      %376 = vmatprep.subr.mxu0 0.0
      %377 = vmatpush2.xpose.msra.mxu0 0.0
      %378 = vmatprep.subr.mxu0 0.0
      %379 = vmatpush2.xpose.msra.mxu0 0.0
      %380 = vmatprep.subr.mxu0 0.0
      %381 = vmatpush2.xpose.msra.mxu0 0.0
      %382 = vmatprep.subr.mxu0 0.0
      %383 = vmatpush2.xpose.msra.mxu0 0.0
      %384 = vmatprep.subr.mxu0 0.0
      %385 = vmatpush2.xpose.msra.mxu0 0.0
      %386 = vmatprep.mubr.f32.mxu0 0.0
      %387 = vmatmul.mubr.f32.gmra.mxu0 %v308
      %v388 = vpop.f32.mrf.mxu0
      %v389 = vadd.f32 0.0, %v388
      %v390 = vpop.f32.mrf.mxu0
      %391 = vmatprep.mubr.f32.mxu0 0.0
      %392 = vmatmul.mubr.f32.gmra.mxu0 %v311
      %v393 = vpop.f32.mrf.mxu0
      %v394 = vadd.f32 0.0, %v393
      %v395 = vpop.f32.mrf.mxu0
      %396 = vmatprep.mubr.f32.mxu0 0.0
      %397 = vmatmul.mubr.f32.gmra.mxu0 %v314
      %v398 = vpop.f32.mrf.mxu0
      %v399 = vadd.f32 0.0, %v398
      %v400 = vpop.f32.mrf.mxu0
      %401 = vmatprep.mubr.f32.mxu0 0.0
      %402 = vmatmul.mubr.f32.gmra.mxu0 %v317
      %v403 = vpop.f32.mrf.mxu0
      %v404 = vadd.f32 0.0, %v403
      %v405 = vpop.f32.mrf.mxu0
      %406 = vdwg.mxu0
      %vm407 = vcmask 64512
      %v408 = vsel %vm407, %v389, -inf
      %409 = vmax.xlane.f32.xlu0 %v408
      %v410 = vpop.xlane.xlu0 %409
      %v411 = vsel %vm407, %v394, -inf
      %412 = vmax.xlane.f32.xlu0 %v411
      %v413 = vpop.xlane.xlu0 %412
      %v414 = vsel %vm407, %v399, -inf
      %415 = vmax.xlane.f32.xlu0 %v414
      %v416 = vpop.xlane.xlu0 %415
      %v417 = vsel %vm407, %v404, -inf
      %418 = vmax.xlane.f32.xlu0 %v417
      %v419 = vpop.xlane.xlu0 %418
      %v420 = vsub.f32 %v389, %v410
      %v421 = vsub.f32 %v394, %v413
      %v422 = vsub.f32 %v399, %v416
      %v423 = vsub.f32 %v404, %v419
      %v424 = vmul.f32 %v420, 1.442695
      %v425 = vpow.pop %v424
      %v426 = vmul.f32 %v421, 1.442695
      %v427 = vpow.pop %v426
      %v428 = vmul.f32 %v422, 1.442695
      %v429 = vpow.pop %v428
      %v430 = vmul.f32 %v423, 1.442695
      %v431 = vpow.pop %v430
      %v432 = vsel %vm407, %v425, 0.0
      %433 = vadd.xlane.f32.xlu0 %v432
      %v434 = vpop.xlane.xlu0 %433
      %v435 = vsel %vm407, %v427, 0.0
      %436 = vadd.xlane.f32.xlu0 %v435
      %v437 = vpop.xlane.xlu0 %436
      %v438 = vsel %vm407, %v429, 0.0
      %439 = vadd.xlane.f32.xlu0 %v438
      %v440 = vpop.xlane.xlu0 %439
      %v441 = vsel %vm407, %v431, 0.0
      %442 = vadd.xlane.f32.xlu0 %v441
      %v443 = vpop.xlane.xlu0 %442
      %v444 = vrcp.pop %v434
      %v445 = vmul.f32 %v425, %v444
      %v446 = vrcp.pop %v437
      %v447 = vmul.f32 %v427, %v446
      %v448 = vrcp.pop %v440
      %v449 = vmul.f32 %v429, %v448
      %v450 = vrcp.pop %v443
      %v451 = vmul.f32 %v431, %v450
      %v452 = vmax.f32 %v408, %v411
      %v453 = vrot.slane %v452, 4
      %v454 = vmax.f32 %v452, %v453
      %v455 = vrot.slane %v454, 2
      %v456 = vmax.f32 %v454, %v455
      %v457 = vrot.slane %v456, 1
      %v458 = vmax.f32 %v456, %v457
      %v459 = vmax.f32 %v414, %v417
      %v460 = vrot.slane %v459, 4
      %v461 = vmax.f32 %v459, %v460
      %v462 = vrot.slane %v461, 2
      %v463 = vmax.f32 %v461, %v462
      %v464 = vrot.slane %v463, 1
      %v465 = vmax.f32 %v463, %v464
      %v466 = vsub.f32 %v389, %v458
      %v467 = vsub.f32 %v394, %v458
      %v468 = vsub.f32 %v399, %v465
      %v469 = vsub.f32 %v404, %v465
      %v470 = vmul.f32 %v466, 1.442695
      %v471 = vpow.pop %v470
      %v472 = vmul.f32 %v467, 1.442695
      %v473 = vpow.pop %v472
      %v474 = vmul.f32 %v468, 1.442695
      %v475 = vpow.pop %v474
      %v476 = vmul.f32 %v469, 1.442695
      %v477 = vpow.pop %v476
      %v478 = vsel %vm407, %v471, 0.0
      %v479 = vsel %vm407, %v473, 0.0
      %v480 = vadd.f32 %v478, %v479
      %v481 = vrot.slane %v480, 4
      %v482 = vadd.f32 %v480, %v481
      %v483 = vrot.slane %v482, 2
      %v484 = vadd.f32 %v482, %v483
      %v485 = vrot.slane %v484, 1
      %v486 = vadd.f32 %v484, %v485
      %v487 = vsel %vm407, %v475, 0.0
      %v488 = vsel %vm407, %v477, 0.0
      %v489 = vadd.f32 %v487, %v488
      %v490 = vrot.slane %v489, 4
      %v491 = vadd.f32 %v489, %v490
      %v492 = vrot.slane %v491, 2
      %v493 = vadd.f32 %v491, %v492
      %v494 = vrot.slane %v493, 1
      %v495 = vadd.f32 %v493, %v494
      %v496 = vrcp.pop %v486
      %v497 = vmul.f32 %v471, %v496
      %v498 = vmul.f32 %v473, %v496
      %v499 = vrcp.pop %v495
      %v500 = vmul.f32 %v475, %v499
      %v501 = vmul.f32 %v477, %v499
      %502 = vxpose.xlu0.b32.start [1/16] %v497, 128
      %503 = vxpose.xlu0.b32.cont [2/16] %v498, 128
      %504 = vxpose.xlu0.b32.cont [3/16] 0.0, 128
      %505 = vxpose.xlu0.b32.cont [4/16] 0.0, 128
      %506 = vxpose.xlu0.b32.cont [5/16] 0.0, 128
      %507 = vxpose.xlu0.b32.cont [6/16] 0.0, 128
      %508 = vxpose.xlu0.b32.cont [7/16] 0.0, 128
      %509 = vxpose.xlu0.b32.cont [8/16] 0.0, 128
      %510 = vxpose.xlu0.b32.cont [9/16] 0.0, 128
      %511 = vxpose.xlu0.b32.cont [10/16] 0.0, 128
      %512 = vxpose.xlu0.b32.cont [11/16] 0.0, 128
      %513 = vxpose.xlu0.b32.cont [12/16] 0.0, 128
      %514 = vxpose.xlu0.b32.cont [13/16] 0.0, 128
      %515 = vxpose.xlu0.b32.cont [14/16] 0.0, 128
      %516 = vxpose.xlu0.b32.cont [15/16] 0.0, 128
      %517 = vxpose.xlu0.b32.end [16/16] 0.0, 128
      %v518 = vpop.trf.xlu0
      %v519 = vpop.trf.xlu0
      %v520 = vpop.trf.xlu0
      %v521 = vpop.trf.xlu0
      %v522 = vpop.trf.xlu0
      %v523 = vpop.trf.xlu0
      %v524 = vpop.trf.xlu0
      %v525 = vpop.trf.xlu0
      %v526 = vpop.trf.xlu0
      %v527 = vpop.trf.xlu0
      %v528 = vpop.trf.xlu0
      %v529 = vpop.trf.xlu0
      %v530 = vpop.trf.xlu0
      %v531 = vpop.trf.xlu0
      %v532 = vpop.trf.xlu0
      %v533 = vpop.trf.xlu0
      %vm534 = vcmask 130048
      %v536 = vsel %vm534, %v518, 0
      %538 = vmatprep.subr.mxu0 0.0
      %539 = vmatpush1.msra.mxu0 0.0
      %540 = vmatprep.subr.mxu0 0.0
      %541 = vmatpush1.msra.mxu0 0.0
      %542 = vmatprep.subr.mxu0 0.0
      %543 = vmatpush1.msra.mxu0 0.0
      %544 = vmatprep.subr.mxu0 0.0
      %545 = vmatpush1.msra.mxu0 0.0
      %546 = vmatprep.subr.mxu0 0.0
      %547 = vmatpush1.msra.mxu0 0.0
      %548 = vmatprep.subr.mxu0 0.0
      %549 = vmatpush1.msra.mxu0 0.0
      %550 = vmatprep.subr.mxu0 0.0
      %551 = vmatpush1.msra.mxu0 0.0
      %552 = vmatprep.subr.mxu0 0.0
      %553 = vmatpush1.msra.mxu0 0.0
      %554 = vmatprep.subr.mxu0 0.0
      %555 = vmatpush1.msra.mxu0 0.0
      %556 = vmatprep.subr.mxu0 0.0
      %557 = vmatpush1.msra.mxu0 0.0
      %558 = vmatprep.subr.mxu0 0.0
      %559 = vmatpush1.msra.mxu0 0.0
      %560 = vmatprep.subr.mxu0 0.0
      %561 = vmatpush1.msra.mxu0 0.0
      %562 = vmatprep.subr.mxu0 0.0
      %563 = vmatpush1.msra.mxu0 0.0
      %564 = vmatprep.subr.mxu0 0.0
      %565 = vmatpush1.msra.mxu0 0.0
      %566 = vmatprep.subr.mxu0 0.0
      %567 = vmatpush1.msra.mxu0 %v302
      %568 = vmatprep.subr.mxu0 0.0
      %569 = vmatpush1.msra.mxu0 %v301
      %570 = vmatprep.subr.mxu0 0.0
      %571 = vmatpush2.msra.mxu0 0.0
      %572 = vmatprep.subr.mxu0 0.0
      %573 = vmatpush2.msra.mxu0 0.0
      %574 = vmatprep.subr.mxu0 0.0
      %575 = vmatpush2.msra.mxu0 0.0
      %576 = vmatprep.subr.mxu0 0.0
      %577 = vmatpush2.msra.mxu0 0.0
      %578 = vmatprep.subr.mxu0 0.0
      %579 = vmatpush2.msra.mxu0 0.0
      %580 = vmatprep.subr.mxu0 0.0
      %581 = vmatpush2.msra.mxu0 0.0
      %582 = vmatprep.subr.mxu0 0.0
      %583 = vmatpush2.msra.mxu0 0.0
      %584 = vmatprep.subr.mxu0 0.0
      %585 = vmatpush2.msra.mxu0 0.0
      %586 = vmatprep.subr.mxu0 0.0
      %587 = vmatpush2.msra.mxu0 0.0
      %588 = vmatprep.subr.mxu0 0.0
      %589 = vmatpush2.msra.mxu0 0.0
      %590 = vmatprep.subr.mxu0 0.0
      %591 = vmatpush2.msra.mxu0 0.0
      %592 = vmatprep.subr.mxu0 0.0
      %593 = vmatpush2.msra.mxu0 0.0
      %594 = vmatprep.subr.mxu0 0.0
      %595 = vmatpush2.msra.mxu0 0.0
      %596 = vmatprep.subr.mxu0 0.0
      %597 = vmatpush2.msra.mxu0 0.0
      %598 = vmatprep.subr.mxu0 0.0
      %599 = vmatpush2.msra.mxu0 0.0
      %600 = vmatprep.subr.mxu0 0.0
      %601 = vmatpush2.msra.mxu0 0.0
      %602 = vmatprep.mubr.f32.mxu0 0.0
      %603 = vmatmul.mubr.f32.gmra.mxu0 %v536
      %v604 = vpop.f32.mrf.mxu0
      %v605 = vadd.f32 0.0, %v604
      %v606 = vpop.f32.mrf.mxu0
      %607 = vdwg.mxu0
      %608 = vxpose.xlu0.b32.start [1/16] %v500, 128
      %609 = vxpose.xlu0.b32.cont [2/16] %v501, 128
      %610 = vxpose.xlu0.b32.cont [3/16] 0.0, 128
      %611 = vxpose.xlu0.b32.cont [4/16] 0.0, 128
      %612 = vxpose.xlu0.b32.cont [5/16] 0.0, 128
      %613 = vxpose.xlu0.b32.cont [6/16] 0.0, 128
      %614 = vxpose.xlu0.b32.cont [7/16] 0.0, 128
      %615 = vxpose.xlu0.b32.cont [8/16] 0.0, 128
      %616 = vxpose.xlu0.b32.cont [9/16] 0.0, 128
      %617 = vxpose.xlu0.b32.cont [10/16] 0.0, 128
      %618 = vxpose.xlu0.b32.cont [11/16] 0.0, 128
      %619 = vxpose.xlu0.b32.cont [12/16] 0.0, 128
      %620 = vxpose.xlu0.b32.cont [13/16] 0.0, 128
      %621 = vxpose.xlu0.b32.cont [14/16] 0.0, 128
      %622 = vxpose.xlu0.b32.cont [15/16] 0.0, 128
      %623 = vxpose.xlu0.b32.end [16/16] 0.0, 128
      %v624 = vpop.trf.xlu0
      %v625 = vpop.trf.xlu0
      %v626 = vpop.trf.xlu0
      %v627 = vpop.trf.xlu0
      %v628 = vpop.trf.xlu0
      %v629 = vpop.trf.xlu0
      %v630 = vpop.trf.xlu0
      %v631 = vpop.trf.xlu0
      %v632 = vpop.trf.xlu0
      %v633 = vpop.trf.xlu0
      %v634 = vpop.trf.xlu0
      %v635 = vpop.trf.xlu0
      %v636 = vpop.trf.xlu0
      %v637 = vpop.trf.xlu0
      %v638 = vpop.trf.xlu0
      %v639 = vpop.trf.xlu0
      %v641 = vsel %vm534, %v624, 0
      %643 = vmatprep.subr.mxu0 0.0
      %644 = vmatpush1.msra.mxu0 0.0
      %645 = vmatprep.subr.mxu0 0.0
      %646 = vmatpush1.msra.mxu0 0.0
      %647 = vmatprep.subr.mxu0 0.0
      %648 = vmatpush1.msra.mxu0 0.0
      %649 = vmatprep.subr.mxu0 0.0
      %650 = vmatpush1.msra.mxu0 0.0
      %651 = vmatprep.subr.mxu0 0.0
      %652 = vmatpush1.msra.mxu0 0.0
      %653 = vmatprep.subr.mxu0 0.0
      %654 = vmatpush1.msra.mxu0 0.0
      %655 = vmatprep.subr.mxu0 0.0
      %656 = vmatpush1.msra.mxu0 0.0
      %657 = vmatprep.subr.mxu0 0.0
      %658 = vmatpush1.msra.mxu0 0.0
      %659 = vmatprep.subr.mxu0 0.0
      %660 = vmatpush1.msra.mxu0 0.0
      %661 = vmatprep.subr.mxu0 0.0
      %662 = vmatpush1.msra.mxu0 0.0
      %663 = vmatprep.subr.mxu0 0.0
      %664 = vmatpush1.msra.mxu0 0.0
      %665 = vmatprep.subr.mxu0 0.0
      %666 = vmatpush1.msra.mxu0 0.0
      %667 = vmatprep.subr.mxu0 0.0
      %668 = vmatpush1.msra.mxu0 0.0
      %669 = vmatprep.subr.mxu0 0.0
      %670 = vmatpush1.msra.mxu0 0.0
      %671 = vmatprep.subr.mxu0 0.0
      %672 = vmatpush1.msra.mxu0 %v304
      %673 = vmatprep.subr.mxu0 0.0
      %674 = vmatpush1.msra.mxu0 %v303
      %675 = vmatprep.subr.mxu0 0.0
      %676 = vmatpush2.msra.mxu0 0.0
      %677 = vmatprep.subr.mxu0 0.0
      %678 = vmatpush2.msra.mxu0 0.0
      %679 = vmatprep.subr.mxu0 0.0
      %680 = vmatpush2.msra.mxu0 0.0
      %681 = vmatprep.subr.mxu0 0.0
      %682 = vmatpush2.msra.mxu0 0.0
      %683 = vmatprep.subr.mxu0 0.0
      %684 = vmatpush2.msra.mxu0 0.0
      %685 = vmatprep.subr.mxu0 0.0
      %686 = vmatpush2.msra.mxu0 0.0
      %687 = vmatprep.subr.mxu0 0.0
      %688 = vmatpush2.msra.mxu0 0.0
      %689 = vmatprep.subr.mxu0 0.0
      %690 = vmatpush2.msra.mxu0 0.0
      %691 = vmatprep.subr.mxu0 0.0
      %692 = vmatpush2.msra.mxu0 0.0
      %693 = vmatprep.subr.mxu0 0.0
      %694 = vmatpush2.msra.mxu0 0.0
      %695 = vmatprep.subr.mxu0 0.0
      %696 = vmatpush2.msra.mxu0 0.0
      %697 = vmatprep.subr.mxu0 0.0
      %698 = vmatpush2.msra.mxu0 0.0
      %699 = vmatprep.subr.mxu0 0.0
      %700 = vmatpush2.msra.mxu0 0.0
      %701 = vmatprep.subr.mxu0 0.0
      %702 = vmatpush2.msra.mxu0 0.0
      %703 = vmatprep.subr.mxu0 0.0
      %704 = vmatpush2.msra.mxu0 0.0
      %705 = vmatprep.subr.mxu0 0.0
      %706 = vmatpush2.msra.mxu0 0.0
      %707 = vmatprep.mubr.f32.mxu0 0.0
      %708 = vmatmul.mubr.f32.gmra.mxu0 %v641
      %v709 = vpop.f32.mrf.mxu0
      %v710 = vadd.f32 0.0, %v709
      %v711 = vpop.f32.mrf.mxu0
      %712 = vdwg.mxu0
      %v714 = vsel %vm407, %v445, 0
      %v717 = vsel %vm407, %v447, 0
      %v720 = vsel %vm407, %v449, 0
      %v723 = vsel %vm407, %v451, 0
      %725 = vmatprep.subr.mxu0 0.0
      %726 = vmatpush1.msra.mxu0 0.0
      %727 = vmatprep.subr.mxu0 0.0
      %728 = vmatpush1.msra.mxu0 0.0
      %729 = vmatprep.subr.mxu0 0.0
      %730 = vmatpush1.msra.mxu0 0.0
      %731 = vmatprep.subr.mxu0 0.0
      %732 = vmatpush1.msra.mxu0 0.0
      %733 = vmatprep.subr.mxu0 0.0
      %734 = vmatpush1.msra.mxu0 0.0
      %735 = vmatprep.subr.mxu0 0.0
      %736 = vmatpush1.msra.mxu0 0.0
      %737 = vmatprep.subr.mxu0 0.0
      %738 = vmatpush1.msra.mxu0 0.0
      %739 = vmatprep.subr.mxu0 0.0
      %740 = vmatpush1.msra.mxu0 0.0
      %741 = vmatprep.subr.mxu0 0.0
      %742 = vmatpush1.msra.mxu0 0.0
      %743 = vmatprep.subr.mxu0 0.0
      %744 = vmatpush1.msra.mxu0 0.0
      %745 = vmatprep.subr.mxu0 0.0
      %746 = vmatpush1.msra.mxu0 0.0
      %747 = vmatprep.subr.mxu0 0.0
      %748 = vmatpush1.msra.mxu0 0.0
      %749 = vmatprep.subr.mxu0 0.0
      %750 = vmatpush1.msra.mxu0 0.0
      %751 = vmatprep.subr.mxu0 0.0
      %752 = vmatpush1.msra.mxu0 0.0
      %753 = vmatprep.subr.mxu0 0.0
      %754 = vmatpush1.msra.mxu0 0.0
      %755 = vmatprep.subr.mxu0 0.0
      %756 = vmatpush1.msra.mxu0 %v305
      %757 = vmatprep.subr.mxu0 0.0
      %758 = vmatpush2.msra.mxu0 0.0
      %759 = vmatprep.subr.mxu0 0.0
      %760 = vmatpush2.msra.mxu0 0.0
      %761 = vmatprep.subr.mxu0 0.0
      %762 = vmatpush2.msra.mxu0 0.0
      %763 = vmatprep.subr.mxu0 0.0
      %764 = vmatpush2.msra.mxu0 0.0
      %765 = vmatprep.subr.mxu0 0.0
      %766 = vmatpush2.msra.mxu0 0.0
      %767 = vmatprep.subr.mxu0 0.0
      %768 = vmatpush2.msra.mxu0 0.0
      %769 = vmatprep.subr.mxu0 0.0
      %770 = vmatpush2.msra.mxu0 0.0
      %771 = vmatprep.subr.mxu0 0.0
      %772 = vmatpush2.msra.mxu0 0.0
      %773 = vmatprep.subr.mxu0 0.0
      %774 = vmatpush2.msra.mxu0 0.0
      %775 = vmatprep.subr.mxu0 0.0
      %776 = vmatpush2.msra.mxu0 0.0
      %777 = vmatprep.subr.mxu0 0.0
      %778 = vmatpush2.msra.mxu0 0.0
      %779 = vmatprep.subr.mxu0 0.0
      %780 = vmatpush2.msra.mxu0 0.0
      %781 = vmatprep.subr.mxu0 0.0
      %782 = vmatpush2.msra.mxu0 0.0
      %783 = vmatprep.subr.mxu0 0.0
      %784 = vmatpush2.msra.mxu0 0.0
      %785 = vmatprep.subr.mxu0 0.0
      %786 = vmatpush2.msra.mxu0 0.0
      %787 = vmatprep.subr.mxu0 0.0
      %788 = vmatpush2.msra.mxu0 0.0
      %789 = vmatprep.mubr.f32.mxu0 0.0
      %790 = vmatmul.mubr.f32.gmra.mxu0 %v714
      %v791 = vpop.f32.mrf.mxu0
      %v792 = vadd.f32 0.0, %v791
      %v793 = vpop.f32.mrf.mxu0
      %794 = vmatprep.mubr.f32.mxu0 0.0
      %795 = vmatmul.mubr.f32.gmra.mxu0 %v717
      %v796 = vpop.f32.mrf.mxu0
      %v797 = vadd.f32 0.0, %v796
      %v798 = vpop.f32.mrf.mxu0
      %799 = vmatprep.mubr.f32.mxu0 0.0
      %800 = vmatmul.mubr.f32.gmra.mxu0 %v720
      %v801 = vpop.f32.mrf.mxu0
      %v802 = vadd.f32 0.0, %v801
      %v803 = vpop.f32.mrf.mxu0
      %804 = vmatprep.mubr.f32.mxu0 0.0
      %805 = vmatmul.mubr.f32.gmra.mxu0 %v723
      %v806 = vpop.f32.mrf.mxu0
      %v807 = vadd.f32 0.0, %v806
      %v808 = vpop.f32.mrf.mxu0
      %809 = vdwg.mxu0
      %v810 = vld [vmem:[%s2] sm:$0xff]
      %v811 = vld [vmem:[%s2 + $0x8] sm:$0xff]
      %v812 = vld [vmem:[%s2 + $0x10] sm:$0xff]
      %v813 = vld [vmem:[%s2 + $0x18] sm:$0xff]
      %s814 = scalar_lea.vmem %s2, 32
      %v815 = vld [vmem:[%s814] sm:$0xff]
      %v816 = vld [vmem:[%s814 + $0x8] sm:$0xff]
      %v817 = vld [vmem:[%s814 + $0x10] sm:$0xff]
      %v818 = vld [vmem:[%s814 + $0x18] sm:$0xff]
      %s819 = scalar_lea.vmem %s2, 64
      %v820 = vld [vmem:[%s819] sm:$0xff]
      %v821 = vld [vmem:[%s819 + $0x8] sm:$0xff]
      %v822 = vld [vmem:[%s819 + $0x10] sm:$0xff]
      %v823 = vld [vmem:[%s819 + $0x18] sm:$0xff]
      %s824 = scalar_lea.vmem %s2, 96
      %v825 = vld [vmem:[%s824] sm:$0xff]
      %v826 = vld [vmem:[%s824 + $0x8] sm:$0xff]
      %v827 = vld [vmem:[%s824 + $0x10] sm:$0xff]
      %v828 = vld [vmem:[%s824 + $0x18] sm:$0xff]
      %v829 = vld [vmem:[%s3] sm:$0x1]
      %v831 = vlaneseq
      %v832 = vshrl.u32 %v831, 7
      %v833 = vsub.s32 0, %v832
      %v834 = vrot.slane %v829, %v833
      %836 = vmatprep.subr.mxu0 0.0
      %837 = vmatpush1.msra.mxu0 0.0
      %838 = vmatprep.subr.mxu0 0.0
      %839 = vmatpush1.msra.mxu0 0.0
      %840 = vmatprep.subr.mxu0 0.0
      %841 = vmatpush1.msra.mxu0 0.0
      %842 = vmatprep.subr.mxu0 0.0
      %843 = vmatpush1.msra.mxu0 0.0
      %844 = vmatprep.subr.mxu0 0.0
      %845 = vmatpush1.msra.mxu0 0.0
      %846 = vmatprep.subr.mxu0 0.0
      %847 = vmatpush1.msra.mxu0 0.0
      %848 = vmatprep.subr.mxu0 0.0
      %849 = vmatpush1.msra.mxu0 0.0
      %850 = vmatprep.subr.mxu0 0.0
      %851 = vmatpush1.msra.mxu0 0.0
      %852 = vmatprep.subr.mxu0 0.0
      %853 = vmatpush1.msra.mxu0 0.0
      %854 = vmatprep.subr.mxu0 0.0
      %855 = vmatpush1.msra.mxu0 0.0
      %856 = vmatprep.subr.mxu0 0.0
      %857 = vmatpush1.msra.mxu0 0.0
      %858 = vmatprep.subr.mxu0 0.0
      %859 = vmatpush1.msra.mxu0 0.0
      %860 = vmatprep.subr.mxu0 0.0
      %861 = vmatpush1.msra.mxu0 %v813
      %862 = vmatprep.subr.mxu0 0.0
      %863 = vmatpush1.msra.mxu0 %v812
      %864 = vmatprep.subr.mxu0 0.0
      %865 = vmatpush1.msra.mxu0 %v811
      %866 = vmatprep.subr.mxu0 0.0
      %867 = vmatpush1.msra.mxu0 %v810
      %868 = vmatprep.subr.mxu0 0.0
      %869 = vmatpush2.msra.mxu0 0.0
      %870 = vmatprep.subr.mxu0 0.0
      %871 = vmatpush2.msra.mxu0 0.0
      %872 = vmatprep.subr.mxu0 0.0
      %873 = vmatpush2.msra.mxu0 0.0
      %874 = vmatprep.subr.mxu0 0.0
      %875 = vmatpush2.msra.mxu0 0.0
      %876 = vmatprep.subr.mxu0 0.0
      %877 = vmatpush2.msra.mxu0 0.0
      %878 = vmatprep.subr.mxu0 0.0
      %879 = vmatpush2.msra.mxu0 0.0
      %880 = vmatprep.subr.mxu0 0.0
      %881 = vmatpush2.msra.mxu0 0.0
      %882 = vmatprep.subr.mxu0 0.0
      %883 = vmatpush2.msra.mxu0 0.0
      %884 = vmatprep.subr.mxu0 0.0
      %885 = vmatpush2.msra.mxu0 0.0
      %886 = vmatprep.subr.mxu0 0.0
      %887 = vmatpush2.msra.mxu0 0.0
      %888 = vmatprep.subr.mxu0 0.0
      %889 = vmatpush2.msra.mxu0 0.0
      %890 = vmatprep.subr.mxu0 0.0
      %891 = vmatpush2.msra.mxu0 0.0
      %892 = vmatprep.subr.mxu0 0.0
      %893 = vmatpush2.msra.mxu0 0.0
      %894 = vmatprep.subr.mxu0 0.0
      %895 = vmatpush2.msra.mxu0 0.0
      %896 = vmatprep.subr.mxu0 0.0
      %897 = vmatpush2.msra.mxu0 0.0
      %898 = vmatprep.subr.mxu0 0.0
      %899 = vmatpush2.msra.mxu0 0.0
      %900 = vmatprep.mubr.f32.mxu0 0.0
      %901 = vmatmul.mubr.f32.gmra.mxu0 %v320
      %v902 = vpop.f32.mrf.mxu0
      %v903 = vadd.f32 %v834, %v902
      %v904 = vpop.f32.mrf.mxu0
      %905 = vdwg.mxu0
      %v907 = vsel %vm306, %v605, 0
      %v910 = vsel %vm306, %v710, 0
      %912 = vmatprep.subr.mxu0 0.0
      %913 = vmatpush1.msra.mxu0 0.0
      %914 = vmatprep.subr.mxu0 0.0
      %915 = vmatpush1.msra.mxu0 0.0
      %916 = vmatprep.subr.mxu0 0.0
      %917 = vmatpush1.msra.mxu0 0.0
      %918 = vmatprep.subr.mxu0 0.0
      %919 = vmatpush1.msra.mxu0 0.0
      %920 = vmatprep.subr.mxu0 0.0
      %921 = vmatpush1.msra.mxu0 0.0
      %922 = vmatprep.subr.mxu0 0.0
      %923 = vmatpush1.msra.mxu0 0.0
      %924 = vmatprep.subr.mxu0 0.0
      %925 = vmatpush1.msra.mxu0 0.0
      %926 = vmatprep.subr.mxu0 0.0
      %927 = vmatpush1.msra.mxu0 0.0
      %928 = vmatprep.subr.mxu0 0.0
      %929 = vmatpush1.msra.mxu0 0.0
      %930 = vmatprep.subr.mxu0 0.0
      %931 = vmatpush1.msra.mxu0 0.0
      %932 = vmatprep.subr.mxu0 0.0
      %933 = vmatpush1.msra.mxu0 0.0
      %934 = vmatprep.subr.mxu0 0.0
      %935 = vmatpush1.msra.mxu0 0.0
      %936 = vmatprep.subr.mxu0 0.0
      %937 = vmatpush1.msra.mxu0 %v818
      %938 = vmatprep.subr.mxu0 0.0
      %939 = vmatpush1.msra.mxu0 %v817
      %940 = vmatprep.subr.mxu0 0.0
      %941 = vmatpush1.msra.mxu0 %v816
      %942 = vmatprep.subr.mxu0 0.0
      %943 = vmatpush1.msra.mxu0 %v815
      %944 = vmatprep.subr.mxu0 0.0
      %945 = vmatpush2.msra.mxu0 0.0
      %946 = vmatprep.subr.mxu0 0.0
      %947 = vmatpush2.msra.mxu0 0.0
      %948 = vmatprep.subr.mxu0 0.0
      %949 = vmatpush2.msra.mxu0 0.0
      %950 = vmatprep.subr.mxu0 0.0
      %951 = vmatpush2.msra.mxu0 0.0
      %952 = vmatprep.subr.mxu0 0.0
      %953 = vmatpush2.msra.mxu0 0.0
      %954 = vmatprep.subr.mxu0 0.0
      %955 = vmatpush2.msra.mxu0 0.0
      %956 = vmatprep.subr.mxu0 0.0
      %957 = vmatpush2.msra.mxu0 0.0
      %958 = vmatprep.subr.mxu0 0.0
      %959 = vmatpush2.msra.mxu0 0.0
      %960 = vmatprep.subr.mxu0 0.0
      %961 = vmatpush2.msra.mxu0 0.0
      %962 = vmatprep.subr.mxu0 0.0
      %963 = vmatpush2.msra.mxu0 0.0
      %964 = vmatprep.subr.mxu0 0.0
      %965 = vmatpush2.msra.mxu0 0.0
      %966 = vmatprep.subr.mxu0 0.0
      %967 = vmatpush2.msra.mxu0 0.0
      %968 = vmatprep.subr.mxu0 0.0
      %969 = vmatpush2.msra.mxu0 0.0
      %970 = vmatprep.subr.mxu0 0.0
      %971 = vmatpush2.msra.mxu0 0.0
      %972 = vmatprep.subr.mxu0 0.0
      %973 = vmatpush2.msra.mxu0 0.0
      %974 = vmatprep.subr.mxu0 0.0
      %975 = vmatpush2.msra.mxu0 0.0
      %976 = vmatprep.mubr.f32.mxu0 0.0
      %977 = vmatmul.mubr.f32.gmra.mxu0 %v907
      %v978 = vpop.f32.mrf.mxu0
      %v979 = vadd.f32 0.0, %v978
      %v980 = vpop.f32.mrf.mxu0
      %981 = vmatprep.mubr.f32.mxu0 0.0
      %982 = vmatmul.mubr.f32.gmra.mxu0 %v910
      %v983 = vpop.f32.mrf.mxu0
      %v984 = vadd.f32 0.0, %v983
      %v985 = vpop.f32.mrf.mxu0
      %986 = vdwg.mxu0
      %v987 = vadd.f32 %v903, %v979
      %v988 = vadd.f32 %v903, %v984
      %v989 = vsub.f32 %v305, %v605
      %v990 = vsub.f32 %v305, %v710
      %v991 = vand.u32 2147483647, %v989
      %v992 = vand.u32 2147483647, %v990
      %v994 = vsel %vm306, %v991, 0
      %v997 = vsel %vm306, %v992, 0
      %999 = vmatprep.subr.mxu0 0.0
      %1000 = vmatpush1.msra.mxu0 0.0
      %1001 = vmatprep.subr.mxu0 0.0
      %1002 = vmatpush1.msra.mxu0 0.0
      %1003 = vmatprep.subr.mxu0 0.0
      %1004 = vmatpush1.msra.mxu0 0.0
      %1005 = vmatprep.subr.mxu0 0.0
      %1006 = vmatpush1.msra.mxu0 0.0
      %1007 = vmatprep.subr.mxu0 0.0
      %1008 = vmatpush1.msra.mxu0 0.0
      %1009 = vmatprep.subr.mxu0 0.0
      %1010 = vmatpush1.msra.mxu0 0.0
      %1011 = vmatprep.subr.mxu0 0.0
      %1012 = vmatpush1.msra.mxu0 0.0
      %1013 = vmatprep.subr.mxu0 0.0
      %1014 = vmatpush1.msra.mxu0 0.0
      %1015 = vmatprep.subr.mxu0 0.0
      %1016 = vmatpush1.msra.mxu0 0.0
      %1017 = vmatprep.subr.mxu0 0.0
      %1018 = vmatpush1.msra.mxu0 0.0
      %1019 = vmatprep.subr.mxu0 0.0
      %1020 = vmatpush1.msra.mxu0 0.0
      %1021 = vmatprep.subr.mxu0 0.0
      %1022 = vmatpush1.msra.mxu0 0.0
      %1023 = vmatprep.subr.mxu0 0.0
      %1024 = vmatpush1.msra.mxu0 %v823
      %1025 = vmatprep.subr.mxu0 0.0
      %1026 = vmatpush1.msra.mxu0 %v822
      %1027 = vmatprep.subr.mxu0 0.0
      %1028 = vmatpush1.msra.mxu0 %v821
      %1029 = vmatprep.subr.mxu0 0.0
      %1030 = vmatpush1.msra.mxu0 %v820
      %1031 = vmatprep.subr.mxu0 0.0
      %1032 = vmatpush2.msra.mxu0 0.0
      %1033 = vmatprep.subr.mxu0 0.0
      %1034 = vmatpush2.msra.mxu0 0.0
      %1035 = vmatprep.subr.mxu0 0.0
      %1036 = vmatpush2.msra.mxu0 0.0
      %1037 = vmatprep.subr.mxu0 0.0
      %1038 = vmatpush2.msra.mxu0 0.0
      %1039 = vmatprep.subr.mxu0 0.0
      %1040 = vmatpush2.msra.mxu0 0.0
      %1041 = vmatprep.subr.mxu0 0.0
      %1042 = vmatpush2.msra.mxu0 0.0
      %1043 = vmatprep.subr.mxu0 0.0
      %1044 = vmatpush2.msra.mxu0 0.0
      %1045 = vmatprep.subr.mxu0 0.0
      %1046 = vmatpush2.msra.mxu0 0.0
      %1047 = vmatprep.subr.mxu0 0.0
      %1048 = vmatpush2.msra.mxu0 0.0
      %1049 = vmatprep.subr.mxu0 0.0
      %1050 = vmatpush2.msra.mxu0 0.0
      %1051 = vmatprep.subr.mxu0 0.0
      %1052 = vmatpush2.msra.mxu0 0.0
      %1053 = vmatprep.subr.mxu0 0.0
      %1054 = vmatpush2.msra.mxu0 0.0
      %1055 = vmatprep.subr.mxu0 0.0
      %1056 = vmatpush2.msra.mxu0 0.0
      %1057 = vmatprep.subr.mxu0 0.0
      %1058 = vmatpush2.msra.mxu0 0.0
      %1059 = vmatprep.subr.mxu0 0.0
      %1060 = vmatpush2.msra.mxu0 0.0
      %1061 = vmatprep.subr.mxu0 0.0
      %1062 = vmatpush2.msra.mxu0 0.0
      %1063 = vmatprep.mubr.f32.mxu0 0.0
      %1064 = vmatmul.mubr.f32.gmra.mxu0 %v994
      %v1065 = vpop.f32.mrf.mxu0
      %v1066 = vadd.f32 0.0, %v1065
      %v1067 = vpop.f32.mrf.mxu0
      %1068 = vmatprep.mubr.f32.mxu0 0.0
      %1069 = vmatmul.mubr.f32.gmra.mxu0 %v997
      %v1070 = vpop.f32.mrf.mxu0
      %v1071 = vadd.f32 0.0, %v1070
      %v1072 = vpop.f32.mrf.mxu0
      %1073 = vdwg.mxu0
      %v1074 = vadd.f32 %v987, %v1066
      %v1075 = vadd.f32 %v988, %v1071
      %v1076 = vmul.f32 %v305, %v605
      %v1077 = vmul.f32 %v305, %v710
      %v1079 = vsel %vm306, %v1076, 0
      %v1082 = vsel %vm306, %v1077, 0
      %1084 = vmatprep.subr.mxu0 0.0
      %1085 = vmatpush1.msra.mxu0 0.0
      %1086 = vmatprep.subr.mxu0 0.0
      %1087 = vmatpush1.msra.mxu0 0.0
      %1088 = vmatprep.subr.mxu0 0.0
      %1089 = vmatpush1.msra.mxu0 0.0
      %1090 = vmatprep.subr.mxu0 0.0
      %1091 = vmatpush1.msra.mxu0 0.0
      %1092 = vmatprep.subr.mxu0 0.0
      %1093 = vmatpush1.msra.mxu0 0.0
      %1094 = vmatprep.subr.mxu0 0.0
      %1095 = vmatpush1.msra.mxu0 0.0
      %1096 = vmatprep.subr.mxu0 0.0
      %1097 = vmatpush1.msra.mxu0 0.0
      %1098 = vmatprep.subr.mxu0 0.0
      %1099 = vmatpush1.msra.mxu0 0.0
      %1100 = vmatprep.subr.mxu0 0.0
      %1101 = vmatpush1.msra.mxu0 0.0
      %1102 = vmatprep.subr.mxu0 0.0
      %1103 = vmatpush1.msra.mxu0 0.0
      %1104 = vmatprep.subr.mxu0 0.0
      %1105 = vmatpush1.msra.mxu0 0.0
      %1106 = vmatprep.subr.mxu0 0.0
      %1107 = vmatpush1.msra.mxu0 0.0
      %1108 = vmatprep.subr.mxu0 0.0
      %1109 = vmatpush1.msra.mxu0 %v828
      %1110 = vmatprep.subr.mxu0 0.0
      %1111 = vmatpush1.msra.mxu0 %v827
      %1112 = vmatprep.subr.mxu0 0.0
      %1113 = vmatpush1.msra.mxu0 %v826
      %1114 = vmatprep.subr.mxu0 0.0
      %1115 = vmatpush1.msra.mxu0 %v825
      %1116 = vmatprep.subr.mxu0 0.0
      %1117 = vmatpush2.msra.mxu0 0.0
      %1118 = vmatprep.subr.mxu0 0.0
      %1119 = vmatpush2.msra.mxu0 0.0
      %1120 = vmatprep.subr.mxu0 0.0
      %1121 = vmatpush2.msra.mxu0 0.0
      %1122 = vmatprep.subr.mxu0 0.0
      %1123 = vmatpush2.msra.mxu0 0.0
      %1124 = vmatprep.subr.mxu0 0.0
      %1125 = vmatpush2.msra.mxu0 0.0
      %1126 = vmatprep.subr.mxu0 0.0
      %1127 = vmatpush2.msra.mxu0 0.0
      %1128 = vmatprep.subr.mxu0 0.0
      %1129 = vmatpush2.msra.mxu0 0.0
      %1130 = vmatprep.subr.mxu0 0.0
      %1131 = vmatpush2.msra.mxu0 0.0
      %1132 = vmatprep.subr.mxu0 0.0
      %1133 = vmatpush2.msra.mxu0 0.0
      %1134 = vmatprep.subr.mxu0 0.0
      %1135 = vmatpush2.msra.mxu0 0.0
      %1136 = vmatprep.subr.mxu0 0.0
      %1137 = vmatpush2.msra.mxu0 0.0
      %1138 = vmatprep.subr.mxu0 0.0
      %1139 = vmatpush2.msra.mxu0 0.0
      %1140 = vmatprep.subr.mxu0 0.0
      %1141 = vmatpush2.msra.mxu0 0.0
      %1142 = vmatprep.subr.mxu0 0.0
      %1143 = vmatpush2.msra.mxu0 0.0
      %1144 = vmatprep.subr.mxu0 0.0
      %1145 = vmatpush2.msra.mxu0 0.0
      %1146 = vmatprep.subr.mxu0 0.0
      %1147 = vmatpush2.msra.mxu0 0.0
      %1148 = vmatprep.mubr.f32.mxu0 0.0
      %1149 = vmatmul.mubr.f32.gmra.mxu0 %v1079
      %v1150 = vpop.f32.mrf.mxu0
      %v1151 = vadd.f32 0.0, %v1150
      %v1152 = vpop.f32.mrf.mxu0
      %1153 = vmatprep.mubr.f32.mxu0 0.0
      %1154 = vmatmul.mubr.f32.gmra.mxu0 %v1082
      %v1155 = vpop.f32.mrf.mxu0
      %v1156 = vadd.f32 0.0, %v1155
      %v1157 = vpop.f32.mrf.mxu0
      %1158 = vdwg.mxu0
      %v1159 = vadd.f32 %v1074, %v1151
      %v1160 = vadd.f32 %v1075, %v1156
      %v1161 = vmax.f32 %v1159, 0.0
      %v1162 = vmax.f32 %v1160, 0.0
      %v1164 = vsel %vm306, %v792, 0
      %v1167 = vsel %vm306, %v797, 0
      %v1170 = vsel %vm306, %v802, 0
      %v1173 = vsel %vm306, %v807, 0
      %1175 = vmatprep.subr.mxu0 0.0
      %1176 = vmatpush1.msra.mxu0 0.0
      %1177 = vmatprep.subr.mxu0 0.0
      %1178 = vmatpush1.msra.mxu0 0.0
      %1179 = vmatprep.subr.mxu0 0.0
      %1180 = vmatpush1.msra.mxu0 0.0
      %1181 = vmatprep.subr.mxu0 0.0
      %1182 = vmatpush1.msra.mxu0 0.0
      %1183 = vmatprep.subr.mxu0 0.0
      %1184 = vmatpush1.msra.mxu0 0.0
      %1185 = vmatprep.subr.mxu0 0.0
      %1186 = vmatpush1.msra.mxu0 0.0
      %1187 = vmatprep.subr.mxu0 0.0
      %1188 = vmatpush1.msra.mxu0 0.0
      %1189 = vmatprep.subr.mxu0 0.0
      %1190 = vmatpush1.msra.mxu0 0.0
      %1191 = vmatprep.subr.mxu0 0.0
      %1192 = vmatpush1.msra.mxu0 0.0
      %1193 = vmatprep.subr.mxu0 0.0
      %1194 = vmatpush1.msra.mxu0 0.0
      %1195 = vmatprep.subr.mxu0 0.0
      %1196 = vmatpush1.msra.mxu0 0.0
      %1197 = vmatprep.subr.mxu0 0.0
      %1198 = vmatpush1.msra.mxu0 0.0
      %1199 = vmatprep.subr.mxu0 0.0
      %1200 = vmatpush1.msra.mxu0 %v818
      %1201 = vmatprep.subr.mxu0 0.0
      %1202 = vmatpush1.msra.mxu0 %v817
      %1203 = vmatprep.subr.mxu0 0.0
      %1204 = vmatpush1.msra.mxu0 %v816
      %1205 = vmatprep.subr.mxu0 0.0
      %1206 = vmatpush1.msra.mxu0 %v815
      %1207 = vmatprep.subr.mxu0 0.0
      %1208 = vmatpush2.msra.mxu0 0.0
      %1209 = vmatprep.subr.mxu0 0.0
      %1210 = vmatpush2.msra.mxu0 0.0
      %1211 = vmatprep.subr.mxu0 0.0
      %1212 = vmatpush2.msra.mxu0 0.0
      %1213 = vmatprep.subr.mxu0 0.0
      %1214 = vmatpush2.msra.mxu0 0.0
      %1215 = vmatprep.subr.mxu0 0.0
      %1216 = vmatpush2.msra.mxu0 0.0
      %1217 = vmatprep.subr.mxu0 0.0
      %1218 = vmatpush2.msra.mxu0 0.0
      %1219 = vmatprep.subr.mxu0 0.0
      %1220 = vmatpush2.msra.mxu0 0.0
      %1221 = vmatprep.subr.mxu0 0.0
      %1222 = vmatpush2.msra.mxu0 0.0
      %1223 = vmatprep.subr.mxu0 0.0
      %1224 = vmatpush2.msra.mxu0 0.0
      %1225 = vmatprep.subr.mxu0 0.0
      %1226 = vmatpush2.msra.mxu0 0.0
      %1227 = vmatprep.subr.mxu0 0.0
      %1228 = vmatpush2.msra.mxu0 0.0
      %1229 = vmatprep.subr.mxu0 0.0
      %1230 = vmatpush2.msra.mxu0 0.0
      %1231 = vmatprep.subr.mxu0 0.0
      %1232 = vmatpush2.msra.mxu0 0.0
      %1233 = vmatprep.subr.mxu0 0.0
      %1234 = vmatpush2.msra.mxu0 0.0
      %1235 = vmatprep.subr.mxu0 0.0
      %1236 = vmatpush2.msra.mxu0 0.0
      %1237 = vmatprep.subr.mxu0 0.0
      %1238 = vmatpush2.msra.mxu0 0.0
      %1239 = vmatprep.mubr.f32.mxu0 0.0
      %1240 = vmatmul.mubr.f32.gmra.mxu0 %v1164
      %v1241 = vpop.f32.mrf.mxu0
      %v1242 = vadd.f32 0.0, %v1241
      %v1243 = vpop.f32.mrf.mxu0
      %1244 = vmatprep.mubr.f32.mxu0 0.0
      %1245 = vmatmul.mubr.f32.gmra.mxu0 %v1167
      %v1246 = vpop.f32.mrf.mxu0
      %v1247 = vadd.f32 0.0, %v1246
      %v1248 = vpop.f32.mrf.mxu0
      %1249 = vmatprep.mubr.f32.mxu0 0.0
      %1250 = vmatmul.mubr.f32.gmra.mxu0 %v1170
      %v1251 = vpop.f32.mrf.mxu0
      %v1252 = vadd.f32 0.0, %v1251
      %v1253 = vpop.f32.mrf.mxu0
      %1254 = vmatprep.mubr.f32.mxu0 0.0
      %1255 = vmatmul.mubr.f32.gmra.mxu0 %v1173
      %v1256 = vpop.f32.mrf.mxu0
      %v1257 = vadd.f32 0.0, %v1256
      %v1258 = vpop.f32.mrf.mxu0
      %1259 = vdwg.mxu0
      %1260 = vmatprep.subr.mxu0 0.0
      %1261 = vmatpush1.msra.mxu0 0.0
      %1262 = vmatprep.subr.mxu0 0.0
      %1263 = vmatpush1.msra.mxu0 0.0
      %1264 = vmatprep.subr.mxu0 0.0
      %1265 = vmatpush1.msra.mxu0 0.0
      %1266 = vmatprep.subr.mxu0 0.0
      %1267 = vmatpush1.msra.mxu0 0.0
      %1268 = vmatprep.subr.mxu0 0.0
      %1269 = vmatpush1.msra.mxu0 0.0
      %1270 = vmatprep.subr.mxu0 0.0
      %1271 = vmatpush1.msra.mxu0 0.0
      %1272 = vmatprep.subr.mxu0 0.0
      %1273 = vmatpush1.msra.mxu0 0.0
      %1274 = vmatprep.subr.mxu0 0.0
      %1275 = vmatpush1.msra.mxu0 0.0
      %1276 = vmatprep.subr.mxu0 0.0
      %1277 = vmatpush1.msra.mxu0 0.0
      %1278 = vmatprep.subr.mxu0 0.0
      %1279 = vmatpush1.msra.mxu0 0.0
      %1280 = vmatprep.subr.mxu0 0.0
      %1281 = vmatpush1.msra.mxu0 0.0
      %1282 = vmatprep.subr.mxu0 0.0
      %1283 = vmatpush1.msra.mxu0 0.0
      %1284 = vmatprep.subr.mxu0 0.0
      %1285 = vmatpush1.msra.mxu0 %v813
      %1286 = vmatprep.subr.mxu0 0.0
      %1287 = vmatpush1.msra.mxu0 %v812
      %1288 = vmatprep.subr.mxu0 0.0
      %1289 = vmatpush1.msra.mxu0 %v811
      %1290 = vmatprep.subr.mxu0 0.0
      %1291 = vmatpush1.msra.mxu0 %v810
      %1292 = vmatprep.subr.mxu0 0.0
      %1293 = vmatpush2.msra.mxu0 0.0
      %1294 = vmatprep.subr.mxu0 0.0
      %1295 = vmatpush2.msra.mxu0 0.0
      %1296 = vmatprep.subr.mxu0 0.0
      %1297 = vmatpush2.msra.mxu0 0.0
      %1298 = vmatprep.subr.mxu0 0.0
      %1299 = vmatpush2.msra.mxu0 0.0
      %1300 = vmatprep.subr.mxu0 0.0
      %1301 = vmatpush2.msra.mxu0 0.0
      %1302 = vmatprep.subr.mxu0 0.0
      %1303 = vmatpush2.msra.mxu0 0.0
      %1304 = vmatprep.subr.mxu0 0.0
      %1305 = vmatpush2.msra.mxu0 0.0
      %1306 = vmatprep.subr.mxu0 0.0
      %1307 = vmatpush2.msra.mxu0 0.0
      %1308 = vmatprep.subr.mxu0 0.0
      %1309 = vmatpush2.msra.mxu0 0.0
      %1310 = vmatprep.subr.mxu0 0.0
      %1311 = vmatpush2.msra.mxu0 0.0
      %1312 = vmatprep.subr.mxu0 0.0
      %1313 = vmatpush2.msra.mxu0 0.0
      %1314 = vmatprep.subr.mxu0 0.0
      %1315 = vmatpush2.msra.mxu0 0.0
      %1316 = vmatprep.subr.mxu0 0.0
      %1317 = vmatpush2.msra.mxu0 0.0
      %1318 = vmatprep.subr.mxu0 0.0
      %1319 = vmatpush2.msra.mxu0 0.0
      %1320 = vmatprep.subr.mxu0 0.0
      %1321 = vmatpush2.msra.mxu0 0.0
      %1322 = vmatprep.subr.mxu0 0.0
      %1323 = vmatpush2.msra.mxu0 0.0
      %1324 = vmatprep.mubr.f32.mxu0 0.0
      %1325 = vmatmul.mubr.f32.gmra.mxu0 %v308
      %v1326 = vpop.f32.mrf.mxu0
      %v1327 = vadd.f32 %v1242, %v1326
      %v1328 = vpop.f32.mrf.mxu0
      %1329 = vmatprep.mubr.f32.mxu0 0.0
      %1330 = vmatmul.mubr.f32.gmra.mxu0 %v311
      %v1331 = vpop.f32.mrf.mxu0
      %v1332 = vadd.f32 %v1247, %v1331
      %v1333 = vpop.f32.mrf.mxu0
      %1334 = vmatprep.mubr.f32.mxu0 0.0
      %1335 = vmatmul.mubr.f32.gmra.mxu0 %v314
      %v1336 = vpop.f32.mrf.mxu0
      %v1337 = vadd.f32 %v1252, %v1336
      %v1338 = vpop.f32.mrf.mxu0
      %1339 = vmatprep.mubr.f32.mxu0 0.0
      %1340 = vmatmul.mubr.f32.gmra.mxu0 %v317
      %v1341 = vpop.f32.mrf.mxu0
      %v1342 = vadd.f32 %v1257, %v1341
      %v1343 = vpop.f32.mrf.mxu0
      %1344 = vdwg.mxu0
      %v1345 = vsub.f32 %v301, %v792
      %v1346 = vsub.f32 %v302, %v797
      %v1347 = vsub.f32 %v303, %v802
      %v1348 = vsub.f32 %v304, %v807
      %v1349 = vand.u32 2147483647, %v1345
      %v1350 = vand.u32 2147483647, %v1346
      %v1351 = vand.u32 2147483647, %v1347
      %v1352 = vand.u32 2147483647, %v1348
      %v1354 = vsel %vm306, %v1349, 0
      %v1357 = vsel %vm306, %v1350, 0
      %v1360 = vsel %vm306, %v1351, 0
      %v1363 = vsel %vm306, %v1352, 0
      %1365 = vmatprep.subr.mxu0 0.0
      %1366 = vmatpush1.msra.mxu0 0.0
      %1367 = vmatprep.subr.mxu0 0.0
      %1368 = vmatpush1.msra.mxu0 0.0
      %1369 = vmatprep.subr.mxu0 0.0
      %1370 = vmatpush1.msra.mxu0 0.0
      %1371 = vmatprep.subr.mxu0 0.0
      %1372 = vmatpush1.msra.mxu0 0.0
      %1373 = vmatprep.subr.mxu0 0.0
      %1374 = vmatpush1.msra.mxu0 0.0
      %1375 = vmatprep.subr.mxu0 0.0
      %1376 = vmatpush1.msra.mxu0 0.0
      %1377 = vmatprep.subr.mxu0 0.0
      %1378 = vmatpush1.msra.mxu0 0.0
      %1379 = vmatprep.subr.mxu0 0.0
      %1380 = vmatpush1.msra.mxu0 0.0
      %1381 = vmatprep.subr.mxu0 0.0
      %1382 = vmatpush1.msra.mxu0 0.0
      %1383 = vmatprep.subr.mxu0 0.0
      %1384 = vmatpush1.msra.mxu0 0.0
      %1385 = vmatprep.subr.mxu0 0.0
      %1386 = vmatpush1.msra.mxu0 0.0
      %1387 = vmatprep.subr.mxu0 0.0
      %1388 = vmatpush1.msra.mxu0 0.0
      %1389 = vmatprep.subr.mxu0 0.0
      %1390 = vmatpush1.msra.mxu0 %v823
      %1391 = vmatprep.subr.mxu0 0.0
      %1392 = vmatpush1.msra.mxu0 %v822
      %1393 = vmatprep.subr.mxu0 0.0
      %1394 = vmatpush1.msra.mxu0 %v821
      %1395 = vmatprep.subr.mxu0 0.0
      %1396 = vmatpush1.msra.mxu0 %v820
      %1397 = vmatprep.subr.mxu0 0.0
      %1398 = vmatpush2.msra.mxu0 0.0
      %1399 = vmatprep.subr.mxu0 0.0
      %1400 = vmatpush2.msra.mxu0 0.0
      %1401 = vmatprep.subr.mxu0 0.0
      %1402 = vmatpush2.msra.mxu0 0.0
      %1403 = vmatprep.subr.mxu0 0.0
      %1404 = vmatpush2.msra.mxu0 0.0
      %1405 = vmatprep.subr.mxu0 0.0
      %1406 = vmatpush2.msra.mxu0 0.0
      %1407 = vmatprep.subr.mxu0 0.0
      %1408 = vmatpush2.msra.mxu0 0.0
      %1409 = vmatprep.subr.mxu0 0.0
      %1410 = vmatpush2.msra.mxu0 0.0
      %1411 = vmatprep.subr.mxu0 0.0
      %1412 = vmatpush2.msra.mxu0 0.0
      %1413 = vmatprep.subr.mxu0 0.0
      %1414 = vmatpush2.msra.mxu0 0.0
      %1415 = vmatprep.subr.mxu0 0.0
      %1416 = vmatpush2.msra.mxu0 0.0
      %1417 = vmatprep.subr.mxu0 0.0
      %1418 = vmatpush2.msra.mxu0 0.0
      %1419 = vmatprep.subr.mxu0 0.0
      %1420 = vmatpush2.msra.mxu0 0.0
      %1421 = vmatprep.subr.mxu0 0.0
      %1422 = vmatpush2.msra.mxu0 0.0
      %1423 = vmatprep.subr.mxu0 0.0
      %1424 = vmatpush2.msra.mxu0 0.0
      %1425 = vmatprep.subr.mxu0 0.0
      %1426 = vmatpush2.msra.mxu0 0.0
      %1427 = vmatprep.subr.mxu0 0.0
      %1428 = vmatpush2.msra.mxu0 0.0
      %1429 = vmatprep.mubr.f32.mxu0 0.0
      %1430 = vmatmul.mubr.f32.gmra.mxu0 %v1354
      %v1431 = vpop.f32.mrf.mxu0
      %v1432 = vadd.f32 0.0, %v1431
      %v1433 = vpop.f32.mrf.mxu0
      %1434 = vmatprep.mubr.f32.mxu0 0.0
      %1435 = vmatmul.mubr.f32.gmra.mxu0 %v1357
      %v1436 = vpop.f32.mrf.mxu0
      %v1437 = vadd.f32 0.0, %v1436
      %v1438 = vpop.f32.mrf.mxu0
      %1439 = vmatprep.mubr.f32.mxu0 0.0
      %1440 = vmatmul.mubr.f32.gmra.mxu0 %v1360
      %v1441 = vpop.f32.mrf.mxu0
      %v1442 = vadd.f32 0.0, %v1441
      %v1443 = vpop.f32.mrf.mxu0
      %1444 = vmatprep.mubr.f32.mxu0 0.0
      %1445 = vmatmul.mubr.f32.gmra.mxu0 %v1363
      %v1446 = vpop.f32.mrf.mxu0
      %v1447 = vadd.f32 0.0, %v1446
      %v1448 = vpop.f32.mrf.mxu0
      %1449 = vdwg.mxu0
      %v1450 = vadd.f32 %v1327, %v1432
      %v1451 = vadd.f32 %v1332, %v1437
      %v1452 = vadd.f32 %v1337, %v1442
      %v1453 = vadd.f32 %v1342, %v1447
      %v1454 = vmul.f32 %v301, %v792
      %v1455 = vmul.f32 %v302, %v797
      %v1456 = vmul.f32 %v303, %v802
      %v1457 = vmul.f32 %v304, %v807
      %v1459 = vsel %vm306, %v1454, 0
      %v1462 = vsel %vm306, %v1455, 0
      %v1465 = vsel %vm306, %v1456, 0
      %v1468 = vsel %vm306, %v1457, 0
      %1470 = vmatprep.subr.mxu0 0.0
      %1471 = vmatpush1.msra.mxu0 0.0
      %1472 = vmatprep.subr.mxu0 0.0
      %1473 = vmatpush1.msra.mxu0 0.0
      %1474 = vmatprep.subr.mxu0 0.0
      %1475 = vmatpush1.msra.mxu0 0.0
      %1476 = vmatprep.subr.mxu0 0.0
      %1477 = vmatpush1.msra.mxu0 0.0
      %1478 = vmatprep.subr.mxu0 0.0
      %1479 = vmatpush1.msra.mxu0 0.0
      %1480 = vmatprep.subr.mxu0 0.0
      %1481 = vmatpush1.msra.mxu0 0.0
      %1482 = vmatprep.subr.mxu0 0.0
      %1483 = vmatpush1.msra.mxu0 0.0
      %1484 = vmatprep.subr.mxu0 0.0
      %1485 = vmatpush1.msra.mxu0 0.0
      %1486 = vmatprep.subr.mxu0 0.0
      %1487 = vmatpush1.msra.mxu0 0.0
      %1488 = vmatprep.subr.mxu0 0.0
      %1489 = vmatpush1.msra.mxu0 0.0
      %1490 = vmatprep.subr.mxu0 0.0
      %1491 = vmatpush1.msra.mxu0 0.0
      %1492 = vmatprep.subr.mxu0 0.0
      %1493 = vmatpush1.msra.mxu0 0.0
      %1494 = vmatprep.subr.mxu0 0.0
      %1495 = vmatpush1.msra.mxu0 %v828
      %1496 = vmatprep.subr.mxu0 0.0
      %1497 = vmatpush1.msra.mxu0 %v827
      %1498 = vmatprep.subr.mxu0 0.0
      %1499 = vmatpush1.msra.mxu0 %v826
      %1500 = vmatprep.subr.mxu0 0.0
      %1501 = vmatpush1.msra.mxu0 %v825
      %1502 = vmatprep.subr.mxu0 0.0
      %1503 = vmatpush2.msra.mxu0 0.0
      %1504 = vmatprep.subr.mxu0 0.0
      %1505 = vmatpush2.msra.mxu0 0.0
      %1506 = vmatprep.subr.mxu0 0.0
      %1507 = vmatpush2.msra.mxu0 0.0
      %1508 = vmatprep.subr.mxu0 0.0
      %1509 = vmatpush2.msra.mxu0 0.0
      %1510 = vmatprep.subr.mxu0 0.0
      %1511 = vmatpush2.msra.mxu0 0.0
      %1512 = vmatprep.subr.mxu0 0.0
      %1513 = vmatpush2.msra.mxu0 0.0
      %1514 = vmatprep.subr.mxu0 0.0
      %1515 = vmatpush2.msra.mxu0 0.0
      %1516 = vmatprep.subr.mxu0 0.0
      %1517 = vmatpush2.msra.mxu0 0.0
      %1518 = vmatprep.subr.mxu0 0.0
      %1519 = vmatpush2.msra.mxu0 0.0
      %1520 = vmatprep.subr.mxu0 0.0
      %1521 = vmatpush2.msra.mxu0 0.0
      %1522 = vmatprep.subr.mxu0 0.0
      %1523 = vmatpush2.msra.mxu0 0.0
      %1524 = vmatprep.subr.mxu0 0.0
      %1525 = vmatpush2.msra.mxu0 0.0
      %1526 = vmatprep.subr.mxu0 0.0
      %1527 = vmatpush2.msra.mxu0 0.0
      %1528 = vmatprep.subr.mxu0 0.0
      %1529 = vmatpush2.msra.mxu0 0.0
      %1530 = vmatprep.subr.mxu0 0.0
      %1531 = vmatpush2.msra.mxu0 0.0
      %1532 = vmatprep.subr.mxu0 0.0
      %1533 = vmatpush2.msra.mxu0 0.0
      %1534 = vmatprep.mubr.f32.mxu0 0.0
      %1535 = vmatmul.mubr.f32.gmra.mxu0 %v1459
      %v1536 = vpop.f32.mrf.mxu0
      %v1537 = vadd.f32 0.0, %v1536
      %v1538 = vpop.f32.mrf.mxu0
      %1539 = vmatprep.mubr.f32.mxu0 0.0
      %1540 = vmatmul.mubr.f32.gmra.mxu0 %v1462
      %v1541 = vpop.f32.mrf.mxu0
      %v1542 = vadd.f32 0.0, %v1541
      %v1543 = vpop.f32.mrf.mxu0
      %1544 = vmatprep.mubr.f32.mxu0 0.0
      %1545 = vmatmul.mubr.f32.gmra.mxu0 %v1465
      %v1546 = vpop.f32.mrf.mxu0
      %v1547 = vadd.f32 0.0, %v1546
      %v1548 = vpop.f32.mrf.mxu0
      %1549 = vmatprep.mubr.f32.mxu0 0.0
      %1550 = vmatmul.mubr.f32.gmra.mxu0 %v1468
      %v1551 = vpop.f32.mrf.mxu0
      %v1552 = vadd.f32 0.0, %v1551
      %v1553 = vpop.f32.mrf.mxu0
      %1554 = vdwg.mxu0
      %v1555 = vadd.f32 %v1450, %v1537
      %v1556 = vadd.f32 %v1451, %v1542
      %v1557 = vadd.f32 %v1452, %v1547
      %v1558 = vadd.f32 %v1453, %v1552
      %v1559 = vadd.f32 %v1555, %v834
      %v1560 = vadd.f32 %v1556, %v834
      %v1561 = vadd.f32 %v1557, %v834
      %v1562 = vadd.f32 %v1558, %v834
      %v1563 = vmax.f32 %v1559, 0.0
      %v1564 = vmax.f32 %v1560, 0.0
      %v1565 = vmax.f32 %v1561, 0.0
      %v1566 = vmax.f32 %v1562, 0.0
      %v1567 = vcombine.low %v1161, %v1563
      %v1568 = vcombine.high %v1161, %v1563
      %v1570 = vunpack.c.l.s4 1983009808
      %v1571 = vunpack.c.0.s8 %v1570
      %v1572 = vlaneseq
      %v1573 = vshrl.u32 %v1572, 7
      %v1574 = vsub.s32 %v1571, %v1573
      %v1575 = vrot.slane %v1567, %v1574
      %v1577 = vunpack.c.l.s4 1983009808
      %v1578 = vunpack.c.0.s8 %v1577
      %v1579 = vlaneseq
      %v1580 = vshrl.u32 %v1579, 7
      %v1581 = vsub.s32 %v1578, %v1580
      %v1582 = vrot.slane %v1568, %v1581
      %v1583 = vcombine.low %v1162, %v1564
      %v1584 = vcombine.high %v1162, %v1564
      %v1586 = vunpack.c.l.s4 1983009808
      %v1587 = vunpack.c.0.s8 %v1586
      %v1588 = vlaneseq
      %v1589 = vshrl.u32 %v1588, 7
      %v1590 = vsub.s32 %v1587, %v1589
      %v1591 = vrot.slane %v1583, %v1590
      %v1593 = vunpack.c.l.s4 1983009808
      %v1594 = vunpack.c.0.s8 %v1593
      %v1595 = vlaneseq
      %v1596 = vshrl.u32 %v1595, 7
      %v1597 = vsub.s32 %v1594, %v1596
      %v1598 = vrot.slane %v1584, %v1597
      %v1599 = vcombine.high %v1565, 0.0
      %v1601 = vunpack.c.l.s4 1983009808
      %v1602 = vunpack.c.0.s8 %v1601
      %v1603 = vlaneseq
      %v1604 = vshrl.u32 %v1603, 7
      %v1605 = vsub.s32 %v1602, %v1604
      %v1606 = vrot.slane %v1565, %v1605
      %v1608 = vunpack.c.l.s4 1983009808
      %v1609 = vunpack.c.0.s8 %v1608
      %v1610 = vlaneseq
      %v1611 = vshrl.u32 %v1610, 7
      %v1612 = vsub.s32 %v1609, %v1611
      %v1613 = vrot.slane %v1599, %v1612
      %v1614 = vcombine.high %v1566, 0.0
      %v1616 = vunpack.c.l.s4 1983009808
      %v1617 = vunpack.c.0.s8 %v1616
      %v1618 = vlaneseq
      %v1619 = vshrl.u32 %v1618, 7
      %v1620 = vsub.s32 %v1617, %v1619
      %v1621 = vrot.slane %v1566, %v1620
      %v1623 = vunpack.c.l.s4 1983009808
      %v1624 = vunpack.c.0.s8 %v1623
      %v1625 = vlaneseq
      %v1626 = vshrl.u32 %v1625, 7
      %v1627 = vsub.s32 %v1624, %v1626
      %v1628 = vrot.slane %v1614, %v1627
      %v1629 = vcombine.low %v1575, %v1591
      %v1630 = vcombine.high %v1575, %v1591
      %v1632 = vunpack.c.l.s4 1934713408
      %v1633 = vunpack.c.0.s8 %v1632
      %v1634 = vlaneseq
      %v1635 = vshrl.u32 %v1634, 7
      %v1636 = vsub.s32 %v1633, %v1635
      %v1637 = vrot.slane %v1629, %v1636
      %v1639 = vunpack.c.l.s4 1934713408
      %v1640 = vunpack.c.0.s8 %v1639
      %v1641 = vlaneseq
      %v1642 = vshrl.u32 %v1641, 7
      %v1643 = vsub.s32 %v1640, %v1642
      %v1644 = vrot.slane %v1630, %v1643
      %v1645 = vcombine.low %v1582, %v1598
      %v1646 = vcombine.high %v1582, %v1598
      %v1648 = vunpack.c.l.s4 1934713408
      %v1649 = vunpack.c.0.s8 %v1648
      %v1650 = vlaneseq
      %v1651 = vshrl.u32 %v1650, 7
      %v1652 = vsub.s32 %v1649, %v1651
      %v1653 = vrot.slane %v1645, %v1652
      %v1655 = vunpack.c.l.s4 1934713408
      %v1656 = vunpack.c.0.s8 %v1655
      %v1657 = vlaneseq
      %v1658 = vshrl.u32 %v1657, 7
      %v1659 = vsub.s32 %v1656, %v1658
      %v1660 = vrot.slane %v1646, %v1659
      %v1661 = vcombine.low %v1606, %v1621
      %v1662 = vcombine.high %v1606, %v1621
      %v1664 = vunpack.c.l.s4 1934713408
      %v1665 = vunpack.c.0.s8 %v1664
      %v1666 = vlaneseq
      %v1667 = vshrl.u32 %v1666, 7
      %v1668 = vsub.s32 %v1665, %v1667
      %v1669 = vrot.slane %v1661, %v1668
      %v1671 = vunpack.c.l.s4 1934713408
      %v1672 = vunpack.c.0.s8 %v1671
      %v1673 = vlaneseq
      %v1674 = vshrl.u32 %v1673, 7
      %v1675 = vsub.s32 %v1672, %v1674
      %v1676 = vrot.slane %v1662, %v1675
      %v1677 = vcombine.low %v1613, %v1628
      %v1678 = vcombine.high %v1613, %v1628
      %v1680 = vunpack.c.l.s4 1934713408
      %v1681 = vunpack.c.0.s8 %v1680
      %v1682 = vlaneseq
      %v1683 = vshrl.u32 %v1682, 7
      %v1684 = vsub.s32 %v1681, %v1683
      %v1685 = vrot.slane %v1677, %v1684
      %v1687 = vunpack.c.l.s4 1934713408
      %v1688 = vunpack.c.0.s8 %v1687
      %v1689 = vlaneseq
      %v1690 = vshrl.u32 %v1689, 7
      %v1691 = vsub.s32 %v1688, %v1690
      %v1692 = vrot.slane %v1678, %v1691
      %v1693 = vcombine.low %v1637, %v1669
      %v1694 = vcombine.high %v1637, %v1669
      %v1695 = vcombine.low %v1644, %v1676
      %v1696 = vcombine.high %v1644, %v1676
      %v1697 = vcombine.low %v1653, %v1685
      %v1698 = vcombine.high %v1653, %v1685
      %v1699 = vcombine.low %v1660, %v1692
      %v1700 = vcombine.high %v1660, %v1692
      %v1701 = vld [vmem:[%s4] sm:$0xff]
      %v1702 = vld [vmem:[%s4 + $0x8] sm:$0xff]
      %v1703 = vld [vmem:[%s4 + $0x10] sm:$0xff]
      %v1704 = vld [vmem:[%s4 + $0x18] sm:$0xff]
      %v1705 = vld [vmem:[%s4 + $0x20] sm:$0xff]
      %v1706 = vld [vmem:[%s4 + $0x28] sm:$0xff]
      %v1707 = vld [vmem:[%s4 + $0x30] sm:$0xff]
      %v1708 = vld [vmem:[%s4 + $0x38] sm:$0xff]
      %v1709 = vld [vmem:[%s5] sm:$0x3]
      %v1718 = vcombine.high %v1693, %v1693
      %v1720 = vunpack.c.l.s4 1983009808
      %v1721 = vunpack.c.0.s8 %v1720
      %v1722 = vlaneseq
      %v1723 = vshrl.u32 %v1722, 7
      %v1724 = vsub.s32 %v1721, %v1723
      %v1725 = vrot.slane %v1693, %v1724
      %v1727 = vunpack.c.l.s4 1983009808
      %v1728 = vunpack.c.0.s8 %v1727
      %v1729 = vlaneseq
      %v1730 = vshrl.u32 %v1729, 7
      %v1731 = vsub.s32 %v1728, %v1730
      %v1732 = vrot.slane %v1718, %v1731
      %v1733 = vcombine.high %v1725, %v1725
      %v1734 = vcombine.high %v1694, %v1694
      %v1736 = vunpack.c.l.s4 1983009808
      %v1737 = vunpack.c.0.s8 %v1736
      %v1738 = vlaneseq
      %v1739 = vshrl.u32 %v1738, 7
      %v1740 = vsub.s32 %v1737, %v1739
      %v1741 = vrot.slane %v1694, %v1740
      %v1743 = vunpack.c.l.s4 1983009808
      %v1744 = vunpack.c.0.s8 %v1743
      %v1745 = vlaneseq
      %v1746 = vshrl.u32 %v1745, 7
      %v1747 = vsub.s32 %v1744, %v1746
      %v1748 = vrot.slane %v1734, %v1747
      %v1749 = vcombine.high %v1741, %v1741
      %v1750 = vcombine.high %v1695, %v1695
      %v1752 = vunpack.c.l.s4 1983009808
      %v1753 = vunpack.c.0.s8 %v1752
      %v1754 = vlaneseq
      %v1755 = vshrl.u32 %v1754, 7
      %v1756 = vsub.s32 %v1753, %v1755
      %v1757 = vrot.slane %v1695, %v1756
      %v1759 = vunpack.c.l.s4 1983009808
      %v1760 = vunpack.c.0.s8 %v1759
      %v1761 = vlaneseq
      %v1762 = vshrl.u32 %v1761, 7
      %v1763 = vsub.s32 %v1760, %v1762
      %v1764 = vrot.slane %v1750, %v1763
      %v1765 = vcombine.high %v1757, %v1757
      %v1766 = vcombine.high %v1696, %v1696
      %v1768 = vunpack.c.l.s4 1983009808
      %v1769 = vunpack.c.0.s8 %v1768
      %v1770 = vlaneseq
      %v1771 = vshrl.u32 %v1770, 7
      %v1772 = vsub.s32 %v1769, %v1771
      %v1773 = vrot.slane %v1696, %v1772
      %v1775 = vunpack.c.l.s4 1983009808
      %v1776 = vunpack.c.0.s8 %v1775
      %v1777 = vlaneseq
      %v1778 = vshrl.u32 %v1777, 7
      %v1779 = vsub.s32 %v1776, %v1778
      %v1780 = vrot.slane %v1766, %v1779
      %v1781 = vcombine.high %v1773, %v1773
      %v1782 = vcombine.high %v1697, %v1697
      %v1784 = vunpack.c.l.s4 1983009808
      %v1785 = vunpack.c.0.s8 %v1784
      %v1786 = vlaneseq
      %v1787 = vshrl.u32 %v1786, 7
      %v1788 = vsub.s32 %v1785, %v1787
      %v1789 = vrot.slane %v1697, %v1788
      %v1791 = vunpack.c.l.s4 1983009808
      %v1792 = vunpack.c.0.s8 %v1791
      %v1793 = vlaneseq
      %v1794 = vshrl.u32 %v1793, 7
      %v1795 = vsub.s32 %v1792, %v1794
      %v1796 = vrot.slane %v1782, %v1795
      %v1797 = vcombine.high %v1789, %v1789
      %v1798 = vcombine.high %v1698, %v1698
      %v1800 = vunpack.c.l.s4 1983009808
      %v1801 = vunpack.c.0.s8 %v1800
      %v1802 = vlaneseq
      %v1803 = vshrl.u32 %v1802, 7
      %v1804 = vsub.s32 %v1801, %v1803
      %v1805 = vrot.slane %v1698, %v1804
      %v1807 = vunpack.c.l.s4 1983009808
      %v1808 = vunpack.c.0.s8 %v1807
      %v1809 = vlaneseq
      %v1810 = vshrl.u32 %v1809, 7
      %v1811 = vsub.s32 %v1808, %v1810
      %v1812 = vrot.slane %v1798, %v1811
      %v1813 = vcombine.high %v1805, %v1805
      %v1814 = vcombine.high %v1699, %v1699
      %v1816 = vunpack.c.l.s4 1983009808
      %v1817 = vunpack.c.0.s8 %v1816
      %v1818 = vlaneseq
      %v1819 = vshrl.u32 %v1818, 7
      %v1820 = vsub.s32 %v1817, %v1819
      %v1821 = vrot.slane %v1699, %v1820
      %v1823 = vunpack.c.l.s4 1983009808
      %v1824 = vunpack.c.0.s8 %v1823
      %v1825 = vlaneseq
      %v1826 = vshrl.u32 %v1825, 7
      %v1827 = vsub.s32 %v1824, %v1826
      %v1828 = vrot.slane %v1814, %v1827
      %v1829 = vcombine.high %v1821, %v1821
      %v1830 = vcombine.high %v1700, %v1700
      %v1832 = vunpack.c.l.s4 1983009808
      %v1833 = vunpack.c.0.s8 %v1832
      %v1834 = vlaneseq
      %v1835 = vshrl.u32 %v1834, 7
      %v1836 = vsub.s32 %v1833, %v1835
      %v1837 = vrot.slane %v1700, %v1836
      %v1839 = vunpack.c.l.s4 1983009808
      %v1840 = vunpack.c.0.s8 %v1839
      %v1841 = vlaneseq
      %v1842 = vshrl.u32 %v1841, 7
      %v1843 = vsub.s32 %v1840, %v1842
      %v1844 = vrot.slane %v1830, %v1843
      %v1845 = vcombine.high %v1837, %v1837
      %v1847 = vlaneseq
      %v1848 = vshrl.u32 %v1847, 7
      %v1849 = vsub.s32 0, %v1848
      %v1850 = vrot.slane %v1709, %v1849
      %v1851 = vlaneseq
      %v1852 = vshrl.u32 %v1851, 7
      %v1853 = vsub.s32 1, %v1852
      %v1854 = vrot.slane %v1709, %v1853
      %v1857 = vcombine.low %v1725, %v1733
      %v1858 = vcombine.low %v1732, %v1741
      %v1860 = vunpack.c.l.s4 1983009808
      %v1861 = vunpack.c.0.s8 %v1860
      %v1862 = vlaneseq
      %v1863 = vshrl.u32 %v1862, 7
      %v1864 = vsub.s32 %v1861, %v1863
      %v1865 = vrot.slane %v1857, %v1864
      %v1867 = vunpack.c.l.s4 1983009808
      %v1868 = vunpack.c.0.s8 %v1867
      %v1869 = vlaneseq
      %v1870 = vshrl.u32 %v1869, 7
      %v1871 = vsub.s32 %v1868, %v1870
      %v1872 = vrot.slane %v1858, %v1871
      %v1873 = vcombine.low %v1865, %v1872
      %v1874 = vcombine.low %v1749, %v1748
      %v1875 = vcombine.low %v1757, %v1765
      %v1877 = vunpack.c.l.s4 1983009808
      %v1878 = vunpack.c.0.s8 %v1877
      %v1879 = vlaneseq
      %v1880 = vshrl.u32 %v1879, 7
      %v1881 = vsub.s32 %v1878, %v1880
      %v1882 = vrot.slane %v1874, %v1881
      %v1884 = vunpack.c.l.s4 1983009808
      %v1885 = vunpack.c.0.s8 %v1884
      %v1886 = vlaneseq
      %v1887 = vshrl.u32 %v1886, 7
      %v1888 = vsub.s32 %v1885, %v1887
      %v1889 = vrot.slane %v1875, %v1888
      %v1890 = vcombine.low %v1882, %v1889
      %v1891 = vcombine.low %v1764, %v1773
      %v1892 = vcombine.low %v1781, %v1780
      %v1894 = vunpack.c.l.s4 1983009808
      %v1895 = vunpack.c.0.s8 %v1894
      %v1896 = vlaneseq
      %v1897 = vshrl.u32 %v1896, 7
      %v1898 = vsub.s32 %v1895, %v1897
      %v1899 = vrot.slane %v1891, %v1898
      %v1901 = vunpack.c.l.s4 1983009808
      %v1902 = vunpack.c.0.s8 %v1901
      %v1903 = vlaneseq
      %v1904 = vshrl.u32 %v1903, 7
      %v1905 = vsub.s32 %v1902, %v1904
      %v1906 = vrot.slane %v1892, %v1905
      %v1907 = vcombine.low %v1899, %v1906
      %v1908 = vcombine.low %v1789, %v1797
      %v1909 = vcombine.low %v1796, %v1805
      %v1911 = vunpack.c.l.s4 1983009808
      %v1912 = vunpack.c.0.s8 %v1911
      %v1913 = vlaneseq
      %v1914 = vshrl.u32 %v1913, 7
      %v1915 = vsub.s32 %v1912, %v1914
      %v1916 = vrot.slane %v1908, %v1915
      %v1918 = vunpack.c.l.s4 1983009808
      %v1919 = vunpack.c.0.s8 %v1918
      %v1920 = vlaneseq
      %v1921 = vshrl.u32 %v1920, 7
      %v1922 = vsub.s32 %v1919, %v1921
      %v1923 = vrot.slane %v1909, %v1922
      %v1924 = vcombine.low %v1916, %v1923
      %v1925 = vcombine.low %v1813, %v1812
      %v1926 = vcombine.low %v1821, %v1829
      %v1928 = vunpack.c.l.s4 1983009808
      %v1929 = vunpack.c.0.s8 %v1928
      %v1930 = vlaneseq
      %v1931 = vshrl.u32 %v1930, 7
      %v1932 = vsub.s32 %v1929, %v1931
      %v1933 = vrot.slane %v1925, %v1932
      %v1935 = vunpack.c.l.s4 1983009808
      %v1936 = vunpack.c.0.s8 %v1935
      %v1937 = vlaneseq
      %v1938 = vshrl.u32 %v1937, 7
      %v1939 = vsub.s32 %v1936, %v1938
      %v1940 = vrot.slane %v1926, %v1939
      %v1941 = vcombine.low %v1933, %v1940
      %v1942 = vcombine.low %v1828, %v1837
      %v1943 = vcombine.low %v1845, %v1844
      %v1945 = vunpack.c.l.s4 1983009808
      %v1946 = vunpack.c.0.s8 %v1945
      %v1947 = vlaneseq
      %v1948 = vshrl.u32 %v1947, 7
      %v1949 = vsub.s32 %v1946, %v1948
      %v1950 = vrot.slane %v1942, %v1949
      %v1952 = vunpack.c.l.s4 1983009808
      %v1953 = vunpack.c.0.s8 %v1952
      %v1954 = vlaneseq
      %v1955 = vshrl.u32 %v1954, 7
      %v1956 = vsub.s32 %v1953, %v1955
      %v1957 = vrot.slane %v1943, %v1956
      %v1958 = vcombine.low %v1950, %v1957
      %v1959 = vsel %vm306, %v1873, 0
      %v1961 = vsel %vm306, %v1890, 0
      %v1963 = vsel %vm306, %v1907, 0
      %v1965 = vsel %vm306, %v1924, 0
      %v1967 = vsel %vm306, %v1941, 0
      %v1969 = vsel %vm306, %v1958, 0
      %1971 = vmatprep.subr.mxu0 0.0
      %1972 = vmatpush1.msra.mxu0 0.0
      %1973 = vmatprep.subr.mxu0 0.0
      %1974 = vmatpush1.msra.mxu0 0.0
      %1975 = vmatprep.subr.mxu0 0.0
      %1976 = vmatpush1.msra.mxu0 0.0
      %1977 = vmatprep.subr.mxu0 0.0
      %1978 = vmatpush1.msra.mxu0 0.0
      %1979 = vmatprep.subr.mxu0 0.0
      %1980 = vmatpush1.msra.mxu0 0.0
      %1981 = vmatprep.subr.mxu0 0.0
      %1982 = vmatpush1.msra.mxu0 0.0
      %1983 = vmatprep.subr.mxu0 0.0
      %1984 = vmatpush1.msra.mxu0 0.0
      %1985 = vmatprep.subr.mxu0 0.0
      %1986 = vmatpush1.msra.mxu0 0.0
      %1987 = vmatprep.subr.mxu0 0.0
      %1988 = vmatpush1.msra.mxu0 0.0
      %1989 = vmatprep.subr.mxu0 0.0
      %1990 = vmatpush1.msra.mxu0 0.0
      %1991 = vmatprep.subr.mxu0 0.0
      %1992 = vmatpush1.msra.mxu0 0.0
      %1993 = vmatprep.subr.mxu0 0.0
      %1994 = vmatpush1.msra.mxu0 0.0
      %1995 = vmatprep.subr.mxu0 %v1708
      %1996 = vmatpush1.msra.mxu0 %v1707
      %1997 = vmatprep.subr.mxu0 %v1706
      %1998 = vmatpush1.msra.mxu0 %v1705
      %1999 = vmatprep.subr.mxu0 %v1704
      %2000 = vmatpush1.msra.mxu0 %v1703
      %2001 = vmatprep.subr.mxu0 %v1702
      %2002 = vmatpush1.msra.mxu0 %v1701
      %2003 = vmatprep.subr.mxu0 0.0
      %2004 = vmatpush2.msra.mxu0 0.0
      %2005 = vmatprep.subr.mxu0 0.0
      %2006 = vmatpush2.msra.mxu0 0.0
      %2007 = vmatprep.subr.mxu0 0.0
      %2008 = vmatpush2.msra.mxu0 0.0
      %2009 = vmatprep.subr.mxu0 0.0
      %2010 = vmatpush2.msra.mxu0 0.0
      %2011 = vmatprep.subr.mxu0 0.0
      %2012 = vmatpush2.msra.mxu0 0.0
      %2013 = vmatprep.subr.mxu0 0.0
      %2014 = vmatpush2.msra.mxu0 0.0
      %2015 = vmatprep.subr.mxu0 0.0
      %2016 = vmatpush2.msra.mxu0 0.0
      %2017 = vmatprep.subr.mxu0 0.0
      %2018 = vmatpush2.msra.mxu0 0.0
      %2019 = vmatprep.subr.mxu0 0.0
      %2020 = vmatpush2.msra.mxu0 0.0
      %2021 = vmatprep.subr.mxu0 0.0
      %2022 = vmatpush2.msra.mxu0 0.0
      %2023 = vmatprep.subr.mxu0 0.0
      %2024 = vmatpush2.msra.mxu0 0.0
      %2025 = vmatprep.subr.mxu0 0.0
      %2026 = vmatpush2.msra.mxu0 0.0
      %2027 = vmatprep.subr.mxu0 0.0
      %2028 = vmatpush2.msra.mxu0 0.0
      %2029 = vmatprep.subr.mxu0 0.0
      %2030 = vmatpush2.msra.mxu0 0.0
      %2031 = vmatprep.subr.mxu0 0.0
      %2032 = vmatpush2.msra.mxu0 0.0
      %2033 = vmatprep.subr.mxu0 0.0
      %2034 = vmatpush2.msra.mxu0 0.0
      %2035 = vmatprep.mubr.f32.mxu0 0.0
      %2036 = vmatmul.mubr.f32.gmra.mxu0 %v1959
      %v2037 = vpop.f32.mrf.mxu0
      %v2038 = vadd.f32 %v1850, %v2037
      %v2039 = vpop.f32.mrf.mxu0
      %v2040 = vadd.f32 %v1854, %v2039
      %2041 = vmatprep.mubr.f32.mxu0 0.0
      %2042 = vmatmul.mubr.f32.gmra.mxu0 %v1961
      %v2043 = vpop.f32.mrf.mxu0
      %v2044 = vadd.f32 %v1850, %v2043
      %v2045 = vpop.f32.mrf.mxu0
      %v2046 = vadd.f32 %v1854, %v2045
      %2047 = vmatprep.mubr.f32.mxu0 0.0
      %2048 = vmatmul.mubr.f32.gmra.mxu0 %v1963
      %v2049 = vpop.f32.mrf.mxu0
      %v2050 = vadd.f32 %v1850, %v2049
      %v2051 = vpop.f32.mrf.mxu0
      %v2052 = vadd.f32 %v1854, %v2051
      %2053 = vmatprep.mubr.f32.mxu0 0.0
      %2054 = vmatmul.mubr.f32.gmra.mxu0 %v1965
      %v2055 = vpop.f32.mrf.mxu0
      %v2056 = vadd.f32 %v1850, %v2055
      %v2057 = vpop.f32.mrf.mxu0
      %v2058 = vadd.f32 %v1854, %v2057
      %2059 = vmatprep.mubr.f32.mxu0 0.0
      %2060 = vmatmul.mubr.f32.gmra.mxu0 %v1967
      %v2061 = vpop.f32.mrf.mxu0
      %v2062 = vadd.f32 %v1850, %v2061
      %v2063 = vpop.f32.mrf.mxu0
      %v2064 = vadd.f32 %v1854, %v2063
      %2065 = vmatprep.mubr.f32.mxu0 0.0
      %2066 = vmatmul.mubr.f32.gmra.mxu0 %v1969
      %v2067 = vpop.f32.mrf.mxu0
      %v2068 = vadd.f32 %v1850, %v2067
      %v2069 = vpop.f32.mrf.mxu0
      %v2070 = vadd.f32 %v1854, %v2069
      %2071 = vdwg.mxu0
      %v2084 = vcombine.low %v2038, %v2040
      %v2085 = vcombine.high %v2038, %v2040
      %v2087 = vunpack.c.l.s4 1983009808
      %v2088 = vunpack.c.0.s8 %v2087
      %v2089 = vlaneseq
      %v2090 = vshrl.u32 %v2089, 7
      %v2091 = vsub.s32 %v2088, %v2090
      %v2092 = vrot.slane %v2084, %v2091
      %v2094 = vunpack.c.l.s4 1983009808
      %v2095 = vunpack.c.0.s8 %v2094
      %v2096 = vlaneseq
      %v2097 = vshrl.u32 %v2096, 7
      %v2098 = vsub.s32 %v2095, %v2097
      %v2099 = vrot.slane %v2085, %v2098
      %v2100 = vcombine.high %v2092, %v2092
      %v2101 = vcombine.high %v2099, %v2099
      %v2102 = vcombine.low %v2044, %v2046
      %v2103 = vcombine.high %v2044, %v2046
      %v2105 = vunpack.c.l.s4 1983009808
      %v2106 = vunpack.c.0.s8 %v2105
      %v2107 = vlaneseq
      %v2108 = vshrl.u32 %v2107, 7
      %v2109 = vsub.s32 %v2106, %v2108
      %v2110 = vrot.slane %v2102, %v2109
      %v2112 = vunpack.c.l.s4 1983009808
      %v2113 = vunpack.c.0.s8 %v2112
      %v2114 = vlaneseq
      %v2115 = vshrl.u32 %v2114, 7
      %v2116 = vsub.s32 %v2113, %v2115
      %v2117 = vrot.slane %v2103, %v2116
      %v2118 = vcombine.high %v2110, %v2110
      %v2119 = vcombine.high %v2117, %v2117
      %v2120 = vcombine.low %v2050, %v2052
      %v2121 = vcombine.high %v2050, %v2052
      %v2123 = vunpack.c.l.s4 1983009808
      %v2124 = vunpack.c.0.s8 %v2123
      %v2125 = vlaneseq
      %v2126 = vshrl.u32 %v2125, 7
      %v2127 = vsub.s32 %v2124, %v2126
      %v2128 = vrot.slane %v2120, %v2127
      %v2130 = vunpack.c.l.s4 1983009808
      %v2131 = vunpack.c.0.s8 %v2130
      %v2132 = vlaneseq
      %v2133 = vshrl.u32 %v2132, 7
      %v2134 = vsub.s32 %v2131, %v2133
      %v2135 = vrot.slane %v2121, %v2134
      %v2136 = vcombine.high %v2128, %v2128
      %v2137 = vcombine.high %v2135, %v2135
      %v2138 = vcombine.low %v2056, %v2058
      %v2139 = vcombine.high %v2056, %v2058
      %v2141 = vunpack.c.l.s4 1983009808
      %v2142 = vunpack.c.0.s8 %v2141
      %v2143 = vlaneseq
      %v2144 = vshrl.u32 %v2143, 7
      %v2145 = vsub.s32 %v2142, %v2144
      %v2146 = vrot.slane %v2138, %v2145
      %v2148 = vunpack.c.l.s4 1983009808
      %v2149 = vunpack.c.0.s8 %v2148
      %v2150 = vlaneseq
      %v2151 = vshrl.u32 %v2150, 7
      %v2152 = vsub.s32 %v2149, %v2151
      %v2153 = vrot.slane %v2139, %v2152
      %v2154 = vcombine.high %v2146, %v2146
      %v2155 = vcombine.high %v2153, %v2153
      %v2156 = vcombine.low %v2062, %v2064
      %v2157 = vcombine.high %v2062, %v2064
      %v2159 = vunpack.c.l.s4 1983009808
      %v2160 = vunpack.c.0.s8 %v2159
      %v2161 = vlaneseq
      %v2162 = vshrl.u32 %v2161, 7
      %v2163 = vsub.s32 %v2160, %v2162
      %v2164 = vrot.slane %v2156, %v2163
      %v2166 = vunpack.c.l.s4 1983009808
      %v2167 = vunpack.c.0.s8 %v2166
      %v2168 = vlaneseq
      %v2169 = vshrl.u32 %v2168, 7
      %v2170 = vsub.s32 %v2167, %v2169
      %v2171 = vrot.slane %v2157, %v2170
      %v2172 = vcombine.high %v2164, %v2164
      %v2173 = vcombine.high %v2171, %v2171
      %v2174 = vcombine.low %v2068, %v2070
      %v2175 = vcombine.high %v2068, %v2070
      %v2177 = vunpack.c.l.s4 1983009808
      %v2178 = vunpack.c.0.s8 %v2177
      %v2179 = vlaneseq
      %v2180 = vshrl.u32 %v2179, 7
      %v2181 = vsub.s32 %v2178, %v2180
      %v2182 = vrot.slane %v2174, %v2181
      %v2184 = vunpack.c.l.s4 1983009808
      %v2185 = vunpack.c.0.s8 %v2184
      %v2186 = vlaneseq
      %v2187 = vshrl.u32 %v2186, 7
      %v2188 = vsub.s32 %v2185, %v2187
      %v2189 = vrot.slane %v2175, %v2188
      %v2190 = vcombine.high %v2182, %v2182
      %v2191 = vcombine.high %v2189, %v2189
      %v2192 = vcombine.low %v2092, %v2100
      %v2194 = vunpack.c.l.s4 1983009808
      %v2195 = vunpack.c.0.s8 %v2194
      %v2196 = vlaneseq
      %v2197 = vshrl.u32 %v2196, 7
      %v2198 = vsub.s32 %v2195, %v2197
      %v2199 = vrot.slane %v2192, %v2198
      %v2201 = vunpack.c.l.s4 1983009808
      %v2202 = vunpack.c.0.s8 %v2201
      %v2203 = vlaneseq
      %v2204 = vshrl.u32 %v2203, 7
      %v2205 = vsub.s32 %v2202, %v2204
      %v2206 = vrot.slane %v2099, %v2205
      %v2207 = vcombine.low %v2199, %v2206
      %v2208 = vcombine.high %v2199, %v2206
      %v2209 = vcombine.low %v2101, %v2110
      %v2211 = vunpack.c.l.s4 1983009808
      %v2212 = vunpack.c.0.s8 %v2211
      %v2213 = vlaneseq
      %v2214 = vshrl.u32 %v2213, 7
      %v2215 = vsub.s32 %v2212, %v2214
      %v2216 = vrot.slane %v2209, %v2215
      %v2218 = vunpack.c.l.s4 1983009808
      %v2219 = vunpack.c.0.s8 %v2218
      %v2220 = vlaneseq
      %v2221 = vshrl.u32 %v2220, 7
      %v2222 = vsub.s32 %v2219, %v2221
      %v2223 = vrot.slane %v2118, %v2222
      %v2224 = vcombine.low %v2216, %v2223
      %v2225 = vcombine.high %v2216, %v2223
      %v2226 = vcombine.low %v2117, %v2119
      %v2228 = vunpack.c.l.s4 1983009808
      %v2229 = vunpack.c.0.s8 %v2228
      %v2230 = vlaneseq
      %v2231 = vshrl.u32 %v2230, 7
      %v2232 = vsub.s32 %v2229, %v2231
      %v2233 = vrot.slane %v2226, %v2232
      %v2235 = vunpack.c.l.s4 1983009808
      %v2236 = vunpack.c.0.s8 %v2235
      %v2237 = vlaneseq
      %v2238 = vshrl.u32 %v2237, 7
      %v2239 = vsub.s32 %v2236, %v2238
      %v2240 = vrot.slane %v2128, %v2239
      %v2241 = vcombine.low %v2233, %v2240
      %v2242 = vcombine.high %v2233, %v2240
      %v2243 = vcombine.low %v2136, %v2135
      %v2245 = vunpack.c.l.s4 1983009808
      %v2246 = vunpack.c.0.s8 %v2245
      %v2247 = vlaneseq
      %v2248 = vshrl.u32 %v2247, 7
      %v2249 = vsub.s32 %v2246, %v2248
      %v2250 = vrot.slane %v2243, %v2249
      %v2252 = vunpack.c.l.s4 1983009808
      %v2253 = vunpack.c.0.s8 %v2252
      %v2254 = vlaneseq
      %v2255 = vshrl.u32 %v2254, 7
      %v2256 = vsub.s32 %v2253, %v2255
      %v2257 = vrot.slane %v2137, %v2256
      %v2258 = vcombine.low %v2250, %v2257
      %v2259 = vcombine.high %v2250, %v2257
      %v2260 = vcombine.low %v2146, %v2154
      %v2262 = vunpack.c.l.s4 1983009808
      %v2263 = vunpack.c.0.s8 %v2262
      %v2264 = vlaneseq
      %v2265 = vshrl.u32 %v2264, 7
      %v2266 = vsub.s32 %v2263, %v2265
      %v2267 = vrot.slane %v2260, %v2266
      %v2269 = vunpack.c.l.s4 1983009808
      %v2270 = vunpack.c.0.s8 %v2269
      %v2271 = vlaneseq
      %v2272 = vshrl.u32 %v2271, 7
      %v2273 = vsub.s32 %v2270, %v2272
      %v2274 = vrot.slane %v2153, %v2273
      %v2275 = vcombine.low %v2267, %v2274
      %v2276 = vcombine.high %v2267, %v2274
      %v2277 = vcombine.low %v2155, %v2164
      %v2279 = vunpack.c.l.s4 1983009808
      %v2280 = vunpack.c.0.s8 %v2279
      %v2281 = vlaneseq
      %v2282 = vshrl.u32 %v2281, 7
      %v2283 = vsub.s32 %v2280, %v2282
      %v2284 = vrot.slane %v2277, %v2283
      %v2286 = vunpack.c.l.s4 1983009808
      %v2287 = vunpack.c.0.s8 %v2286
      %v2288 = vlaneseq
      %v2289 = vshrl.u32 %v2288, 7
      %v2290 = vsub.s32 %v2287, %v2289
      %v2291 = vrot.slane %v2172, %v2290
      %v2292 = vcombine.low %v2284, %v2291
      %v2293 = vcombine.high %v2284, %v2291
      %v2294 = vcombine.low %v2171, %v2173
      %v2296 = vunpack.c.l.s4 1983009808
      %v2297 = vunpack.c.0.s8 %v2296
      %v2298 = vlaneseq
      %v2299 = vshrl.u32 %v2298, 7
      %v2300 = vsub.s32 %v2297, %v2299
      %v2301 = vrot.slane %v2294, %v2300
      %v2303 = vunpack.c.l.s4 1983009808
      %v2304 = vunpack.c.0.s8 %v2303
      %v2305 = vlaneseq
      %v2306 = vshrl.u32 %v2305, 7
      %v2307 = vsub.s32 %v2304, %v2306
      %v2308 = vrot.slane %v2182, %v2307
      %v2309 = vcombine.low %v2301, %v2308
      %v2310 = vcombine.high %v2301, %v2308
      %v2311 = vcombine.low %v2190, %v2189
      %v2313 = vunpack.c.l.s4 1983009808
      %v2314 = vunpack.c.0.s8 %v2313
      %v2315 = vlaneseq
      %v2316 = vshrl.u32 %v2315, 7
      %v2317 = vsub.s32 %v2314, %v2316
      %v2318 = vrot.slane %v2311, %v2317
      %v2320 = vunpack.c.l.s4 1983009808
      %v2321 = vunpack.c.0.s8 %v2320
      %v2322 = vlaneseq
      %v2323 = vshrl.u32 %v2322, 7
      %v2324 = vsub.s32 %v2321, %v2323
      %v2325 = vrot.slane %v2191, %v2324
      %v2326 = vcombine.low %v2318, %v2325
      %v2327 = vcombine.high %v2318, %v2325
      %2344 = vst [vmem:[#allocation2] sm:$0x3f] %v2207
      %2345 = vst [vmem:[#allocation2 + $0x8] sm:$0x3f] %v2208
      %2346 = vst [vmem:[#allocation2 + $0x10] sm:$0x3f] %v2224
      %2347 = vst [vmem:[#allocation2 + $0x18] sm:$0x3f] %v2225
      %2348 = vst [vmem:[#allocation2 + $0x20] sm:$0x3f] %v2241
      %2349 = vst [vmem:[#allocation2 + $0x28] sm:$0x3f] %v2242
      %2350 = vst [vmem:[#allocation2 + $0x30] sm:$0x3f] %v2258
      %2351 = vst [vmem:[#allocation2 + $0x38] sm:$0x3f] %v2259
      %2352 = vst [vmem:[#allocation2 + $0x40] sm:$0x3f] %v2275
      %2353 = vst [vmem:[#allocation2 + $0x48] sm:$0x3f] %v2276
      %2354 = vst [vmem:[#allocation2 + $0x50] sm:$0x3f] %v2292
      %2355 = vst [vmem:[#allocation2 + $0x58] sm:$0x3f] %v2293
      %2356 = vst [vmem:[#allocation2 + $0x60] sm:$0x3f] %v2309
      %2357 = vst [vmem:[#allocation2 + $0x68] sm:$0x3f] %v2310
      %2358 = vst [vmem:[#allocation2 + $0x70] sm:$0x3f] %v2326
      %2359 = vst [vmem:[#allocation2 + $0x78] sm:$0x3f] %v2327
      %v2360 = vld [vmem:[%s6] sm:$0xff]
      %v2361 = vld [vmem:[%s6 + $0x8] sm:$0xff]
      %v2362 = vld [vmem:[%s6 + $0x10] sm:$0xff]
      %v2363 = vld [vmem:[%s6 + $0x18] sm:$0xff]
      %v2364 = vld [vmem:[%s7] sm:$0xff]
      %v2365 = vld [vmem:[%s7 + $0x8] sm:$0xff]
      %v2366 = vld [vmem:[%s7 + $0x10] sm:$0xff]
      %v2367 = vld [vmem:[%s7 + $0x18] sm:$0xff]
      loop: start=0, step=1, limit=8
      $region53: #{mlman_forward.2} parent=51 // loop_pre_header
        _
      $region54: #{mlman_forward.2} parent=51 // loop_header
        %s2369 = sphi 0, %s2373
        %p2370 = scmp.ge.s32.totalorder %s2369, 8
        %v2374 = vphi 0.0, %v2573
        %v2375 = vphi 0.0, %v2567
        %v2376 = vphi 0.0, %v2590
        %v2377 = vphi 0.0, %v2584
        %v2378 = vphi -inf, %v2591
        %v2379 = vphi -inf, %v2592
        %v2380 = vphi 0.0, %v2593
        %v2381 = vphi 0.0, %v2594
      $region55: #{mlman_forward.2} parent=51 // loop_header_branch
        %2372 = sbr.rel (%p2370) target = $region59
      $region56: #{mlman_forward.2} parent=51 // loop_body
        %s2382 = smul.u32 %s2369, 2
        %s2383 = smul.addr %s2382, 8
        %s2384 = scalar_lea.vmem [#allocation2], %s2383
        %v2385 = vld [vmem:[%s2384] sm:$0x3f]
        %s2386 = ssub.s32 7, %s2369
        %s2387 = smul.u32 %s2386, 2
        %s2388 = smul.addr %s2387, 8
        %s2389 = scalar_lea.vmem [#allocation2], %s2388
        %v2390 = vld [vmem:[%s2389 + $0x8] sm:$0x3f]
        %2392 = vrot.lane.b32.xlu0 %v2374, 32
        %v2393 = vpop.permute.xlu0 %2392
        %v2394 = vsel %vm306, %v2393, 0
        %2396 = vmatprep.subr.mxu0 0.0
        %2397 = vmatpush1.msra.mxu0 0.0
        %2398 = vmatprep.subr.mxu0 0.0
        %2399 = vmatpush1.msra.mxu0 0.0
        %2400 = vmatprep.subr.mxu0 0.0
        %2401 = vmatpush1.msra.mxu0 0.0
        %2402 = vmatprep.subr.mxu0 0.0
        %2403 = vmatpush1.msra.mxu0 0.0
        %2404 = vmatprep.subr.mxu0 0.0
        %2405 = vmatpush1.msra.mxu0 0.0
        %2406 = vmatprep.subr.mxu0 0.0
        %2407 = vmatpush1.msra.mxu0 0.0
        %2408 = vmatprep.subr.mxu0 0.0
        %2409 = vmatpush1.msra.mxu0 0.0
        %2410 = vmatprep.subr.mxu0 0.0
        %2411 = vmatpush1.msra.mxu0 0.0
        %2412 = vmatprep.subr.mxu0 0.0
        %2413 = vmatpush1.msra.mxu0 0.0
        %2414 = vmatprep.subr.mxu0 0.0
        %2415 = vmatpush1.msra.mxu0 0.0
        %2416 = vmatprep.subr.mxu0 0.0
        %2417 = vmatpush1.msra.mxu0 0.0
        %2418 = vmatprep.subr.mxu0 0.0
        %2419 = vmatpush1.msra.mxu0 0.0
        %2420 = vmatprep.subr.mxu0 0.0
        %2421 = vmatpush1.msra.mxu0 %v2363
        %2422 = vmatprep.subr.mxu0 0.0
        %2423 = vmatpush1.msra.mxu0 %v2362
        %2424 = vmatprep.subr.mxu0 0.0
        %2425 = vmatpush1.msra.mxu0 %v2361
        %2426 = vmatprep.subr.mxu0 0.0
        %2427 = vmatpush1.msra.mxu0 %v2360
        %2428 = vmatprep.subr.mxu0 0.0
        %2429 = vmatpush2.msra.mxu0 0.0
        %2430 = vmatprep.subr.mxu0 0.0
        %2431 = vmatpush2.msra.mxu0 0.0
        %2432 = vmatprep.subr.mxu0 0.0
        %2433 = vmatpush2.msra.mxu0 0.0
        %2434 = vmatprep.subr.mxu0 0.0
        %2435 = vmatpush2.msra.mxu0 0.0
        %2436 = vmatprep.subr.mxu0 0.0
        %2437 = vmatpush2.msra.mxu0 0.0
        %2438 = vmatprep.subr.mxu0 0.0
        %2439 = vmatpush2.msra.mxu0 0.0
        %2440 = vmatprep.subr.mxu0 0.0
        %2441 = vmatpush2.msra.mxu0 0.0
        %2442 = vmatprep.subr.mxu0 0.0
        %2443 = vmatpush2.msra.mxu0 0.0
        %2444 = vmatprep.subr.mxu0 0.0
        %2445 = vmatpush2.msra.mxu0 0.0
        %2446 = vmatprep.subr.mxu0 0.0
        %2447 = vmatpush2.msra.mxu0 0.0
        %2448 = vmatprep.subr.mxu0 0.0
        %2449 = vmatpush2.msra.mxu0 0.0
        %2450 = vmatprep.subr.mxu0 0.0
        %2451 = vmatpush2.msra.mxu0 0.0
        %2452 = vmatprep.subr.mxu0 0.0
        %2453 = vmatpush2.msra.mxu0 0.0
        %2454 = vmatprep.subr.mxu0 0.0
        %2455 = vmatpush2.msra.mxu0 0.0
        %2456 = vmatprep.subr.mxu0 0.0
        %2457 = vmatpush2.msra.mxu0 0.0
        %2458 = vmatprep.subr.mxu0 0.0
        %2459 = vmatpush2.msra.mxu0 0.0
        %2460 = vmatprep.mubr.f32.mxu0 0.0
        %2461 = vmatmul.mubr.f32.gmra.mxu0 %v2394
        %v2462 = vpop.f32.mrf.mxu0
        %v2463 = vadd.f32 0.0, %v2462
        %v2464 = vpop.f32.mrf.mxu0
        %2465 = vdwg.mxu0
        %v2466 = vadd.f32 %v2385, %v2463
        %2468 = vrot.lane.b32.xlu0 %v2376, 32
        %v2469 = vpop.permute.xlu0 %2468
        %v2470 = vsel %vm306, %v2469, 0
        %2472 = vmatprep.subr.mxu0 0.0
        %2473 = vmatpush1.msra.mxu0 0.0
        %2474 = vmatprep.subr.mxu0 0.0
        %2475 = vmatpush1.msra.mxu0 0.0
        %2476 = vmatprep.subr.mxu0 0.0
        %2477 = vmatpush1.msra.mxu0 0.0
        %2478 = vmatprep.subr.mxu0 0.0
        %2479 = vmatpush1.msra.mxu0 0.0
        %2480 = vmatprep.subr.mxu0 0.0
        %2481 = vmatpush1.msra.mxu0 0.0
        %2482 = vmatprep.subr.mxu0 0.0
        %2483 = vmatpush1.msra.mxu0 0.0
        %2484 = vmatprep.subr.mxu0 0.0
        %2485 = vmatpush1.msra.mxu0 0.0
        %2486 = vmatprep.subr.mxu0 0.0
        %2487 = vmatpush1.msra.mxu0 0.0
        %2488 = vmatprep.subr.mxu0 0.0
        %2489 = vmatpush1.msra.mxu0 0.0
        %2490 = vmatprep.subr.mxu0 0.0
        %2491 = vmatpush1.msra.mxu0 0.0
        %2492 = vmatprep.subr.mxu0 0.0
        %2493 = vmatpush1.msra.mxu0 0.0
        %2494 = vmatprep.subr.mxu0 0.0
        %2495 = vmatpush1.msra.mxu0 0.0
        %2496 = vmatprep.subr.mxu0 0.0
        %2497 = vmatpush1.msra.mxu0 %v2367
        %2498 = vmatprep.subr.mxu0 0.0
        %2499 = vmatpush1.msra.mxu0 %v2366
        %2500 = vmatprep.subr.mxu0 0.0
        %2501 = vmatpush1.msra.mxu0 %v2365
        %2502 = vmatprep.subr.mxu0 0.0
        %2503 = vmatpush1.msra.mxu0 %v2364
        %2504 = vmatprep.subr.mxu0 0.0
        %2505 = vmatpush2.msra.mxu0 0.0
        %2506 = vmatprep.subr.mxu0 0.0
        %2507 = vmatpush2.msra.mxu0 0.0
        %2508 = vmatprep.subr.mxu0 0.0
        %2509 = vmatpush2.msra.mxu0 0.0
        %2510 = vmatprep.subr.mxu0 0.0
        %2511 = vmatpush2.msra.mxu0 0.0
        %2512 = vmatprep.subr.mxu0 0.0
        %2513 = vmatpush2.msra.mxu0 0.0
        %2514 = vmatprep.subr.mxu0 0.0
        %2515 = vmatpush2.msra.mxu0 0.0
        %2516 = vmatprep.subr.mxu0 0.0
        %2517 = vmatpush2.msra.mxu0 0.0
        %2518 = vmatprep.subr.mxu0 0.0
        %2519 = vmatpush2.msra.mxu0 0.0
        %2520 = vmatprep.subr.mxu0 0.0
        %2521 = vmatpush2.msra.mxu0 0.0
        %2522 = vmatprep.subr.mxu0 0.0
        %2523 = vmatpush2.msra.mxu0 0.0
        %2524 = vmatprep.subr.mxu0 0.0
        %2525 = vmatpush2.msra.mxu0 0.0
        %2526 = vmatprep.subr.mxu0 0.0
        %2527 = vmatpush2.msra.mxu0 0.0
        %2528 = vmatprep.subr.mxu0 0.0
        %2529 = vmatpush2.msra.mxu0 0.0
        %2530 = vmatprep.subr.mxu0 0.0
        %2531 = vmatpush2.msra.mxu0 0.0
        %2532 = vmatprep.subr.mxu0 0.0
        %2533 = vmatpush2.msra.mxu0 0.0
        %2534 = vmatprep.subr.mxu0 0.0
        %2535 = vmatpush2.msra.mxu0 0.0
        %2536 = vmatprep.mubr.f32.mxu0 0.0
        %2537 = vmatmul.mubr.f32.gmra.mxu0 %v2470
        %v2538 = vpop.f32.mrf.mxu0
        %v2539 = vadd.f32 0.0, %v2538
        %v2540 = vpop.f32.mrf.mxu0
        %2541 = vdwg.mxu0
        %v2542 = vadd.f32 %v2390, %v2539
        %v2543 = vxor.u32 %v2466, 2147483648
        %v2544 = vmul.f32 %v2543, 1.442695
        %v2545 = vpow.pop %v2544
        %v2546 = vadd.f32 %v2545, 1.0
        %v2547 = vrcp.pop %v2546
        %v2548 = vmul.f32 1.0, %v2547
        %v2549 = vtanh.pop %v2466
        %v2550 = vxor.u32 %v2542, 2147483648
        %v2551 = vmul.f32 %v2550, 1.442695
        %v2552 = vpow.pop %v2551
        %v2553 = vadd.f32 %v2552, 1.0
        %v2554 = vrcp.pop %v2553
        %v2555 = vmul.f32 1.0, %v2554
        %v2556 = vtanh.pop %v2542
        %v2557 = vmul.f32 %v2548, %v2375
        %2559 = vrot.lane.b32.xlu0 %v2549, 64
        %v2560 = vpop.permute.xlu0 %2559
        %v2562 = vmul.f32 %v2548, %v2560
        %2564 = vrot.lane.b32.xlu0 %v2562, 32
        %v2565 = vpop.permute.xlu0 %2564
        %v2567 = vadd.f32 %v2557, %v2565
        %v2568 = vtanh.pop %v2567
        %2570 = vrot.lane.b32.xlu0 %v2568, 64
        %v2571 = vpop.permute.xlu0 %2570
        %v2573 = vmul.f32 %v2548, %v2571
        %v2574 = vmul.f32 %v2555, %v2377
        %2576 = vrot.lane.b32.xlu0 %v2556, 64
        %v2577 = vpop.permute.xlu0 %2576
        %v2579 = vmul.f32 %v2555, %v2577
        %2581 = vrot.lane.b32.xlu0 %v2579, 32
        %v2582 = vpop.permute.xlu0 %2581
        %v2584 = vadd.f32 %v2574, %v2582
        %v2585 = vtanh.pop %v2584
        %2587 = vrot.lane.b32.xlu0 %v2585, 64
        %v2588 = vpop.permute.xlu0 %2587
        %v2590 = vmul.f32 %v2555, %v2588
        %v2591 = vmax.f32 %v2378, %v2573
        %v2592 = vmax.f32 %v2379, %v2590
        %v2593 = vadd.f32 %v2380, %v2573
        %v2594 = vadd.f32 %v2381, %v2590
      $region57: #{mlman_forward.2} parent=51 // loop_footer
        %s2373 = sadd.s32 1, %s2369
      $region58: #{mlman_forward.2} parent=51 // loop_footer_branch
        %2368 = sbr.rel target = $region54
      $region59: #{mlman_forward.2} parent=51 // loop_exit
        _
      %v2595 = vmul.f32 %v2380, 0.125
      %v2596 = vmul.f32 %v2381, 0.125
      %2598 = vrot.lane.b32.xlu0 %v2378, 32
      %v2599 = vpop.permute.xlu0 %2598
      %2602 = vrot.lane.b32.xlu0 %v2379, 64
      %v2603 = vpop.permute.xlu0 %2602
      %2606 = vrot.lane.b32.xlu0 %v2595, 96
      %v2607 = vpop.permute.xlu0 %2606
      %v2609 = vsel %vm306, %v2599, %v2603
      %vm2610 = vcmask 523264
      %v2611 = vsel %vm2610, %v2609, %v2607
      %vm2612 = vcmask 785408
      %v2613 = vsel %vm2612, %v2611, %v2596
      %2614 = vst [vmem:[%s300] sm:$0x3f] %v2613
      %p2615 = scmp.lt.s32.totalorder %s19, 1
      %s2616 = scalar_select %p2615, %s19, 1
      %s2617 = smul.addr %s2616, 8
      %s2618 = scalar_lea.vmem %s8, %s2617
      // Predicated region
      $region60: #{mlman_forward.2} parent=51 // pred_check
        %p2619 = pneg %p210
      $region61: #{mlman_forward.2} parent=51 // pred_check_branch
        %2621 = sbr.rel (%p2619) target = $region63
      $region62: #{mlman_forward.2} parent=51 // pred_region
        _
      $region63: #{mlman_forward.2} parent=51 // pred_fallthru
        _
    $region52: #{mlman_forward.2} parent=5 // pred_fallthru
      _
    %p2622 = scmp.le.s32.totalorder 2, %s14
    // Predicated region
    $region64: #{mlman_forward.2} parent=5 // pred_check
      %p2623 = pneg %p2622
    $region65: #{mlman_forward.2} parent=5 // pred_check_branch
      %2625 = sbr.rel (%p2623) target = $region67
    $region66: #{mlman_forward.2} parent=5 // pred_region
      %s2626 = ssub.s32 %s14, 2
      // Predicated region
      $region68: #{mlman_forward.2} parent=66 // pred_check
        %p2627 = pneg %p216
      $region69: #{mlman_forward.2} parent=66 // pred_check_branch
        %2629 = sbr.rel (%p2627) target = $region71
      $region70: #{mlman_forward.2} parent=66 // pred_region
        %p2630 = scmp.lt.s32.totalorder %s20, 1
        %s2631 = scalar_select %p2630, %s20, 1
        %s2632 = smul.addr %s2631, 8
        %s2633 = scalar_lea.vmem %s8, %s2632
      $region71: #{mlman_forward.2} parent=66 // pred_fallthru
        _
    $region67: #{mlman_forward.2} parent=5 // pred_fallthru
      _
  $region6: #{mlman_forward.2} parent=0 // loop_footer
    %s18 = sadd.s32 1, %s14
  $region7: #{mlman_forward.2} parent=0 // loop_footer_branch
    %13 = sbr.rel target = $region3
  $region8: #{mlman_forward.2} parent=0 // loop_exit
    _

</llo_original>
